<compile_context>
chip_gen: v6e
topology: v6e:2x2x1
jax: 0.10.0
libtpu: 0.0.40
codegen_flags: <defaults>
</compile_context>

<pallas_src>
import numpy as np
import jax
import jax.numpy as jnp
from jax.experimental import pallas as pl
from jax.experimental.pallas import tpu as pltpu

EPS = 1e-5  # PyTorch BatchNorm2d default eps


def _roll_lanes(v, s):
    """y[:, p] = v[:, (p + s) % HW]  (circular shift along the lane axis, static s)."""
    hw = v.shape[-1]
    k = s % hw
    if k == 0:
        return v
    return jnp.concatenate([v[:, k:], v[:, :k]], axis=1)


def rem_forward(x, p, *, K=4, temperature=34.0):
    """x: (B, Cin, H, W) f32.  p: dict of REM parameters (PyTorch shapes)."""
    B, Cin, H, W = x.shape
    HW = H * W
    Cout = p["ws1"].shape[0]
    hid1 = p["a1_w1"].shape[0]
    hid2 = p["a2_w1"].shape[0]

    # ---------- host-side weight massaging ----------
    def to_taps(w):  # (O, I, 3, 3) -> (9*O, I), row = tap*O + o, tap = kh*3 + kw
        O, I = w.shape[0], w.shape[1]
        return jnp.transpose(w, (2, 3, 0, 1)).reshape(9 * O, I)

    wd1 = jnp.stack([to_taps(p["wd1"][k]) for k in range(K)], axis=0)  # (K, 9*Cout, Cin)
    wd2 = jnp.stack([to_taps(p["wd2"][k]) for k in range(K)], axis=0)  # (K, 9*Cout, Cout)
    ws1 = to_taps(p["ws1"])                                            # (9*Cout, Cin)
    ws2 = to_taps(p["ws2"])                                            # (9*Cout, Cout)

    inv_std = 1.0 / jnp.sqrt(p["bn_v"] + EPS)                          # (4, Cout)
    bn_scale = (p["bn_g"] * inv_std)[..., None]                        # (4, Cout, 1)
    bn_shift = (p["bn_b"] - p["bn_m"] * p["bn_g"] * inv_std)[..., None]

    a1_b2 = p["a1_b2"][:, None]                                        # (K, 1)
    a2_b2 = p["a2_b2"][:, None]

    # per-tap shifts and zero-padding validity masks on the flattened H*W axis
    shifts = []
    masks_np = np.zeros((9, HW), np.float32)
    t = 0
    for dh in (-1, 0, 1):
        for dw in (-1, 0, 1):
            shifts.append(dh * W + dw)
            m = np.zeros((H, W), np.float32)
            m[max(0, -dh):H - max(0, dh), max(0, -dw):W - max(0, dw)] = 1.0
            masks_np[t] = m.reshape(-1)
            t += 1
    masks = jnp.asarray(masks_np)                                      # (9, HW)

    x_flat = x.reshape(B, Cin, HW)

    # ---------- the fused kernel (one batch sample per grid step) ----------
    def kernel(x_ref, masks_ref,
               a1w1_ref, a1w2_ref, a1b2_ref, wd1_ref,
               a2w1_ref, a2w2_ref, a2b2_ref, wd2_ref,
               ws1_ref, ws2_ref, bns_ref, bnb_ref,
               o_ref):
        xf = x_ref[0].astype(jnp.float32)          # (Cin, HW), lane-dense
        mk = masks_ref[...]                        # (9, HW)

        def conv3x3(v, w_rows):
            # v: (C, HW); w_rows: (9*Cout, C) tap-major. Zero-padded 3x3 conv.
            acc = jnp.zeros((Cout, HW), jnp.float32)
            for tt in range(9):
                if shifts[tt] == 0:
                    vs = v                                    # center tap, mask == 1
                else:
                    vs = _roll_lanes(v, shifts[tt]) * mk[tt:tt + 1, :]
                wt = w_rows[tt * Cout:(tt + 1) * Cout, :]
                acc = acc + jnp.dot(wt, vs, preferred_element_type=jnp.float32)
            return acc

        def attention(v, w1_ref, w2_ref, b2_ref):
            # global average pool + 1x1-conv MLP + softmax(logits / T) over K
            pooled = jnp.mean(v, axis=1, keepdims=True)                         # (C, 1)
            hid = jnp.maximum(
                jnp.dot(w1_ref[...], pooled, preferred_element_type=jnp.float32), 0.0)
            logits = jnp.dot(w2_ref[...], hid,
                             preferred_element_type=jnp.float32) + b2_ref[...]  # (K, 1)
            logits = logits / temperature
            m = logits[0:1]
            for k in range(1, K):
                m = jnp.maximum(m, logits[k:k + 1])
            e = jnp.exp(logits - m)
            s = e[0:1]
            for k in range(1, K):
                s = s + e[k:k + 1]
            return e / s                                                         # (K, 1)

        def aggregate(att, wd_ref):
            # sum_k att[k] * W_k  (weights already in tap-major (9*Cout, C) form)
            agg = att[0:1, 0:1] * wd_ref[0]
            for k in range(1, K):
                agg = agg + att[k:k + 1, 0:1] * wd_ref[k]
            return agg

        def bn_relu(v, i):
            return jnp.maximum(v * bns_ref[i] + bnb_ref[i], 0.0)

        # ---- dynamic-conv branch ----
        att1 = attention(xf, a1w1_ref, a1w2_ref, a1b2_ref)
        h = bn_relu(conv3x3(xf, aggregate(att1, wd1_ref)), 0)
        att2 = attention(h, a2w1_ref, a2w2_ref, a2b2_ref)
        dyn = bn_relu(conv3x3(h, aggregate(att2, wd2_ref)), 1)

        # ---- static-conv branch ----
        s1 = bn_relu(conv3x3(xf, ws1_ref[...]), 2)
        sta = bn_relu(conv3x3(s1, ws2_ref[...]), 3)

        o_ref[0] = (dyn + sta).astype(o_ref.dtype)

    out_flat = pl.pallas_call(
        kernel,
        out_shape=jax.ShapeDtypeStruct((B, Cout, HW), x.dtype),
        grid=(B,),
        in_specs=[
            pl.BlockSpec((1, Cin, HW), lambda b: (b, 0, 0)),          # x
            pl.BlockSpec((9, HW), lambda b: (0, 0)),                  # tap masks
            pl.BlockSpec((hid1, Cin), lambda b: (0, 0)),              # attn1 fc1
            pl.BlockSpec((K, hid1), lambda b: (0, 0)),                # attn1 fc2
            pl.BlockSpec((K, 1), lambda b: (0, 0)),                   # attn1 fc2 bias
            pl.BlockSpec((K, 9 * Cout, Cin), lambda b: (0, 0, 0)),    # dyn weight 1
            pl.BlockSpec((hid2, Cout), lambda b: (0, 0)),             # attn2 fc1
            pl.BlockSpec((K, hid2), lambda b: (0, 0)),                # attn2 fc2
            pl.BlockSpec((K, 1), lambda b: (0, 0)),                   # attn2 fc2 bias
            pl.BlockSpec((K, 9 * Cout, Cout), lambda b: (0, 0, 0)),   # dyn weight 2
            pl.BlockSpec((9 * Cout, Cin), lambda b: (0, 0)),          # static conv 1
            pl.BlockSpec((9 * Cout, Cout), lambda b: (0, 0)),         # static conv 2
            pl.BlockSpec((4, Cout, 1), lambda b: (0, 0, 0)),          # folded BN scale
            pl.BlockSpec((4, Cout, 1), lambda b: (0, 0, 0)),          # folded BN shift
        ],
        out_specs=pl.BlockSpec((1, Cout, HW), lambda b: (b, 0, 0)),
        compiler_params=pltpu.CompilerParams(dimension_semantics=("parallel",)),
    )(x_flat, masks, p["a1_w1"], p["a1_w2"], a1_b2, wd1,
      p["a2_w1"], p["a2_w2"], a2_b2, wd2, ws1, ws2, bn_scale, bn_shift)

    return out_flat.reshape(B, Cout, H, W)


def rem_reference(x, p, *, K=4, temperature=34.0):
    """Pure-JAX reference mirroring the PyTorch REM forward (eval-mode BN)."""
    B, Cin, H, W = x.shape
    Cout = p["ws1"].shape[0]

    def attention(v, w1, w2, b2):
        pooled = jnp.mean(v, axis=(2, 3))                        # (B, C)
        hid = jnp.maximum(pooled @ w1.T, 0.0)
        logits = hid @ w2.T + b2[None, :]
        return jax.nn.softmax(logits / temperature, axis=1)      # (B, K)

    def conv3x3(v, w):
        return jax.lax.conv_general_dilated(
            v, w, (1, 1), ((1, 1), (1, 1)),
            dimension_numbers=("NCHW", "OIHW", "NCHW"))

    def dyn_conv(v, att, wd):
        aggw = (att @ wd.reshape(K, -1)).reshape(B, Cout, v.shape[1], 3, 3)
        return jnp.concatenate(
            [conv3x3(v[b:b + 1], aggw[b]) for b in range(B)], axis=0)

    def bn_relu(v, i):
        g, bb, m, var = p["bn_g"][i], p["bn_b"][i], p["bn_m"][i], p["bn_v"][i]
        y = (v - m[None, :, None, None]) / jnp.sqrt(var + EPS)[None, :, None, None]
        return jnp.maximum(y * g[None, :, None, None] + bb[None, :, None, None], 0.0)

    att1 = attention(x, p["a1_w1"], p["a1_w2"], p["a1_b2"])
    h = bn_relu(dyn_conv(x, att1, p["wd1"]), 0)
    att2 = attention(h, p["a2_w1"], p["a2_w2"], p["a2_b2"])
    dyn = bn_relu(dyn_conv(h, att2, p["wd2"]), 1)

    s1 = bn_relu(conv3x3(x, p["ws1"]), 2)
    sta = bn_relu(conv3x3(s1, p["ws2"]), 3)
    return dyn + sta


if __name__ == "__main__":
    B, Cin, Cout, H, W = 2, 8, 8, 16, 16
    K = 4
    hid1 = int(Cin * 0.25) + 1      # attention2d hidden_planes for in_planes != 3
    hid2 = int(Cout * 0.25) + 1

    key = jax.random.PRNGKey(0)
    ks = jax.random.split(key, 16)
    x = jax.random.normal(ks[0], (B, Cin, H, W), dtype=jnp.float32)
    p = {
        "a1_w1": 0.5 * jax.random.normal(ks[1], (hid1, Cin), jnp.float32),
        "a1_w2": 0.5 * jax.random.normal(ks[2], (K, hid1), jnp.float32),
        "a1_b2": 0.1 * jax.random.normal(ks[3], (K,), jnp.float32),
        "wd1": 0.2 * jax.random.normal(ks[4], (K, Cout, Cin, 3, 3), jnp.float32),
        "a2_w1": 0.5 * jax.random.normal(ks[5], (hid2, Cout), jnp.float32),
        "a2_w2": 0.5 * jax.random.normal(ks[6], (K, hid2), jnp.float32),
        "a2_b2": 0.1 * jax.random.normal(ks[7], (K,), jnp.float32),
        "wd2": 0.2 * jax.random.normal(ks[8], (K, Cout, Cout, 3, 3), jnp.float32),
        "ws1": 0.2 * jax.random.normal(ks[9], (Cout, Cin, 3, 3), jnp.float32),
        "ws2": 0.2 * jax.random.normal(ks[10], (Cout, Cout, 3, 3), jnp.float32),
        "bn_g": 1.0 + 0.1 * jax.random.normal(ks[11], (4, Cout), jnp.float32),
        "bn_b": 0.1 * jax.random.normal(ks[12], (4, Cout), jnp.float32),
        "bn_m": 0.1 * jax.random.normal(ks[13], (4, Cout), jnp.float32),
        "bn_v": jax.random.uniform(ks[14], (4, Cout), jnp.float32, 0.5, 1.5),
    }

    out = jax.block_until_ready(rem_forward(x, p, K=K))
    ref = jax.block_until_ready(rem_reference(x, p, K=K))

    assert out.shape == (B, Cout, H, W)
    max_err = float(jnp.max(jnp.abs(out - ref)))
    assert jnp.allclose(out, ref, rtol=1e-3, atol=1e-3), max_err
    print("KERNEL_OK")
</pallas_src>

<mosaic_0001>
module attributes {stable_mosaic.version = 11 : i64} {
  func.func @kernel(%arg0: i32, %arg1: memref<1x8x256xf32, #tpu.memory_space<vmem>>, %arg2: memref<9x256xf32, #tpu.memory_space<vmem>>, %arg3: memref<3x8xf32, #tpu.memory_space<vmem>>, %arg4: memref<4x3xf32, #tpu.memory_space<vmem>>, %arg5: memref<4x1xf32, #tpu.memory_space<vmem>>, %arg6: memref<4x72x8xf32, #tpu.memory_space<vmem>>, %arg7: memref<3x8xf32, #tpu.memory_space<vmem>>, %arg8: memref<4x3xf32, #tpu.memory_space<vmem>>, %arg9: memref<4x1xf32, #tpu.memory_space<vmem>>, %arg10: memref<4x72x8xf32, #tpu.memory_space<vmem>>, %arg11: memref<72x8xf32, #tpu.memory_space<vmem>>, %arg12: memref<72x8xf32, #tpu.memory_space<vmem>>, %arg13: memref<4x8x1xf32, #tpu.memory_space<vmem>>, %arg14: memref<4x8x1xf32, #tpu.memory_space<vmem>>, %arg15: memref<1x8x256xf32, #tpu.memory_space<vmem>>) attributes {dimension_semantics = [#tpu.dimension_semantics<parallel>], iteration_bounds = array<i64: 2>, scalar_prefetch = 0 : i64, scratch_operands = 0 : i64, tpu.core_type = #tpu.core_type<tc>, window_params = [{transform_indices = @transform_0, window_bounds = array<i64: 1, 8, 256>}, {pipeline_mode = #tpu.pipeline_mode<synchronous>, transform_indices = @transform_1, window_bounds = array<i64: 9, 256>}, {pipeline_mode = #tpu.pipeline_mode<synchronous>, transform_indices = @transform_2, window_bounds = array<i64: 3, 8>}, {pipeline_mode = #tpu.pipeline_mode<synchronous>, transform_indices = @transform_3, window_bounds = array<i64: 4, 3>}, {pipeline_mode = #tpu.pipeline_mode<synchronous>, transform_indices = @transform_4, window_bounds = array<i64: 4, 1>}, {pipeline_mode = #tpu.pipeline_mode<synchronous>, transform_indices = @transform_5, window_bounds = array<i64: 4, 72, 8>}, {pipeline_mode = #tpu.pipeline_mode<synchronous>, transform_indices = @transform_6, window_bounds = array<i64: 3, 8>}, {pipeline_mode = #tpu.pipeline_mode<synchronous>, transform_indices = @transform_7, window_bounds = array<i64: 4, 3>}, {pipeline_mode = #tpu.pipeline_mode<synchronous>, transform_indices = @transform_8, window_bounds = array<i64: 4, 1>}, {pipeline_mode = #tpu.pipeline_mode<synchronous>, transform_indices = @transform_9, window_bounds = array<i64: 4, 72, 8>}, {pipeline_mode = #tpu.pipeline_mode<synchronous>, transform_indices = @transform_10, window_bounds = array<i64: 72, 8>}, {pipeline_mode = #tpu.pipeline_mode<synchronous>, transform_indices = @transform_11, window_bounds = array<i64: 72, 8>}, {pipeline_mode = #tpu.pipeline_mode<synchronous>, transform_indices = @transform_12, window_bounds = array<i64: 4, 8, 1>}, {pipeline_mode = #tpu.pipeline_mode<synchronous>, transform_indices = @transform_13, window_bounds = array<i64: 4, 8, 1>}, {transform_indices = @transform_14, window_bounds = array<i64: 1, 8, 256>}]} {
    %c0 = arith.constant 0 : index
    %c0_0 = arith.constant 0 : index
    %c0_1 = arith.constant 0 : index
    %0 = vector.load %arg1[%c0, %c0_0, %c0_1] : memref<1x8x256xf32, #tpu.memory_space<vmem>>, vector<1x8x256xf32>
    %1 = vector.shape_cast %0 : vector<1x8x256xf32> to vector<8x256xf32>
    %c0_2 = arith.constant 0 : index
    %c0_3 = arith.constant 0 : index
    %2 = vector.load %arg2[%c0_2, %c0_3] : memref<9x256xf32, #tpu.memory_space<vmem>>, vector<9x256xf32>
    %cst = arith.constant dense<0.000000e+00> : vector<8xf32>
    %3 = vector.multi_reduction <add>, %1, %cst [1] : vector<8x256xf32> to vector<8xf32>
    %4 = vector.shape_cast %3 : vector<8xf32> to vector<8x1xf32>
    %cst_4 = arith.constant 2.560000e+02 : f32
    %5 = vector.broadcast %cst_4 : f32 to vector<8x1xf32>
    %6 = arith.divf %4, %5 : vector<8x1xf32>
    %c0_5 = arith.constant 0 : index
    %c0_6 = arith.constant 0 : index
    %7 = vector.load %arg3[%c0_5, %c0_6] : memref<3x8xf32, #tpu.memory_space<vmem>>, vector<3x8xf32>
    %cst_7 = arith.constant dense<0.000000e+00> : vector<3x1xf32>
    %8 = tpu.matmul %7, %6, %cst_7 {dimension_numbers = #tpu.dot_dimension_numbers<[1], [0], [0], [1], [0, 0, 1, 1], [], []>} : vector<3x8xf32>, vector<8x1xf32>, vector<3x1xf32> -> vector<3x1xf32>
    %cst_8 = arith.constant 0.000000e+00 : f32
    %9 = vector.broadcast %cst_8 : f32 to vector<3x1xf32>
    %10 = arith.maximumf %8, %9 : vector<3x1xf32>
    %c0_9 = arith.constant 0 : index
    %c0_10 = arith.constant 0 : index
    %11 = vector.load %arg4[%c0_9, %c0_10] : memref<4x3xf32, #tpu.memory_space<vmem>>, vector<4x3xf32>
    %cst_11 = arith.constant dense<0.000000e+00> : vector<4x1xf32>
    %12 = tpu.matmul %11, %10, %cst_11 {dimension_numbers = #tpu.dot_dimension_numbers<[1], [0], [0], [1], [0, 0, 1, 1], [], []>} : vector<4x3xf32>, vector<3x1xf32>, vector<4x1xf32> -> vector<4x1xf32>
    %c0_12 = arith.constant 0 : index
    %c0_13 = arith.constant 0 : index
    %13 = vector.load %arg5[%c0_12, %c0_13] : memref<4x1xf32, #tpu.memory_space<vmem>>, vector<4x1xf32>
    %14 = arith.addf %12, %13 : vector<4x1xf32>
    %cst_14 = arith.constant 3.400000e+01 : f32
    %15 = vector.broadcast %cst_14 : f32 to vector<4x1xf32>
    %16 = arith.divf %14, %15 : vector<4x1xf32>
    %17 = vector.extract_strided_slice %16 {offsets = [0, 0], sizes = [1, 1], strides = [1, 1]} : vector<4x1xf32> to vector<1x1xf32>
    %18 = vector.extract_strided_slice %16 {offsets = [1, 0], sizes = [1, 1], strides = [1, 1]} : vector<4x1xf32> to vector<1x1xf32>
    %19 = arith.maximumf %17, %18 : vector<1x1xf32>
    %20 = vector.extract_strided_slice %16 {offsets = [2, 0], sizes = [1, 1], strides = [1, 1]} : vector<4x1xf32> to vector<1x1xf32>
    %21 = arith.maximumf %19, %20 : vector<1x1xf32>
    %22 = vector.extract_strided_slice %16 {offsets = [3, 0], sizes = [1, 1], strides = [1, 1]} : vector<4x1xf32> to vector<1x1xf32>
    %23 = arith.maximumf %21, %22 : vector<1x1xf32>
    %24 = vector.broadcast %23 : vector<1x1xf32> to vector<4x1xf32>
    %25 = arith.subf %16, %24 : vector<4x1xf32>
    %26 = math.exp %25 : vector<4x1xf32>
    %27 = vector.extract_strided_slice %26 {offsets = [0, 0], sizes = [1, 1], strides = [1, 1]} : vector<4x1xf32> to vector<1x1xf32>
    %28 = vector.extract_strided_slice %26 {offsets = [1, 0], sizes = [1, 1], strides = [1, 1]} : vector<4x1xf32> to vector<1x1xf32>
    %29 = arith.addf %27, %28 : vector<1x1xf32>
    %30 = vector.extract_strided_slice %26 {offsets = [2, 0], sizes = [1, 1], strides = [1, 1]} : vector<4x1xf32> to vector<1x1xf32>
    %31 = arith.addf %29, %30 : vector<1x1xf32>
    %32 = vector.extract_strided_slice %26 {offsets = [3, 0], sizes = [1, 1], strides = [1, 1]} : vector<4x1xf32> to vector<1x1xf32>
    %33 = arith.addf %31, %32 : vector<1x1xf32>
    %34 = vector.broadcast %33 : vector<1x1xf32> to vector<4x1xf32>
    %35 = arith.divf %26, %34 : vector<4x1xf32>
    %36 = vector.extract_strided_slice %35 {offsets = [0, 0], sizes = [1, 1], strides = [1, 1]} : vector<4x1xf32> to vector<1x1xf32>
    %c0_15 = arith.constant 0 : index
    %c0_16 = arith.constant 0 : index
    %c0_17 = arith.constant 0 : index
    %37 = vector.load %arg6[%c0_15, %c0_16, %c0_17] : memref<4x72x8xf32, #tpu.memory_space<vmem>>, vector<1x72x8xf32>
    %38 = vector.shape_cast %37 : vector<1x72x8xf32> to vector<72x8xf32>
    %39 = vector.broadcast %36 : vector<1x1xf32> to vector<72x8xf32>
    %40 = arith.mulf %39, %38 : vector<72x8xf32>
    %41 = vector.extract_strided_slice %35 {offsets = [1, 0], sizes = [1, 1], strides = [1, 1]} : vector<4x1xf32> to vector<1x1xf32>
    %c1 = arith.constant 1 : index
    %c0_18 = arith.constant 0 : index
    %c0_19 = arith.constant 0 : index
    %42 = vector.load %arg6[%c1, %c0_18, %c0_19] : memref<4x72x8xf32, #tpu.memory_space<vmem>>, vector<1x72x8xf32>
    %43 = vector.shape_cast %42 : vector<1x72x8xf32> to vector<72x8xf32>
    %44 = vector.broadcast %41 : vector<1x1xf32> to vector<72x8xf32>
    %45 = arith.mulf %44, %43 : vector<72x8xf32>
    %46 = arith.addf %40, %45 : vector<72x8xf32>
    %47 = vector.extract_strided_slice %35 {offsets = [2, 0], sizes = [1, 1], strides = [1, 1]} : vector<4x1xf32> to vector<1x1xf32>
    %c2 = arith.constant 2 : index
    %c0_20 = arith.constant 0 : index
    %c0_21 = arith.constant 0 : index
    %48 = vector.load %arg6[%c2, %c0_20, %c0_21] : memref<4x72x8xf32, #tpu.memory_space<vmem>>, vector<1x72x8xf32>
    %49 = vector.shape_cast %48 : vector<1x72x8xf32> to vector<72x8xf32>
    %50 = vector.broadcast %47 : vector<1x1xf32> to vector<72x8xf32>
    %51 = arith.mulf %50, %49 : vector<72x8xf32>
    %52 = arith.addf %46, %51 : vector<72x8xf32>
    %53 = vector.extract_strided_slice %35 {offsets = [3, 0], sizes = [1, 1], strides = [1, 1]} : vector<4x1xf32> to vector<1x1xf32>
    %c3 = arith.constant 3 : index
    %c0_22 = arith.constant 0 : index
    %c0_23 = arith.constant 0 : index
    %54 = vector.load %arg6[%c3, %c0_22, %c0_23] : memref<4x72x8xf32, #tpu.memory_space<vmem>>, vector<1x72x8xf32>
    %55 = vector.shape_cast %54 : vector<1x72x8xf32> to vector<72x8xf32>
    %56 = vector.broadcast %53 : vector<1x1xf32> to vector<72x8xf32>
    %57 = arith.mulf %56, %55 : vector<72x8xf32>
    %58 = arith.addf %52, %57 : vector<72x8xf32>
    %cst_24 = arith.constant 0.000000e+00 : f32
    %59 = vector.broadcast %cst_24 : f32 to vector<8x256xf32>
    %60 = vector.extract_strided_slice %1 {offsets = [0, 239], sizes = [8, 17], strides = [1, 1]} : vector<8x256xf32> to vector<8x17xf32>
    %61 = vector.extract_strided_slice %1 {offsets = [0, 0], sizes = [8, 239], strides = [1, 1]} : vector<8x256xf32> to vector<8x239xf32>
    %62 = tpu.concatenate %60, %61 in 1 : vector<8x17xf32>, vector<8x239xf32> -> vector<8x256xf32>
    %63 = vector.extract_strided_slice %2 {offsets = [0, 0], sizes = [1, 256], strides = [1, 1]} : vector<9x256xf32> to vector<1x256xf32>
    %64 = vector.broadcast %63 : vector<1x256xf32> to vector<8x256xf32>
    %65 = arith.mulf %62, %64 : vector<8x256xf32>
    %66 = vector.extract_strided_slice %58 {offsets = [0, 0], sizes = [8, 8], strides = [1, 1]} : vector<72x8xf32> to vector<8x8xf32>
    %cst_25 = arith.constant dense<0.000000e+00> : vector<8x256xf32>
    %67 = tpu.matmul %66, %65, %cst_25 {dimension_numbers = #tpu.dot_dimension_numbers<[1], [0], [0], [1], [0, 0, 1, 1], [], []>} : vector<8x8xf32>, vector<8x256xf32>, vector<8x256xf32> -> vector<8x256xf32>
    %68 = arith.addf %59, %67 : vector<8x256xf32>
    %69 = vector.extract_strided_slice %1 {offsets = [0, 240], sizes = [8, 16], strides = [1, 1]} : vector<8x256xf32> to vector<8x16xf32>
    %70 = vector.extract_strided_slice %1 {offsets = [0, 0], sizes = [8, 240], strides = [1, 1]} : vector<8x256xf32> to vector<8x240xf32>
    %71 = tpu.concatenate %69, %70 in 1 : vector<8x16xf32>, vector<8x240xf32> -> vector<8x256xf32>
    %72 = vector.extract_strided_slice %2 {offsets = [1, 0], sizes = [1, 256], strides = [1, 1]} : vector<9x256xf32> to vector<1x256xf32>
    %73 = vector.broadcast %72 : vector<1x256xf32> to vector<8x256xf32>
    %74 = arith.mulf %71, %73 : vector<8x256xf32>
    %75 = vector.extract_strided_slice %58 {offsets = [8, 0], sizes = [8, 8], strides = [1, 1]} : vector<72x8xf32> to vector<8x8xf32>
    %cst_26 = arith.constant dense<0.000000e+00> : vector<8x256xf32>
    %76 = tpu.matmul %75, %74, %cst_26 {dimension_numbers = #tpu.dot_dimension_numbers<[1], [0], [0], [1], [0, 0, 1, 1], [], []>} : vector<8x8xf32>, vector<8x256xf32>, vector<8x256xf32> -> vector<8x256xf32>
    %77 = arith.addf %68, %76 : vector<8x256xf32>
    %78 = vector.extract_strided_slice %1 {offsets = [0, 241], sizes = [8, 15], strides = [1, 1]} : vector<8x256xf32> to vector<8x15xf32>
    %79 = vector.extract_strided_slice %1 {offsets = [0, 0], sizes = [8, 241], strides = [1, 1]} : vector<8x256xf32> to vector<8x241xf32>
    %80 = tpu.concatenate %78, %79 in 1 : vector<8x15xf32>, vector<8x241xf32> -> vector<8x256xf32>
    %81 = vector.extract_strided_slice %2 {offsets = [2, 0], sizes = [1, 256], strides = [1, 1]} : vector<9x256xf32> to vector<1x256xf32>
    %82 = vector.broadcast %81 : vector<1x256xf32> to vector<8x256xf32>
    %83 = arith.mulf %80, %82 : vector<8x256xf32>
    %84 = vector.extract_strided_slice %58 {offsets = [16, 0], sizes = [8, 8], strides = [1, 1]} : vector<72x8xf32> to vector<8x8xf32>
    %cst_27 = arith.constant dense<0.000000e+00> : vector<8x256xf32>
    %85 = tpu.matmul %84, %83, %cst_27 {dimension_numbers = #tpu.dot_dimension_numbers<[1], [0], [0], [1], [0, 0, 1, 1], [], []>} : vector<8x8xf32>, vector<8x256xf32>, vector<8x256xf32> -> vector<8x256xf32>
    %86 = arith.addf %77, %85 : vector<8x256xf32>
    %87 = vector.extract_strided_slice %1 {offsets = [0, 255], sizes = [8, 1], strides = [1, 1]} : vector<8x256xf32> to vector<8x1xf32>
    %88 = vector.extract_strided_slice %1 {offsets = [0, 0], sizes = [8, 255], strides = [1, 1]} : vector<8x256xf32> to vector<8x255xf32>
    %89 = tpu.concatenate %87, %88 in 1 : vector<8x1xf32>, vector<8x255xf32> -> vector<8x256xf32>
    %90 = vector.extract_strided_slice %2 {offsets = [3, 0], sizes = [1, 256], strides = [1, 1]} : vector<9x256xf32> to vector<1x256xf32>
    %91 = vector.broadcast %90 : vector<1x256xf32> to vector<8x256xf32>
    %92 = arith.mulf %89, %91 : vector<8x256xf32>
    %93 = vector.extract_strided_slice %58 {offsets = [24, 0], sizes = [8, 8], strides = [1, 1]} : vector<72x8xf32> to vector<8x8xf32>
    %cst_28 = arith.constant dense<0.000000e+00> : vector<8x256xf32>
    %94 = tpu.matmul %93, %92, %cst_28 {dimension_numbers = #tpu.dot_dimension_numbers<[1], [0], [0], [1], [0, 0, 1, 1], [], []>} : vector<8x8xf32>, vector<8x256xf32>, vector<8x256xf32> -> vector<8x256xf32>
    %95 = arith.addf %86, %94 : vector<8x256xf32>
    %96 = vector.extract_strided_slice %58 {offsets = [32, 0], sizes = [8, 8], strides = [1, 1]} : vector<72x8xf32> to vector<8x8xf32>
    %cst_29 = arith.constant dense<0.000000e+00> : vector<8x256xf32>
    %97 = tpu.matmul %96, %1, %cst_29 {dimension_numbers = #tpu.dot_dimension_numbers<[1], [0], [0], [1], [0, 0, 1, 1], [], []>} : vector<8x8xf32>, vector<8x256xf32>, vector<8x256xf32> -> vector<8x256xf32>
    %98 = arith.addf %95, %97 : vector<8x256xf32>
    %99 = vector.extract_strided_slice %1 {offsets = [0, 1], sizes = [8, 255], strides = [1, 1]} : vector<8x256xf32> to vector<8x255xf32>
    %100 = vector.extract_strided_slice %1 {offsets = [0, 0], sizes = [8, 1], strides = [1, 1]} : vector<8x256xf32> to vector<8x1xf32>
    %101 = tpu.concatenate %99, %100 in 1 : vector<8x255xf32>, vector<8x1xf32> -> vector<8x256xf32>
    %102 = vector.extract_strided_slice %2 {offsets = [5, 0], sizes = [1, 256], strides = [1, 1]} : vector<9x256xf32> to vector<1x256xf32>
    %103 = vector.broadcast %102 : vector<1x256xf32> to vector<8x256xf32>
    %104 = arith.mulf %101, %103 : vector<8x256xf32>
    %105 = vector.extract_strided_slice %58 {offsets = [40, 0], sizes = [8, 8], strides = [1, 1]} : vector<72x8xf32> to vector<8x8xf32>
    %cst_30 = arith.constant dense<0.000000e+00> : vector<8x256xf32>
    %106 = tpu.matmul %105, %104, %cst_30 {dimension_numbers = #tpu.dot_dimension_numbers<[1], [0], [0], [1], [0, 0, 1, 1], [], []>} : vector<8x8xf32>, vector<8x256xf32>, vector<8x256xf32> -> vector<8x256xf32>
    %107 = arith.addf %98, %106 : vector<8x256xf32>
    %108 = vector.extract_strided_slice %1 {offsets = [0, 15], sizes = [8, 241], strides = [1, 1]} : vector<8x256xf32> to vector<8x241xf32>
    %109 = vector.extract_strided_slice %1 {offsets = [0, 0], sizes = [8, 15], strides = [1, 1]} : vector<8x256xf32> to vector<8x15xf32>
    %110 = tpu.concatenate %108, %109 in 1 : vector<8x241xf32>, vector<8x15xf32> -> vector<8x256xf32>
    %111 = vector.extract_strided_slice %2 {offsets = [6, 0], sizes = [1, 256], strides = [1, 1]} : vector<9x256xf32> to vector<1x256xf32>
    %112 = vector.broadcast %111 : vector<1x256xf32> to vector<8x256xf32>
    %113 = arith.mulf %110, %112 : vector<8x256xf32>
    %114 = vector.extract_strided_slice %58 {offsets = [48, 0], sizes = [8, 8], strides = [1, 1]} : vector<72x8xf32> to vector<8x8xf32>
    %cst_31 = arith.constant dense<0.000000e+00> : vector<8x256xf32>
    %115 = tpu.matmul %114, %113, %cst_31 {dimension_numbers = #tpu.dot_dimension_numbers<[1], [0], [0], [1], [0, 0, 1, 1], [], []>} : vector<8x8xf32>, vector<8x256xf32>, vector<8x256xf32> -> vector<8x256xf32>
    %116 = arith.addf %107, %115 : vector<8x256xf32>
    %117 = vector.extract_strided_slice %1 {offsets = [0, 16], sizes = [8, 240], strides = [1, 1]} : vector<8x256xf32> to vector<8x240xf32>
    %118 = vector.extract_strided_slice %1 {offsets = [0, 0], sizes = [8, 16], strides = [1, 1]} : vector<8x256xf32> to vector<8x16xf32>
    %119 = tpu.concatenate %117, %118 in 1 : vector<8x240xf32>, vector<8x16xf32> -> vector<8x256xf32>
    %120 = vector.extract_strided_slice %2 {offsets = [7, 0], sizes = [1, 256], strides = [1, 1]} : vector<9x256xf32> to vector<1x256xf32>
    %121 = vector.broadcast %120 : vector<1x256xf32> to vector<8x256xf32>
    %122 = arith.mulf %119, %121 : vector<8x256xf32>
    %123 = vector.extract_strided_slice %58 {offsets = [56, 0], sizes = [8, 8], strides = [1, 1]} : vector<72x8xf32> to vector<8x8xf32>
    %cst_32 = arith.constant dense<0.000000e+00> : vector<8x256xf32>
    %124 = tpu.matmul %123, %122, %cst_32 {dimension_numbers = #tpu.dot_dimension_numbers<[1], [0], [0], [1], [0, 0, 1, 1], [], []>} : vector<8x8xf32>, vector<8x256xf32>, vector<8x256xf32> -> vector<8x256xf32>
    %125 = arith.addf %116, %124 : vector<8x256xf32>
    %126 = vector.extract_strided_slice %1 {offsets = [0, 17], sizes = [8, 239], strides = [1, 1]} : vector<8x256xf32> to vector<8x239xf32>
    %127 = vector.extract_strided_slice %1 {offsets = [0, 0], sizes = [8, 17], strides = [1, 1]} : vector<8x256xf32> to vector<8x17xf32>
    %128 = tpu.concatenate %126, %127 in 1 : vector<8x239xf32>, vector<8x17xf32> -> vector<8x256xf32>
    %129 = vector.extract_strided_slice %2 {offsets = [8, 0], sizes = [1, 256], strides = [1, 1]} : vector<9x256xf32> to vector<1x256xf32>
    %130 = vector.broadcast %129 : vector<1x256xf32> to vector<8x256xf32>
    %131 = arith.mulf %128, %130 : vector<8x256xf32>
    %132 = vector.extract_strided_slice %58 {offsets = [64, 0], sizes = [8, 8], strides = [1, 1]} : vector<72x8xf32> to vector<8x8xf32>
    %cst_33 = arith.constant dense<0.000000e+00> : vector<8x256xf32>
    %133 = tpu.matmul %132, %131, %cst_33 {dimension_numbers = #tpu.dot_dimension_numbers<[1], [0], [0], [1], [0, 0, 1, 1], [], []>} : vector<8x8xf32>, vector<8x256xf32>, vector<8x256xf32> -> vector<8x256xf32>
    %134 = arith.addf %125, %133 : vector<8x256xf32>
    %c0_34 = arith.constant 0 : index
    %c0_35 = arith.constant 0 : index
    %c0_36 = arith.constant 0 : index
    %135 = vector.load %arg13[%c0_34, %c0_35, %c0_36] : memref<4x8x1xf32, #tpu.memory_space<vmem>>, vector<1x8x1xf32>
    %136 = vector.shape_cast %135 : vector<1x8x1xf32> to vector<8x1xf32>
    %137 = vector.broadcast %136 : vector<8x1xf32> to vector<8x256xf32>
    %138 = arith.mulf %134, %137 : vector<8x256xf32>
    %c0_37 = arith.constant 0 : index
    %c0_38 = arith.constant 0 : index
    %c0_39 = arith.constant 0 : index
    %139 = vector.load %arg14[%c0_37, %c0_38, %c0_39] : memref<4x8x1xf32, #tpu.memory_space<vmem>>, vector<1x8x1xf32>
    %140 = vector.shape_cast %139 : vector<1x8x1xf32> to vector<8x1xf32>
    %141 = vector.broadcast %140 : vector<8x1xf32> to vector<8x256xf32>
    %142 = arith.addf %138, %141 : vector<8x256xf32>
    %cst_40 = arith.constant 0.000000e+00 : f32
    %143 = vector.broadcast %cst_40 : f32 to vector<8x256xf32>
    %144 = arith.maximumf %142, %143 : vector<8x256xf32>
    %cst_41 = arith.constant dense<0.000000e+00> : vector<8xf32>
    %145 = vector.multi_reduction <add>, %144, %cst_41 [1] : vector<8x256xf32> to vector<8xf32>
    %146 = vector.shape_cast %145 : vector<8xf32> to vector<8x1xf32>
    %cst_42 = arith.constant 2.560000e+02 : f32
    %147 = vector.broadcast %cst_42 : f32 to vector<8x1xf32>
    %148 = arith.divf %146, %147 : vector<8x1xf32>
    %c0_43 = arith.constant 0 : index
    %c0_44 = arith.constant 0 : index
    %149 = vector.load %arg7[%c0_43, %c0_44] : memref<3x8xf32, #tpu.memory_space<vmem>>, vector<3x8xf32>
    %cst_45 = arith.constant dense<0.000000e+00> : vector<3x1xf32>
    %150 = tpu.matmul %149, %148, %cst_45 {dimension_numbers = #tpu.dot_dimension_numbers<[1], [0], [0], [1], [0, 0, 1, 1], [], []>} : vector<3x8xf32>, vector<8x1xf32>, vector<3x1xf32> -> vector<3x1xf32>
    %cst_46 = arith.constant 0.000000e+00 : f32
    %151 = vector.broadcast %cst_46 : f32 to vector<3x1xf32>
    %152 = arith.maximumf %150, %151 : vector<3x1xf32>
    %c0_47 = arith.constant 0 : index
    %c0_48 = arith.constant 0 : index
    %153 = vector.load %arg8[%c0_47, %c0_48] : memref<4x3xf32, #tpu.memory_space<vmem>>, vector<4x3xf32>
    %cst_49 = arith.constant dense<0.000000e+00> : vector<4x1xf32>
    %154 = tpu.matmul %153, %152, %cst_49 {dimension_numbers = #tpu.dot_dimension_numbers<[1], [0], [0], [1], [0, 0, 1, 1], [], []>} : vector<4x3xf32>, vector<3x1xf32>, vector<4x1xf32> -> vector<4x1xf32>
    %c0_50 = arith.constant 0 : index
    %c0_51 = arith.constant 0 : index
    %155 = vector.load %arg9[%c0_50, %c0_51] : memref<4x1xf32, #tpu.memory_space<vmem>>, vector<4x1xf32>
    %156 = arith.addf %154, %155 : vector<4x1xf32>
    %cst_52 = arith.constant 3.400000e+01 : f32
    %157 = vector.broadcast %cst_52 : f32 to vector<4x1xf32>
    %158 = arith.divf %156, %157 : vector<4x1xf32>
    %159 = vector.extract_strided_slice %158 {offsets = [0, 0], sizes = [1, 1], strides = [1, 1]} : vector<4x1xf32> to vector<1x1xf32>
    %160 = vector.extract_strided_slice %158 {offsets = [1, 0], sizes = [1, 1], strides = [1, 1]} : vector<4x1xf32> to vector<1x1xf32>
    %161 = arith.maximumf %159, %160 : vector<1x1xf32>
    %162 = vector.extract_strided_slice %158 {offsets = [2, 0], sizes = [1, 1], strides = [1, 1]} : vector<4x1xf32> to vector<1x1xf32>
    %163 = arith.maximumf %161, %162 : vector<1x1xf32>
    %164 = vector.extract_strided_slice %158 {offsets = [3, 0], sizes = [1, 1], strides = [1, 1]} : vector<4x1xf32> to vector<1x1xf32>
    %165 = arith.maximumf %163, %164 : vector<1x1xf32>
    %166 = vector.broadcast %165 : vector<1x1xf32> to vector<4x1xf32>
    %167 = arith.subf %158, %166 : vector<4x1xf32>
    %168 = math.exp %167 : vector<4x1xf32>
    %169 = vector.extract_strided_slice %168 {offsets = [0, 0], sizes = [1, 1], strides = [1, 1]} : vector<4x1xf32> to vector<1x1xf32>
    %170 = vector.extract_strided_slice %168 {offsets = [1, 0], sizes = [1, 1], strides = [1, 1]} : vector<4x1xf32> to vector<1x1xf32>
    %171 = arith.addf %169, %170 : vector<1x1xf32>
    %172 = vector.extract_strided_slice %168 {offsets = [2, 0], sizes = [1, 1], strides = [1, 1]} : vector<4x1xf32> to vector<1x1xf32>
    %173 = arith.addf %171, %172 : vector<1x1xf32>
    %174 = vector.extract_strided_slice %168 {offsets = [3, 0], sizes = [1, 1], strides = [1, 1]} : vector<4x1xf32> to vector<1x1xf32>
    %175 = arith.addf %173, %174 : vector<1x1xf32>
    %176 = vector.broadcast %175 : vector<1x1xf32> to vector<4x1xf32>
    %177 = arith.divf %168, %176 : vector<4x1xf32>
    %178 = vector.extract_strided_slice %177 {offsets = [0, 0], sizes = [1, 1], strides = [1, 1]} : vector<4x1xf32> to vector<1x1xf32>
    %c0_53 = arith.constant 0 : index
    %c0_54 = arith.constant 0 : index
    %c0_55 = arith.constant 0 : index
    %179 = vector.load %arg10[%c0_53, %c0_54, %c0_55] : memref<4x72x8xf32, #tpu.memory_space<vmem>>, vector<1x72x8xf32>
    %180 = vector.shape_cast %179 : vector<1x72x8xf32> to vector<72x8xf32>
    %181 = vector.broadcast %178 : vector<1x1xf32> to vector<72x8xf32>
    %182 = arith.mulf %181, %180 : vector<72x8xf32>
    %183 = vector.extract_strided_slice %177 {offsets = [1, 0], sizes = [1, 1], strides = [1, 1]} : vector<4x1xf32> to vector<1x1xf32>
    %c1_56 = arith.constant 1 : index
    %c0_57 = arith.constant 0 : index
    %c0_58 = arith.constant 0 : index
    %184 = vector.load %arg10[%c1_56, %c0_57, %c0_58] : memref<4x72x8xf32, #tpu.memory_space<vmem>>, vector<1x72x8xf32>
    %185 = vector.shape_cast %184 : vector<1x72x8xf32> to vector<72x8xf32>
    %186 = vector.broadcast %183 : vector<1x1xf32> to vector<72x8xf32>
    %187 = arith.mulf %186, %185 : vector<72x8xf32>
    %188 = arith.addf %182, %187 : vector<72x8xf32>
    %189 = vector.extract_strided_slice %177 {offsets = [2, 0], sizes = [1, 1], strides = [1, 1]} : vector<4x1xf32> to vector<1x1xf32>
    %c2_59 = arith.constant 2 : index
    %c0_60 = arith.constant 0 : index
    %c0_61 = arith.constant 0 : index
    %190 = vector.load %arg10[%c2_59, %c0_60, %c0_61] : memref<4x72x8xf32, #tpu.memory_space<vmem>>, vector<1x72x8xf32>
    %191 = vector.shape_cast %190 : vector<1x72x8xf32> to vector<72x8xf32>
    %192 = vector.broadcast %189 : vector<1x1xf32> to vector<72x8xf32>
    %193 = arith.mulf %192, %191 : vector<72x8xf32>
    %194 = arith.addf %188, %193 : vector<72x8xf32>
    %195 = vector.extract_strided_slice %177 {offsets = [3, 0], sizes = [1, 1], strides = [1, 1]} : vector<4x1xf32> to vector<1x1xf32>
    %c3_62 = arith.constant 3 : index
    %c0_63 = arith.constant 0 : index
    %c0_64 = arith.constant 0 : index
    %196 = vector.load %arg10[%c3_62, %c0_63, %c0_64] : memref<4x72x8xf32, #tpu.memory_space<vmem>>, vector<1x72x8xf32>
    %197 = vector.shape_cast %196 : vector<1x72x8xf32> to vector<72x8xf32>
    %198 = vector.broadcast %195 : vector<1x1xf32> to vector<72x8xf32>
    %199 = arith.mulf %198, %197 : vector<72x8xf32>
    %200 = arith.addf %194, %199 : vector<72x8xf32>
    %cst_65 = arith.constant 0.000000e+00 : f32
    %201 = vector.broadcast %cst_65 : f32 to vector<8x256xf32>
    %202 = vector.extract_strided_slice %144 {offsets = [0, 239], sizes = [8, 17], strides = [1, 1]} : vector<8x256xf32> to vector<8x17xf32>
    %203 = vector.extract_strided_slice %144 {offsets = [0, 0], sizes = [8, 239], strides = [1, 1]} : vector<8x256xf32> to vector<8x239xf32>
    %204 = tpu.concatenate %202, %203 in 1 : vector<8x17xf32>, vector<8x239xf32> -> vector<8x256xf32>
    %205 = vector.extract_strided_slice %2 {offsets = [0, 0], sizes = [1, 256], strides = [1, 1]} : vector<9x256xf32> to vector<1x256xf32>
    %206 = vector.broadcast %205 : vector<1x256xf32> to vector<8x256xf32>
    %207 = arith.mulf %204, %206 : vector<8x256xf32>
    %208 = vector.extract_strided_slice %200 {offsets = [0, 0], sizes = [8, 8], strides = [1, 1]} : vector<72x8xf32> to vector<8x8xf32>
    %cst_66 = arith.constant dense<0.000000e+00> : vector<8x256xf32>
    %209 = tpu.matmul %208, %207, %cst_66 {dimension_numbers = #tpu.dot_dimension_numbers<[1], [0], [0], [1], [0, 0, 1, 1], [], []>} : vector<8x8xf32>, vector<8x256xf32>, vector<8x256xf32> -> vector<8x256xf32>
    %210 = arith.addf %201, %209 : vector<8x256xf32>
    %211 = vector.extract_strided_slice %144 {offsets = [0, 240], sizes = [8, 16], strides = [1, 1]} : vector<8x256xf32> to vector<8x16xf32>
    %212 = vector.extract_strided_slice %144 {offsets = [0, 0], sizes = [8, 240], strides = [1, 1]} : vector<8x256xf32> to vector<8x240xf32>
    %213 = tpu.concatenate %211, %212 in 1 : vector<8x16xf32>, vector<8x240xf32> -> vector<8x256xf32>
    %214 = vector.extract_strided_slice %2 {offsets = [1, 0], sizes = [1, 256], strides = [1, 1]} : vector<9x256xf32> to vector<1x256xf32>
    %215 = vector.broadcast %214 : vector<1x256xf32> to vector<8x256xf32>
    %216 = arith.mulf %213, %215 : vector<8x256xf32>
    %217 = vector.extract_strided_slice %200 {offsets = [8, 0], sizes = [8, 8], strides = [1, 1]} : vector<72x8xf32> to vector<8x8xf32>
    %cst_67 = arith.constant dense<0.000000e+00> : vector<8x256xf32>
    %218 = tpu.matmul %217, %216, %cst_67 {dimension_numbers = #tpu.dot_dimension_numbers<[1], [0], [0], [1], [0, 0, 1, 1], [], []>} : vector<8x8xf32>, vector<8x256xf32>, vector<8x256xf32> -> vector<8x256xf32>
    %219 = arith.addf %210, %218 : vector<8x256xf32>
    %220 = vector.extract_strided_slice %144 {offsets = [0, 241], sizes = [8, 15], strides = [1, 1]} : vector<8x256xf32> to vector<8x15xf32>
    %221 = vector.extract_strided_slice %144 {offsets = [0, 0], sizes = [8, 241], strides = [1, 1]} : vector<8x256xf32> to vector<8x241xf32>
    %222 = tpu.concatenate %220, %221 in 1 : vector<8x15xf32>, vector<8x241xf32> -> vector<8x256xf32>
    %223 = vector.extract_strided_slice %2 {offsets = [2, 0], sizes = [1, 256], strides = [1, 1]} : vector<9x256xf32> to vector<1x256xf32>
    %224 = vector.broadcast %223 : vector<1x256xf32> to vector<8x256xf32>
    %225 = arith.mulf %222, %224 : vector<8x256xf32>
    %226 = vector.extract_strided_slice %200 {offsets = [16, 0], sizes = [8, 8], strides = [1, 1]} : vector<72x8xf32> to vector<8x8xf32>
    %cst_68 = arith.constant dense<0.000000e+00> : vector<8x256xf32>
    %227 = tpu.matmul %226, %225, %cst_68 {dimension_numbers = #tpu.dot_dimension_numbers<[1], [0], [0], [1], [0, 0, 1, 1], [], []>} : vector<8x8xf32>, vector<8x256xf32>, vector<8x256xf32> -> vector<8x256xf32>
    %228 = arith.addf %219, %227 : vector<8x256xf32>
    %229 = vector.extract_strided_slice %144 {offsets = [0, 255], sizes = [8, 1], strides = [1, 1]} : vector<8x256xf32> to vector<8x1xf32>
    %230 = vector.extract_strided_slice %144 {offsets = [0, 0], sizes = [8, 255], strides = [1, 1]} : vector<8x256xf32> to vector<8x255xf32>
    %231 = tpu.concatenate %229, %230 in 1 : vector<8x1xf32>, vector<8x255xf32> -> vector<8x256xf32>
    %232 = vector.extract_strided_slice %2 {offsets = [3, 0], sizes = [1, 256], strides = [1, 1]} : vector<9x256xf32> to vector<1x256xf32>
    %233 = vector.broadcast %232 : vector<1x256xf32> to vector<8x256xf32>
    %234 = arith.mulf %231, %233 : vector<8x256xf32>
    %235 = vector.extract_strided_slice %200 {offsets = [24, 0], sizes = [8, 8], strides = [1, 1]} : vector<72x8xf32> to vector<8x8xf32>
    %cst_69 = arith.constant dense<0.000000e+00> : vector<8x256xf32>
    %236 = tpu.matmul %235, %234, %cst_69 {dimension_numbers = #tpu.dot_dimension_numbers<[1], [0], [0], [1], [0, 0, 1, 1], [], []>} : vector<8x8xf32>, vector<8x256xf32>, vector<8x256xf32> -> vector<8x256xf32>
    %237 = arith.addf %228, %236 : vector<8x256xf32>
    %238 = vector.extract_strided_slice %200 {offsets = [32, 0], sizes = [8, 8], strides = [1, 1]} : vector<72x8xf32> to vector<8x8xf32>
    %cst_70 = arith.constant dense<0.000000e+00> : vector<8x256xf32>
    %239 = tpu.matmul %238, %144, %cst_70 {dimension_numbers = #tpu.dot_dimension_numbers<[1], [0], [0], [1], [0, 0, 1, 1], [], []>} : vector<8x8xf32>, vector<8x256xf32>, vector<8x256xf32> -> vector<8x256xf32>
    %240 = arith.addf %237, %239 : vector<8x256xf32>
    %241 = vector.extract_strided_slice %144 {offsets = [0, 1], sizes = [8, 255], strides = [1, 1]} : vector<8x256xf32> to vector<8x255xf32>
    %242 = vector.extract_strided_slice %144 {offsets = [0, 0], sizes = [8, 1], strides = [1, 1]} : vector<8x256xf32> to vector<8x1xf32>
    %243 = tpu.concatenate %241, %242 in 1 : vector<8x255xf32>, vector<8x1xf32> -> vector<8x256xf32>
    %244 = vector.extract_strided_slice %2 {offsets = [5, 0], sizes = [1, 256], strides = [1, 1]} : vector<9x256xf32> to vector<1x256xf32>
    %245 = vector.broadcast %244 : vector<1x256xf32> to vector<8x256xf32>
    %246 = arith.mulf %243, %245 : vector<8x256xf32>
    %247 = vector.extract_strided_slice %200 {offsets = [40, 0], sizes = [8, 8], strides = [1, 1]} : vector<72x8xf32> to vector<8x8xf32>
    %cst_71 = arith.constant dense<0.000000e+00> : vector<8x256xf32>
    %248 = tpu.matmul %247, %246, %cst_71 {dimension_numbers = #tpu.dot_dimension_numbers<[1], [0], [0], [1], [0, 0, 1, 1], [], []>} : vector<8x8xf32>, vector<8x256xf32>, vector<8x256xf32> -> vector<8x256xf32>
    %249 = arith.addf %240, %248 : vector<8x256xf32>
    %250 = vector.extract_strided_slice %144 {offsets = [0, 15], sizes = [8, 241], strides = [1, 1]} : vector<8x256xf32> to vector<8x241xf32>
    %251 = vector.extract_strided_slice %144 {offsets = [0, 0], sizes = [8, 15], strides = [1, 1]} : vector<8x256xf32> to vector<8x15xf32>
    %252 = tpu.concatenate %250, %251 in 1 : vector<8x241xf32>, vector<8x15xf32> -> vector<8x256xf32>
    %253 = vector.extract_strided_slice %2 {offsets = [6, 0], sizes = [1, 256], strides = [1, 1]} : vector<9x256xf32> to vector<1x256xf32>
    %254 = vector.broadcast %253 : vector<1x256xf32> to vector<8x256xf32>
    %255 = arith.mulf %252, %254 : vector<8x256xf32>
    %256 = vector.extract_strided_slice %200 {offsets = [48, 0], sizes = [8, 8], strides = [1, 1]} : vector<72x8xf32> to vector<8x8xf32>
    %cst_72 = arith.constant dense<0.000000e+00> : vector<8x256xf32>
    %257 = tpu.matmul %256, %255, %cst_72 {dimension_numbers = #tpu.dot_dimension_numbers<[1], [0], [0], [1], [0, 0, 1, 1], [], []>} : vector<8x8xf32>, vector<8x256xf32>, vector<8x256xf32> -> vector<8x256xf32>
    %258 = arith.addf %249, %257 : vector<8x256xf32>
    %259 = vector.extract_strided_slice %144 {offsets = [0, 16], sizes = [8, 240], strides = [1, 1]} : vector<8x256xf32> to vector<8x240xf32>
    %260 = vector.extract_strided_slice %144 {offsets = [0, 0], sizes = [8, 16], strides = [1, 1]} : vector<8x256xf32> to vector<8x16xf32>
    %261 = tpu.concatenate %259, %260 in 1 : vector<8x240xf32>, vector<8x16xf32> -> vector<8x256xf32>
    %262 = vector.extract_strided_slice %2 {offsets = [7, 0], sizes = [1, 256], strides = [1, 1]} : vector<9x256xf32> to vector<1x256xf32>
    %263 = vector.broadcast %262 : vector<1x256xf32> to vector<8x256xf32>
    %264 = arith.mulf %261, %263 : vector<8x256xf32>
    %265 = vector.extract_strided_slice %200 {offsets = [56, 0], sizes = [8, 8], strides = [1, 1]} : vector<72x8xf32> to vector<8x8xf32>
    %cst_73 = arith.constant dense<0.000000e+00> : vector<8x256xf32>
    %266 = tpu.matmul %265, %264, %cst_73 {dimension_numbers = #tpu.dot_dimension_numbers<[1], [0], [0], [1], [0, 0, 1, 1], [], []>} : vector<8x8xf32>, vector<8x256xf32>, vector<8x256xf32> -> vector<8x256xf32>
    %267 = arith.addf %258, %266 : vector<8x256xf32>
    %268 = vector.extract_strided_slice %144 {offsets = [0, 17], sizes = [8, 239], strides = [1, 1]} : vector<8x256xf32> to vector<8x239xf32>
    %269 = vector.extract_strided_slice %144 {offsets = [0, 0], sizes = [8, 17], strides = [1, 1]} : vector<8x256xf32> to vector<8x17xf32>
    %270 = tpu.concatenate %268, %269 in 1 : vector<8x239xf32>, vector<8x17xf32> -> vector<8x256xf32>
    %271 = vector.extract_strided_slice %2 {offsets = [8, 0], sizes = [1, 256], strides = [1, 1]} : vector<9x256xf32> to vector<1x256xf32>
    %272 = vector.broadcast %271 : vector<1x256xf32> to vector<8x256xf32>
    %273 = arith.mulf %270, %272 : vector<8x256xf32>
    %274 = vector.extract_strided_slice %200 {offsets = [64, 0], sizes = [8, 8], strides = [1, 1]} : vector<72x8xf32> to vector<8x8xf32>
    %cst_74 = arith.constant dense<0.000000e+00> : vector<8x256xf32>
    %275 = tpu.matmul %274, %273, %cst_74 {dimension_numbers = #tpu.dot_dimension_numbers<[1], [0], [0], [1], [0, 0, 1, 1], [], []>} : vector<8x8xf32>, vector<8x256xf32>, vector<8x256xf32> -> vector<8x256xf32>
    %276 = arith.addf %267, %275 : vector<8x256xf32>
    %c1_75 = arith.constant 1 : index
    %c0_76 = arith.constant 0 : index
    %c0_77 = arith.constant 0 : index
    %277 = vector.load %arg13[%c1_75, %c0_76, %c0_77] : memref<4x8x1xf32, #tpu.memory_space<vmem>>, vector<1x8x1xf32>
    %278 = vector.shape_cast %277 : vector<1x8x1xf32> to vector<8x1xf32>
    %279 = vector.broadcast %278 : vector<8x1xf32> to vector<8x256xf32>
    %280 = arith.mulf %276, %279 : vector<8x256xf32>
    %c1_78 = arith.constant 1 : index
    %c0_79 = arith.constant 0 : index
    %c0_80 = arith.constant 0 : index
    %281 = vector.load %arg14[%c1_78, %c0_79, %c0_80] : memref<4x8x1xf32, #tpu.memory_space<vmem>>, vector<1x8x1xf32>
    %282 = vector.shape_cast %281 : vector<1x8x1xf32> to vector<8x1xf32>
    %283 = vector.broadcast %282 : vector<8x1xf32> to vector<8x256xf32>
    %284 = arith.addf %280, %283 : vector<8x256xf32>
    %cst_81 = arith.constant 0.000000e+00 : f32
    %285 = vector.broadcast %cst_81 : f32 to vector<8x256xf32>
    %286 = arith.maximumf %284, %285 : vector<8x256xf32>
    %c0_82 = arith.constant 0 : index
    %c0_83 = arith.constant 0 : index
    %287 = vector.load %arg11[%c0_82, %c0_83] : memref<72x8xf32, #tpu.memory_space<vmem>>, vector<72x8xf32>
    %cst_84 = arith.constant 0.000000e+00 : f32
    %288 = vector.broadcast %cst_84 : f32 to vector<8x256xf32>
    %289 = vector.extract_strided_slice %1 {offsets = [0, 239], sizes = [8, 17], strides = [1, 1]} : vector<8x256xf32> to vector<8x17xf32>
    %290 = vector.extract_strided_slice %1 {offsets = [0, 0], sizes = [8, 239], strides = [1, 1]} : vector<8x256xf32> to vector<8x239xf32>
    %291 = tpu.concatenate %289, %290 in 1 : vector<8x17xf32>, vector<8x239xf32> -> vector<8x256xf32>
    %292 = vector.extract_strided_slice %2 {offsets = [0, 0], sizes = [1, 256], strides = [1, 1]} : vector<9x256xf32> to vector<1x256xf32>
    %293 = vector.broadcast %292 : vector<1x256xf32> to vector<8x256xf32>
    %294 = arith.mulf %291, %293 : vector<8x256xf32>
    %295 = vector.extract_strided_slice %287 {offsets = [0, 0], sizes = [8, 8], strides = [1, 1]} : vector<72x8xf32> to vector<8x8xf32>
    %cst_85 = arith.constant dense<0.000000e+00> : vector<8x256xf32>
    %296 = tpu.matmul %295, %294, %cst_85 {dimension_numbers = #tpu.dot_dimension_numbers<[1], [0], [0], [1], [0, 0, 1, 1], [], []>} : vector<8x8xf32>, vector<8x256xf32>, vector<8x256xf32> -> vector<8x256xf32>
    %297 = arith.addf %288, %296 : vector<8x256xf32>
    %298 = vector.extract_strided_slice %1 {offsets = [0, 240], sizes = [8, 16], strides = [1, 1]} : vector<8x256xf32> to vector<8x16xf32>
    %299 = vector.extract_strided_slice %1 {offsets = [0, 0], sizes = [8, 240], strides = [1, 1]} : vector<8x256xf32> to vector<8x240xf32>
    %300 = tpu.concatenate %298, %299 in 1 : vector<8x16xf32>, vector<8x240xf32> -> vector<8x256xf32>
    %301 = vector.extract_strided_slice %2 {offsets = [1, 0], sizes = [1, 256], strides = [1, 1]} : vector<9x256xf32> to vector<1x256xf32>
    %302 = vector.broadcast %301 : vector<1x256xf32> to vector<8x256xf32>
    %303 = arith.mulf %300, %302 : vector<8x256xf32>
    %304 = vector.extract_strided_slice %287 {offsets = [8, 0], sizes = [8, 8], strides = [1, 1]} : vector<72x8xf32> to vector<8x8xf32>
    %cst_86 = arith.constant dense<0.000000e+00> : vector<8x256xf32>
    %305 = tpu.matmul %304, %303, %cst_86 {dimension_numbers = #tpu.dot_dimension_numbers<[1], [0], [0], [1], [0, 0, 1, 1], [], []>} : vector<8x8xf32>, vector<8x256xf32>, vector<8x256xf32> -> vector<8x256xf32>
    %306 = arith.addf %297, %305 : vector<8x256xf32>
    %307 = vector.extract_strided_slice %1 {offsets = [0, 241], sizes = [8, 15], strides = [1, 1]} : vector<8x256xf32> to vector<8x15xf32>
    %308 = vector.extract_strided_slice %1 {offsets = [0, 0], sizes = [8, 241], strides = [1, 1]} : vector<8x256xf32> to vector<8x241xf32>
    %309 = tpu.concatenate %307, %308 in 1 : vector<8x15xf32>, vector<8x241xf32> -> vector<8x256xf32>
    %310 = vector.extract_strided_slice %2 {offsets = [2, 0], sizes = [1, 256], strides = [1, 1]} : vector<9x256xf32> to vector<1x256xf32>
    %311 = vector.broadcast %310 : vector<1x256xf32> to vector<8x256xf32>
    %312 = arith.mulf %309, %311 : vector<8x256xf32>
    %313 = vector.extract_strided_slice %287 {offsets = [16, 0], sizes = [8, 8], strides = [1, 1]} : vector<72x8xf32> to vector<8x8xf32>
    %cst_87 = arith.constant dense<0.000000e+00> : vector<8x256xf32>
    %314 = tpu.matmul %313, %312, %cst_87 {dimension_numbers = #tpu.dot_dimension_numbers<[1], [0], [0], [1], [0, 0, 1, 1], [], []>} : vector<8x8xf32>, vector<8x256xf32>, vector<8x256xf32> -> vector<8x256xf32>
    %315 = arith.addf %306, %314 : vector<8x256xf32>
    %316 = vector.extract_strided_slice %1 {offsets = [0, 255], sizes = [8, 1], strides = [1, 1]} : vector<8x256xf32> to vector<8x1xf32>
    %317 = vector.extract_strided_slice %1 {offsets = [0, 0], sizes = [8, 255], strides = [1, 1]} : vector<8x256xf32> to vector<8x255xf32>
    %318 = tpu.concatenate %316, %317 in 1 : vector<8x1xf32>, vector<8x255xf32> -> vector<8x256xf32>
    %319 = vector.extract_strided_slice %2 {offsets = [3, 0], sizes = [1, 256], strides = [1, 1]} : vector<9x256xf32> to vector<1x256xf32>
    %320 = vector.broadcast %319 : vector<1x256xf32> to vector<8x256xf32>
    %321 = arith.mulf %318, %320 : vector<8x256xf32>
    %322 = vector.extract_strided_slice %287 {offsets = [24, 0], sizes = [8, 8], strides = [1, 1]} : vector<72x8xf32> to vector<8x8xf32>
    %cst_88 = arith.constant dense<0.000000e+00> : vector<8x256xf32>
    %323 = tpu.matmul %322, %321, %cst_88 {dimension_numbers = #tpu.dot_dimension_numbers<[1], [0], [0], [1], [0, 0, 1, 1], [], []>} : vector<8x8xf32>, vector<8x256xf32>, vector<8x256xf32> -> vector<8x256xf32>
    %324 = arith.addf %315, %323 : vector<8x256xf32>
    %325 = vector.extract_strided_slice %287 {offsets = [32, 0], sizes = [8, 8], strides = [1, 1]} : vector<72x8xf32> to vector<8x8xf32>
    %cst_89 = arith.constant dense<0.000000e+00> : vector<8x256xf32>
    %326 = tpu.matmul %325, %1, %cst_89 {dimension_numbers = #tpu.dot_dimension_numbers<[1], [0], [0], [1], [0, 0, 1, 1], [], []>} : vector<8x8xf32>, vector<8x256xf32>, vector<8x256xf32> -> vector<8x256xf32>
    %327 = arith.addf %324, %326 : vector<8x256xf32>
    %328 = vector.extract_strided_slice %1 {offsets = [0, 1], sizes = [8, 255], strides = [1, 1]} : vector<8x256xf32> to vector<8x255xf32>
    %329 = vector.extract_strided_slice %1 {offsets = [0, 0], sizes = [8, 1], strides = [1, 1]} : vector<8x256xf32> to vector<8x1xf32>
    %330 = tpu.concatenate %328, %329 in 1 : vector<8x255xf32>, vector<8x1xf32> -> vector<8x256xf32>
    %331 = vector.extract_strided_slice %2 {offsets = [5, 0], sizes = [1, 256], strides = [1, 1]} : vector<9x256xf32> to vector<1x256xf32>
    %332 = vector.broadcast %331 : vector<1x256xf32> to vector<8x256xf32>
    %333 = arith.mulf %330, %332 : vector<8x256xf32>
    %334 = vector.extract_strided_slice %287 {offsets = [40, 0], sizes = [8, 8], strides = [1, 1]} : vector<72x8xf32> to vector<8x8xf32>
    %cst_90 = arith.constant dense<0.000000e+00> : vector<8x256xf32>
    %335 = tpu.matmul %334, %333, %cst_90 {dimension_numbers = #tpu.dot_dimension_numbers<[1], [0], [0], [1], [0, 0, 1, 1], [], []>} : vector<8x8xf32>, vector<8x256xf32>, vector<8x256xf32> -> vector<8x256xf32>
    %336 = arith.addf %327, %335 : vector<8x256xf32>
    %337 = vector.extract_strided_slice %1 {offsets = [0, 15], sizes = [8, 241], strides = [1, 1]} : vector<8x256xf32> to vector<8x241xf32>
    %338 = vector.extract_strided_slice %1 {offsets = [0, 0], sizes = [8, 15], strides = [1, 1]} : vector<8x256xf32> to vector<8x15xf32>
    %339 = tpu.concatenate %337, %338 in 1 : vector<8x241xf32>, vector<8x15xf32> -> vector<8x256xf32>
    %340 = vector.extract_strided_slice %2 {offsets = [6, 0], sizes = [1, 256], strides = [1, 1]} : vector<9x256xf32> to vector<1x256xf32>
    %341 = vector.broadcast %340 : vector<1x256xf32> to vector<8x256xf32>
    %342 = arith.mulf %339, %341 : vector<8x256xf32>
    %343 = vector.extract_strided_slice %287 {offsets = [48, 0], sizes = [8, 8], strides = [1, 1]} : vector<72x8xf32> to vector<8x8xf32>
    %cst_91 = arith.constant dense<0.000000e+00> : vector<8x256xf32>
    %344 = tpu.matmul %343, %342, %cst_91 {dimension_numbers = #tpu.dot_dimension_numbers<[1], [0], [0], [1], [0, 0, 1, 1], [], []>} : vector<8x8xf32>, vector<8x256xf32>, vector<8x256xf32> -> vector<8x256xf32>
    %345 = arith.addf %336, %344 : vector<8x256xf32>
    %346 = vector.extract_strided_slice %1 {offsets = [0, 16], sizes = [8, 240], strides = [1, 1]} : vector<8x256xf32> to vector<8x240xf32>
    %347 = vector.extract_strided_slice %1 {offsets = [0, 0], sizes = [8, 16], strides = [1, 1]} : vector<8x256xf32> to vector<8x16xf32>
    %348 = tpu.concatenate %346, %347 in 1 : vector<8x240xf32>, vector<8x16xf32> -> vector<8x256xf32>
    %349 = vector.extract_strided_slice %2 {offsets = [7, 0], sizes = [1, 256], strides = [1, 1]} : vector<9x256xf32> to vector<1x256xf32>
    %350 = vector.broadcast %349 : vector<1x256xf32> to vector<8x256xf32>
    %351 = arith.mulf %348, %350 : vector<8x256xf32>
    %352 = vector.extract_strided_slice %287 {offsets = [56, 0], sizes = [8, 8], strides = [1, 1]} : vector<72x8xf32> to vector<8x8xf32>
    %cst_92 = arith.constant dense<0.000000e+00> : vector<8x256xf32>
    %353 = tpu.matmul %352, %351, %cst_92 {dimension_numbers = #tpu.dot_dimension_numbers<[1], [0], [0], [1], [0, 0, 1, 1], [], []>} : vector<8x8xf32>, vector<8x256xf32>, vector<8x256xf32> -> vector<8x256xf32>
    %354 = arith.addf %345, %353 : vector<8x256xf32>
    %355 = vector.extract_strided_slice %1 {offsets = [0, 17], sizes = [8, 239], strides = [1, 1]} : vector<8x256xf32> to vector<8x239xf32>
    %356 = vector.extract_strided_slice %1 {offsets = [0, 0], sizes = [8, 17], strides = [1, 1]} : vector<8x256xf32> to vector<8x17xf32>
    %357 = tpu.concatenate %355, %356 in 1 : vector<8x239xf32>, vector<8x17xf32> -> vector<8x256xf32>
    %358 = vector.extract_strided_slice %2 {offsets = [8, 0], sizes = [1, 256], strides = [1, 1]} : vector<9x256xf32> to vector<1x256xf32>
    %359 = vector.broadcast %358 : vector<1x256xf32> to vector<8x256xf32>
    %360 = arith.mulf %357, %359 : vector<8x256xf32>
    %361 = vector.extract_strided_slice %287 {offsets = [64, 0], sizes = [8, 8], strides = [1, 1]} : vector<72x8xf32> to vector<8x8xf32>
    %cst_93 = arith.constant dense<0.000000e+00> : vector<8x256xf32>
    %362 = tpu.matmul %361, %360, %cst_93 {dimension_numbers = #tpu.dot_dimension_numbers<[1], [0], [0], [1], [0, 0, 1, 1], [], []>} : vector<8x8xf32>, vector<8x256xf32>, vector<8x256xf32> -> vector<8x256xf32>
    %363 = arith.addf %354, %362 : vector<8x256xf32>
    %c2_94 = arith.constant 2 : index
    %c0_95 = arith.constant 0 : index
    %c0_96 = arith.constant 0 : index
    %364 = vector.load %arg13[%c2_94, %c0_95, %c0_96] : memref<4x8x1xf32, #tpu.memory_space<vmem>>, vector<1x8x1xf32>
    %365 = vector.shape_cast %364 : vector<1x8x1xf32> to vector<8x1xf32>
    %366 = vector.broadcast %365 : vector<8x1xf32> to vector<8x256xf32>
    %367 = arith.mulf %363, %366 : vector<8x256xf32>
    %c2_97 = arith.constant 2 : index
    %c0_98 = arith.constant 0 : index
    %c0_99 = arith.constant 0 : index
    %368 = vector.load %arg14[%c2_97, %c0_98, %c0_99] : memref<4x8x1xf32, #tpu.memory_space<vmem>>, vector<1x8x1xf32>
    %369 = vector.shape_cast %368 : vector<1x8x1xf32> to vector<8x1xf32>
    %370 = vector.broadcast %369 : vector<8x1xf32> to vector<8x256xf32>
    %371 = arith.addf %367, %370 : vector<8x256xf32>
    %cst_100 = arith.constant 0.000000e+00 : f32
    %372 = vector.broadcast %cst_100 : f32 to vector<8x256xf32>
    %373 = arith.maximumf %371, %372 : vector<8x256xf32>
    %c0_101 = arith.constant 0 : index
    %c0_102 = arith.constant 0 : index
    %374 = vector.load %arg12[%c0_101, %c0_102] : memref<72x8xf32, #tpu.memory_space<vmem>>, vector<72x8xf32>
    %cst_103 = arith.constant 0.000000e+00 : f32
    %375 = vector.broadcast %cst_103 : f32 to vector<8x256xf32>
    %376 = vector.extract_strided_slice %373 {offsets = [0, 239], sizes = [8, 17], strides = [1, 1]} : vector<8x256xf32> to vector<8x17xf32>
    %377 = vector.extract_strided_slice %373 {offsets = [0, 0], sizes = [8, 239], strides = [1, 1]} : vector<8x256xf32> to vector<8x239xf32>
    %378 = tpu.concatenate %376, %377 in 1 : vector<8x17xf32>, vector<8x239xf32> -> vector<8x256xf32>
    %379 = vector.extract_strided_slice %2 {offsets = [0, 0], sizes = [1, 256], strides = [1, 1]} : vector<9x256xf32> to vector<1x256xf32>
    %380 = vector.broadcast %379 : vector<1x256xf32> to vector<8x256xf32>
    %381 = arith.mulf %378, %380 : vector<8x256xf32>
    %382 = vector.extract_strided_slice %374 {offsets = [0, 0], sizes = [8, 8], strides = [1, 1]} : vector<72x8xf32> to vector<8x8xf32>
    %cst_104 = arith.constant dense<0.000000e+00> : vector<8x256xf32>
    %383 = tpu.matmul %382, %381, %cst_104 {dimension_numbers = #tpu.dot_dimension_numbers<[1], [0], [0], [1], [0, 0, 1, 1], [], []>} : vector<8x8xf32>, vector<8x256xf32>, vector<8x256xf32> -> vector<8x256xf32>
    %384 = arith.addf %375, %383 : vector<8x256xf32>
    %385 = vector.extract_strided_slice %373 {offsets = [0, 240], sizes = [8, 16], strides = [1, 1]} : vector<8x256xf32> to vector<8x16xf32>
    %386 = vector.extract_strided_slice %373 {offsets = [0, 0], sizes = [8, 240], strides = [1, 1]} : vector<8x256xf32> to vector<8x240xf32>
    %387 = tpu.concatenate %385, %386 in 1 : vector<8x16xf32>, vector<8x240xf32> -> vector<8x256xf32>
    %388 = vector.extract_strided_slice %2 {offsets = [1, 0], sizes = [1, 256], strides = [1, 1]} : vector<9x256xf32> to vector<1x256xf32>
    %389 = vector.broadcast %388 : vector<1x256xf32> to vector<8x256xf32>
    %390 = arith.mulf %387, %389 : vector<8x256xf32>
    %391 = vector.extract_strided_slice %374 {offsets = [8, 0], sizes = [8, 8], strides = [1, 1]} : vector<72x8xf32> to vector<8x8xf32>
    %cst_105 = arith.constant dense<0.000000e+00> : vector<8x256xf32>
    %392 = tpu.matmul %391, %390, %cst_105 {dimension_numbers = #tpu.dot_dimension_numbers<[1], [0], [0], [1], [0, 0, 1, 1], [], []>} : vector<8x8xf32>, vector<8x256xf32>, vector<8x256xf32> -> vector<8x256xf32>
    %393 = arith.addf %384, %392 : vector<8x256xf32>
    %394 = vector.extract_strided_slice %373 {offsets = [0, 241], sizes = [8, 15], strides = [1, 1]} : vector<8x256xf32> to vector<8x15xf32>
    %395 = vector.extract_strided_slice %373 {offsets = [0, 0], sizes = [8, 241], strides = [1, 1]} : vector<8x256xf32> to vector<8x241xf32>
    %396 = tpu.concatenate %394, %395 in 1 : vector<8x15xf32>, vector<8x241xf32> -> vector<8x256xf32>
    %397 = vector.extract_strided_slice %2 {offsets = [2, 0], sizes = [1, 256], strides = [1, 1]} : vector<9x256xf32> to vector<1x256xf32>
    %398 = vector.broadcast %397 : vector<1x256xf32> to vector<8x256xf32>
    %399 = arith.mulf %396, %398 : vector<8x256xf32>
    %400 = vector.extract_strided_slice %374 {offsets = [16, 0], sizes = [8, 8], strides = [1, 1]} : vector<72x8xf32> to vector<8x8xf32>
    %cst_106 = arith.constant dense<0.000000e+00> : vector<8x256xf32>
    %401 = tpu.matmul %400, %399, %cst_106 {dimension_numbers = #tpu.dot_dimension_numbers<[1], [0], [0], [1], [0, 0, 1, 1], [], []>} : vector<8x8xf32>, vector<8x256xf32>, vector<8x256xf32> -> vector<8x256xf32>
    %402 = arith.addf %393, %401 : vector<8x256xf32>
    %403 = vector.extract_strided_slice %373 {offsets = [0, 255], sizes = [8, 1], strides = [1, 1]} : vector<8x256xf32> to vector<8x1xf32>
    %404 = vector.extract_strided_slice %373 {offsets = [0, 0], sizes = [8, 255], strides = [1, 1]} : vector<8x256xf32> to vector<8x255xf32>
    %405 = tpu.concatenate %403, %404 in 1 : vector<8x1xf32>, vector<8x255xf32> -> vector<8x256xf32>
    %406 = vector.extract_strided_slice %2 {offsets = [3, 0], sizes = [1, 256], strides = [1, 1]} : vector<9x256xf32> to vector<1x256xf32>
    %407 = vector.broadcast %406 : vector<1x256xf32> to vector<8x256xf32>
    %408 = arith.mulf %405, %407 : vector<8x256xf32>
    %409 = vector.extract_strided_slice %374 {offsets = [24, 0], sizes = [8, 8], strides = [1, 1]} : vector<72x8xf32> to vector<8x8xf32>
    %cst_107 = arith.constant dense<0.000000e+00> : vector<8x256xf32>
    %410 = tpu.matmul %409, %408, %cst_107 {dimension_numbers = #tpu.dot_dimension_numbers<[1], [0], [0], [1], [0, 0, 1, 1], [], []>} : vector<8x8xf32>, vector<8x256xf32>, vector<8x256xf32> -> vector<8x256xf32>
    %411 = arith.addf %402, %410 : vector<8x256xf32>
    %412 = vector.extract_strided_slice %374 {offsets = [32, 0], sizes = [8, 8], strides = [1, 1]} : vector<72x8xf32> to vector<8x8xf32>
    %cst_108 = arith.constant dense<0.000000e+00> : vector<8x256xf32>
    %413 = tpu.matmul %412, %373, %cst_108 {dimension_numbers = #tpu.dot_dimension_numbers<[1], [0], [0], [1], [0, 0, 1, 1], [], []>} : vector<8x8xf32>, vector<8x256xf32>, vector<8x256xf32> -> vector<8x256xf32>
    %414 = arith.addf %411, %413 : vector<8x256xf32>
    %415 = vector.extract_strided_slice %373 {offsets = [0, 1], sizes = [8, 255], strides = [1, 1]} : vector<8x256xf32> to vector<8x255xf32>
    %416 = vector.extract_strided_slice %373 {offsets = [0, 0], sizes = [8, 1], strides = [1, 1]} : vector<8x256xf32> to vector<8x1xf32>
    %417 = tpu.concatenate %415, %416 in 1 : vector<8x255xf32>, vector<8x1xf32> -> vector<8x256xf32>
    %418 = vector.extract_strided_slice %2 {offsets = [5, 0], sizes = [1, 256], strides = [1, 1]} : vector<9x256xf32> to vector<1x256xf32>
    %419 = vector.broadcast %418 : vector<1x256xf32> to vector<8x256xf32>
    %420 = arith.mulf %417, %419 : vector<8x256xf32>
    %421 = vector.extract_strided_slice %374 {offsets = [40, 0], sizes = [8, 8], strides = [1, 1]} : vector<72x8xf32> to vector<8x8xf32>
    %cst_109 = arith.constant dense<0.000000e+00> : vector<8x256xf32>
    %422 = tpu.matmul %421, %420, %cst_109 {dimension_numbers = #tpu.dot_dimension_numbers<[1], [0], [0], [1], [0, 0, 1, 1], [], []>} : vector<8x8xf32>, vector<8x256xf32>, vector<8x256xf32> -> vector<8x256xf32>
    %423 = arith.addf %414, %422 : vector<8x256xf32>
    %424 = vector.extract_strided_slice %373 {offsets = [0, 15], sizes = [8, 241], strides = [1, 1]} : vector<8x256xf32> to vector<8x241xf32>
    %425 = vector.extract_strided_slice %373 {offsets = [0, 0], sizes = [8, 15], strides = [1, 1]} : vector<8x256xf32> to vector<8x15xf32>
    %426 = tpu.concatenate %424, %425 in 1 : vector<8x241xf32>, vector<8x15xf32> -> vector<8x256xf32>
    %427 = vector.extract_strided_slice %2 {offsets = [6, 0], sizes = [1, 256], strides = [1, 1]} : vector<9x256xf32> to vector<1x256xf32>
    %428 = vector.broadcast %427 : vector<1x256xf32> to vector<8x256xf32>
    %429 = arith.mulf %426, %428 : vector<8x256xf32>
    %430 = vector.extract_strided_slice %374 {offsets = [48, 0], sizes = [8, 8], strides = [1, 1]} : vector<72x8xf32> to vector<8x8xf32>
    %cst_110 = arith.constant dense<0.000000e+00> : vector<8x256xf32>
    %431 = tpu.matmul %430, %429, %cst_110 {dimension_numbers = #tpu.dot_dimension_numbers<[1], [0], [0], [1], [0, 0, 1, 1], [], []>} : vector<8x8xf32>, vector<8x256xf32>, vector<8x256xf32> -> vector<8x256xf32>
    %432 = arith.addf %423, %431 : vector<8x256xf32>
    %433 = vector.extract_strided_slice %373 {offsets = [0, 16], sizes = [8, 240], strides = [1, 1]} : vector<8x256xf32> to vector<8x240xf32>
    %434 = vector.extract_strided_slice %373 {offsets = [0, 0], sizes = [8, 16], strides = [1, 1]} : vector<8x256xf32> to vector<8x16xf32>
    %435 = tpu.concatenate %433, %434 in 1 : vector<8x240xf32>, vector<8x16xf32> -> vector<8x256xf32>
    %436 = vector.extract_strided_slice %2 {offsets = [7, 0], sizes = [1, 256], strides = [1, 1]} : vector<9x256xf32> to vector<1x256xf32>
    %437 = vector.broadcast %436 : vector<1x256xf32> to vector<8x256xf32>
    %438 = arith.mulf %435, %437 : vector<8x256xf32>
    %439 = vector.extract_strided_slice %374 {offsets = [56, 0], sizes = [8, 8], strides = [1, 1]} : vector<72x8xf32> to vector<8x8xf32>
    %cst_111 = arith.constant dense<0.000000e+00> : vector<8x256xf32>
    %440 = tpu.matmul %439, %438, %cst_111 {dimension_numbers = #tpu.dot_dimension_numbers<[1], [0], [0], [1], [0, 0, 1, 1], [], []>} : vector<8x8xf32>, vector<8x256xf32>, vector<8x256xf32> -> vector<8x256xf32>
    %441 = arith.addf %432, %440 : vector<8x256xf32>
    %442 = vector.extract_strided_slice %373 {offsets = [0, 17], sizes = [8, 239], strides = [1, 1]} : vector<8x256xf32> to vector<8x239xf32>
    %443 = vector.extract_strided_slice %373 {offsets = [0, 0], sizes = [8, 17], strides = [1, 1]} : vector<8x256xf32> to vector<8x17xf32>
    %444 = tpu.concatenate %442, %443 in 1 : vector<8x239xf32>, vector<8x17xf32> -> vector<8x256xf32>
    %445 = vector.extract_strided_slice %2 {offsets = [8, 0], sizes = [1, 256], strides = [1, 1]} : vector<9x256xf32> to vector<1x256xf32>
    %446 = vector.broadcast %445 : vector<1x256xf32> to vector<8x256xf32>
    %447 = arith.mulf %444, %446 : vector<8x256xf32>
    %448 = vector.extract_strided_slice %374 {offsets = [64, 0], sizes = [8, 8], strides = [1, 1]} : vector<72x8xf32> to vector<8x8xf32>
    %cst_112 = arith.constant dense<0.000000e+00> : vector<8x256xf32>
    %449 = tpu.matmul %448, %447, %cst_112 {dimension_numbers = #tpu.dot_dimension_numbers<[1], [0], [0], [1], [0, 0, 1, 1], [], []>} : vector<8x8xf32>, vector<8x256xf32>, vector<8x256xf32> -> vector<8x256xf32>
    %450 = arith.addf %441, %449 : vector<8x256xf32>
    %c3_113 = arith.constant 3 : index
    %c0_114 = arith.constant 0 : index
    %c0_115 = arith.constant 0 : index
    %451 = vector.load %arg13[%c3_113, %c0_114, %c0_115] : memref<4x8x1xf32, #tpu.memory_space<vmem>>, vector<1x8x1xf32>
    %452 = vector.shape_cast %451 : vector<1x8x1xf32> to vector<8x1xf32>
    %453 = vector.broadcast %452 : vector<8x1xf32> to vector<8x256xf32>
    %454 = arith.mulf %450, %453 : vector<8x256xf32>
    %c3_116 = arith.constant 3 : index
    %c0_117 = arith.constant 0 : index
    %c0_118 = arith.constant 0 : index
    %455 = vector.load %arg14[%c3_116, %c0_117, %c0_118] : memref<4x8x1xf32, #tpu.memory_space<vmem>>, vector<1x8x1xf32>
    %456 = vector.shape_cast %455 : vector<1x8x1xf32> to vector<8x1xf32>
    %457 = vector.broadcast %456 : vector<8x1xf32> to vector<8x256xf32>
    %458 = arith.addf %454, %457 : vector<8x256xf32>
    %cst_119 = arith.constant 0.000000e+00 : f32
    %459 = vector.broadcast %cst_119 : f32 to vector<8x256xf32>
    %460 = arith.maximumf %458, %459 : vector<8x256xf32>
    %461 = arith.addf %286, %460 : vector<8x256xf32>
    %c0_120 = arith.constant 0 : index
    %c0_121 = arith.constant 0 : index
    %c0_122 = arith.constant 0 : index
    %462 = vector.load %arg15[%c0_120, %c0_121, %c0_122] : memref<1x8x256xf32, #tpu.memory_space<vmem>>, vector<1x8x256xf32>
    %463 = vector.shape_cast %462 : vector<1x8x256xf32> to vector<8x256xf32>
    %464 = vector.shape_cast %461 : vector<8x256xf32> to vector<1x8x256xf32>
    tpu.vector_store %arg15[%c0_120, %c0_121, %c0_122], %464 {strides = array<i32>} : memref<1x8x256xf32, #tpu.memory_space<vmem>>, vector<1x8x256xf32>,
    return
  }
  func.func @transform_0(%arg0: i32) -> (i32, i32, i32) {
    %c0_i32 = arith.constant 0 : i32
    %c0_i32_0 = arith.constant 0 : i32
    %c0_i32_1 = arith.constant 0 : i32
    return %arg0, %c0_i32, %c0_i32_0 : i32, i32, i32
  }
  func.func @transform_1(%arg0: i32) -> (i32, i32) {
    %c0_i32 = arith.constant 0 : i32
    %c0_i32_0 = arith.constant 0 : i32
    %c0_i32_1 = arith.constant 0 : i32
    return %c0_i32, %c0_i32_0 : i32, i32
  }
  func.func @transform_2(%arg0: i32) -> (i32, i32) {
    %c0_i32 = arith.constant 0 : i32
    %c0_i32_0 = arith.constant 0 : i32
    %c0_i32_1 = arith.constant 0 : i32
    return %c0_i32, %c0_i32_0 : i32, i32
  }
  func.func @transform_3(%arg0: i32) -> (i32, i32) {
    %c0_i32 = arith.constant 0 : i32
    %c0_i32_0 = arith.constant 0 : i32
    %c0_i32_1 = arith.constant 0 : i32
    return %c0_i32, %c0_i32_0 : i32, i32
  }
  func.func @transform_4(%arg0: i32) -> (i32, i32) {
    %c0_i32 = arith.constant 0 : i32
    %c0_i32_0 = arith.constant 0 : i32
    %c0_i32_1 = arith.constant 0 : i32
    return %c0_i32, %c0_i32_0 : i32, i32
  }
  func.func @transform_5(%arg0: i32) -> (i32, i32, i32) {
    %c0_i32 = arith.constant 0 : i32
    %c0_i32_0 = arith.constant 0 : i32
    %c0_i32_1 = arith.constant 0 : i32
    %c0_i32_2 = arith.constant 0 : i32
    return %c0_i32, %c0_i32_0, %c0_i32_1 : i32, i32, i32
  }
  func.func @transform_6(%arg0: i32) -> (i32, i32) {
    %c0_i32 = arith.constant 0 : i32
    %c0_i32_0 = arith.constant 0 : i32
    %c0_i32_1 = arith.constant 0 : i32
    return %c0_i32, %c0_i32_0 : i32, i32
  }
  func.func @transform_7(%arg0: i32) -> (i32, i32) {
    %c0_i32 = arith.constant 0 : i32
    %c0_i32_0 = arith.constant 0 : i32
    %c0_i32_1 = arith.constant 0 : i32
    return %c0_i32, %c0_i32_0 : i32, i32
  }
  func.func @transform_8(%arg0: i32) -> (i32, i32) {
    %c0_i32 = arith.constant 0 : i32
    %c0_i32_0 = arith.constant 0 : i32
    %c0_i32_1 = arith.constant 0 : i32
    return %c0_i32, %c0_i32_0 : i32, i32
  }
  func.func @transform_9(%arg0: i32) -> (i32, i32, i32) {
    %c0_i32 = arith.constant 0 : i32
    %c0_i32_0 = arith.constant 0 : i32
    %c0_i32_1 = arith.constant 0 : i32
    %c0_i32_2 = arith.constant 0 : i32
    return %c0_i32, %c0_i32_0, %c0_i32_1 : i32, i32, i32
  }
  func.func @transform_10(%arg0: i32) -> (i32, i32) {
    %c0_i32 = arith.constant 0 : i32
    %c0_i32_0 = arith.constant 0 : i32
    %c0_i32_1 = arith.constant 0 : i32
    return %c0_i32, %c0_i32_0 : i32, i32
  }
  func.func @transform_11(%arg0: i32) -> (i32, i32) {
    %c0_i32 = arith.constant 0 : i32
    %c0_i32_0 = arith.constant 0 : i32
    %c0_i32_1 = arith.constant 0 : i32
    return %c0_i32, %c0_i32_0 : i32, i32
  }
  func.func @transform_12(%arg0: i32) -> (i32, i32, i32) {
    %c0_i32 = arith.constant 0 : i32
    %c0_i32_0 = arith.constant 0 : i32
    %c0_i32_1 = arith.constant 0 : i32
    %c0_i32_2 = arith.constant 0 : i32
    return %c0_i32, %c0_i32_0, %c0_i32_1 : i32, i32, i32
  }
  func.func @transform_13(%arg0: i32) -> (i32, i32, i32) {
    %c0_i32 = arith.constant 0 : i32
    %c0_i32_0 = arith.constant 0 : i32
    %c0_i32_1 = arith.constant 0 : i32
    %c0_i32_2 = arith.constant 0 : i32
    return %c0_i32, %c0_i32_0, %c0_i32_1 : i32, i32, i32
  }
  func.func @transform_14(%arg0: i32) -> (i32, i32, i32) {
    %c0_i32 = arith.constant 0 : i32
    %c0_i32_0 = arith.constant 0 : i32
    %c0_i32_1 = arith.constant 0 : i32
    return %arg0, %c0_i32, %c0_i32_0 : i32, i32, i32
  }
}

</mosaic_0001>

<llo_original>
// kernel: tpu_custom_call.1
$region0: #{tpu_custom_call.1}
  #allocation0 [shape = 'u32[]', space=smem, size = 0x4, offset = 0x4, fixed_abs, tag = 'smem constant byte address 0x4 - core index']
  #allocation1 [shape = 'u32[144,128]{1,0:T(1,128)}', space=vmem, size = 0x12000, scoped, tag = 'internal scratch']
  %s0 = inlined_call_operand.vmem [shape: f32[2,8,256], index: 0, kind: input, shape index: {}]
  %s1 = inlined_call_operand.vmem [shape: f32[9,256], index: 1, kind: input, shape index: {}]
  %s2 = inlined_call_operand.vmem [shape: f32[3,8], index: 2, kind: input, shape index: {}]
  %s3 = inlined_call_operand.vmem [shape: f32[4,3], index: 3, kind: input, shape index: {}]
  %s4 = inlined_call_operand.vmem [shape: f32[4,1], index: 4, kind: input, shape index: {}]
  %s5 = inlined_call_operand.vmem [shape: f32[4,72,8], index: 5, kind: input, shape index: {}]
  %s6 = inlined_call_operand.vmem [shape: f32[3,8], index: 6, kind: input, shape index: {}]
  %s7 = inlined_call_operand.vmem [shape: f32[4,3], index: 7, kind: input, shape index: {}]
  %s8 = inlined_call_operand.vmem [shape: f32[4,1], index: 8, kind: input, shape index: {}]
  %s9 = inlined_call_operand.vmem [shape: f32[4,72,8], index: 9, kind: input, shape index: {}]
  %s10 = inlined_call_operand.vmem [shape: f32[72,8], index: 10, kind: input, shape index: {}]
  %s11 = inlined_call_operand.vmem [shape: f32[72,8], index: 11, kind: input, shape index: {}]
  %s12 = inlined_call_operand.vmem [shape: f32[4,8,1], index: 12, kind: input, shape index: {}]
  %s13 = inlined_call_operand.vmem [shape: f32[4,8,1], index: 13, kind: input, shape index: {}]
  %s14 = inlined_call_operand.hbm [shape: f32[2,8,256], index: 14, kind: output, shape index: {}]
  %s15 = sld [smem:[#allocation0]]
  $region89: #{tpu_custom_call.1} parent=0
    _
  %s17 = ssub.s32 1, %s15
  %s18 = scalar_select 0, %s17, %s15
  $region1: #{tpu_custom_call.1} parent=0
    #allocation2 [shape = 'u8[16384]{0}', space=vmem, size = 0x4000, scoped, tag = 'output window, operand 0']
    #allocation3 [shape = 's32[2]{0}', space=sflag, size = 0x8, scoped, tag = 'scoped memory for tpu_custom_call.1']
    %19 = vsyncpa [#allocation3], 0
    %s20 = scalar_lea.sflag [#allocation3], 1
    %21 = vsyncpa %s20, 0
    loop: start=0, step=1, limit=4
    $region2: #{tpu_custom_call.1} parent=1 // loop_pre_header
      _
    $region3: #{tpu_custom_call.1} parent=1 // loop_header
      %s23 = sphi 0, %s27
      %p24 = scmp.ge.s32.totalorder %s23, 4
      %s33 = sphi 0, %s35
      %s36 = sphi 0, %s33
      %s37 = sphi 0, %s36
      %s53 = sphi 0, %s37
      %s57 = sphi 0, %s57
      %s59 = sphi 0, %s57
      %s60 = sphi 0, %s59
      %s74 = sphi 0, %s60
      %s78 = sphi 0, %s78
      %s80 = sphi 0, %s78
      %s81 = sphi 0, %s80
      %s95 = sphi 0, %s81
      %s99 = sphi 0, %s99
      %s101 = sphi 0, %s99
      %s102 = sphi 0, %s101
      %s116 = sphi 0, %s102
      %s120 = sphi 0, %s120
      %s122 = sphi 0, %s120
      %s123 = sphi 0, %s122
      %s137 = sphi 0, %s123
      %s141 = sphi 0, %s141
      %s143 = sphi 0, %s141
      %s144 = sphi 0, %s143
      %s158 = sphi 0, %s144
      %s162 = sphi 0, %s162
      %s164 = sphi 0, %s162
      %s165 = sphi 0, %s164
      %s179 = sphi 0, %s165
      %s183 = sphi 0, %s183
      %s185 = sphi 0, %s183
      %s186 = sphi 0, %s185
      %s200 = sphi 0, %s186
      %s204 = sphi 0, %s204
      %s206 = sphi 0, %s204
      %s207 = sphi 0, %s206
      %s221 = sphi 0, %s207
      %s225 = sphi 0, %s225
      %s227 = sphi 0, %s225
      %s228 = sphi 0, %s227
      %s242 = sphi 0, %s228
      %s246 = sphi 0, %s246
      %s248 = sphi 0, %s246
      %s249 = sphi 0, %s248
      %s263 = sphi 0, %s249
      %s267 = sphi 0, %s267
      %s269 = sphi 0, %s267
      %s270 = sphi 0, %s269
      %s284 = sphi 0, %s270
      %s288 = sphi 0, %s288
      %s290 = sphi 0, %s288
      %s291 = sphi 0, %s290
      %s305 = sphi 0, %s291
      %s309 = sphi 0, %s309
      %s311 = sphi 0, %s309
      %s312 = sphi 0, %s311
      %s326 = sphi 0, %s312
      %s332 = sphi 0, %s334
      %s335 = sphi 0, %s332
      %s336 = sphi 0, %s335
      %s352 = sphi 0, %s336
    $region4: #{tpu_custom_call.1} parent=1 // loop_header_branch
      %26 = sbr.rel (%p24) target = $region8
    $region5: #{tpu_custom_call.1} parent=1 // loop_body
      %s28 = ssub.s32 %s23, 1
      %s29 = ssub.s32 %s23, 2
      %s30 = sadd.s32 %s23, 1
      %s31 = ssub.s32 %s23, %s30
      %p32 = scmp.eq.s32.totalorder %s31, 0
      %s34 = sadd.s32 %s33, 1
      %s35 = scalar_select %p32, %s33, %s34
      %p38 = pneg %p32
      %p39 = scmp.eq.s32.totalorder %s23, 1
      %p40 = por %p38, %p39
      %p41 = scmp.ne.s32.totalorder %s33, %s36
      %p42 = scmp.eq.s32.totalorder %s23, 0
      %p43 = por %p41, %p42
      %p44 = scmp.ne.s32.totalorder %s33, %s36
      %p45 = scmp.eq.s32.totalorder %s28, 1
      %p46 = por %p44, %p45
      %p47 = scmp.ne.s32.totalorder %s36, %s37
      %p48 = scmp.eq.s32.totalorder %s28, 0
      %p49 = por %p47, %p48
      %p50 = scmp.ne.s32.totalorder %s36, %s37
      %p51 = scmp.eq.s32.totalorder %s29, 1
      %p52 = por %p50, %p51
      %p54 = scmp.ne.s32.totalorder %s37, %s53
      %p55 = scmp.eq.s32.totalorder %s29, 0
      %p56 = por %p54, %p55
      %s58 = sadd.s32 %s57, 1
      %p61 = scmp.eq.s32.totalorder %s23, 1
      %p62 = scmp.ne.s32.totalorder %s57, %s59
      %p63 = scmp.eq.s32.totalorder %s23, 0
      %p64 = por %p62, %p63
      %p65 = scmp.ne.s32.totalorder %s57, %s59
      %p66 = scmp.eq.s32.totalorder %s28, 1
      %p67 = por %p65, %p66
      %p68 = scmp.ne.s32.totalorder %s59, %s60
      %p69 = scmp.eq.s32.totalorder %s28, 0
      %p70 = por %p68, %p69
      %p71 = scmp.ne.s32.totalorder %s59, %s60
      %p72 = scmp.eq.s32.totalorder %s29, 1
      %p73 = por %p71, %p72
      %p75 = scmp.ne.s32.totalorder %s60, %s74
      %p76 = scmp.eq.s32.totalorder %s29, 0
      %p77 = por %p75, %p76
      %s79 = sadd.s32 %s78, 1
      %p82 = scmp.eq.s32.totalorder %s23, 1
      %p83 = scmp.ne.s32.totalorder %s78, %s80
      %p84 = scmp.eq.s32.totalorder %s23, 0
      %p85 = por %p83, %p84
      %p86 = scmp.ne.s32.totalorder %s78, %s80
      %p87 = scmp.eq.s32.totalorder %s28, 1
      %p88 = por %p86, %p87
      %p89 = scmp.ne.s32.totalorder %s80, %s81
      %p90 = scmp.eq.s32.totalorder %s28, 0
      %p91 = por %p89, %p90
      %p92 = scmp.ne.s32.totalorder %s80, %s81
      %p93 = scmp.eq.s32.totalorder %s29, 1
      %p94 = por %p92, %p93
      %p96 = scmp.ne.s32.totalorder %s81, %s95
      %p97 = scmp.eq.s32.totalorder %s29, 0
      %p98 = por %p96, %p97
      %s100 = sadd.s32 %s99, 1
      %p103 = scmp.eq.s32.totalorder %s23, 1
      %p104 = scmp.ne.s32.totalorder %s99, %s101
      %p105 = scmp.eq.s32.totalorder %s23, 0
      %p106 = por %p104, %p105
      %p107 = scmp.ne.s32.totalorder %s99, %s101
      %p108 = scmp.eq.s32.totalorder %s28, 1
      %p109 = por %p107, %p108
      %p110 = scmp.ne.s32.totalorder %s101, %s102
      %p111 = scmp.eq.s32.totalorder %s28, 0
      %p112 = por %p110, %p111
      %p113 = scmp.ne.s32.totalorder %s101, %s102
      %p114 = scmp.eq.s32.totalorder %s29, 1
      %p115 = por %p113, %p114
      %p117 = scmp.ne.s32.totalorder %s102, %s116
      %p118 = scmp.eq.s32.totalorder %s29, 0
      %p119 = por %p117, %p118
      %s121 = sadd.s32 %s120, 1
      %p124 = scmp.eq.s32.totalorder %s23, 1
      %p125 = scmp.ne.s32.totalorder %s120, %s122
      %p126 = scmp.eq.s32.totalorder %s23, 0
      %p127 = por %p125, %p126
      %p128 = scmp.ne.s32.totalorder %s120, %s122
      %p129 = scmp.eq.s32.totalorder %s28, 1
      %p130 = por %p128, %p129
      %p131 = scmp.ne.s32.totalorder %s122, %s123
      %p132 = scmp.eq.s32.totalorder %s28, 0
      %p133 = por %p131, %p132
      %p134 = scmp.ne.s32.totalorder %s122, %s123
      %p135 = scmp.eq.s32.totalorder %s29, 1
      %p136 = por %p134, %p135
      %p138 = scmp.ne.s32.totalorder %s123, %s137
      %p139 = scmp.eq.s32.totalorder %s29, 0
      %p140 = por %p138, %p139
      %s142 = sadd.s32 %s141, 1
      %p145 = scmp.eq.s32.totalorder %s23, 1
      %p146 = scmp.ne.s32.totalorder %s141, %s143
      %p147 = scmp.eq.s32.totalorder %s23, 0
      %p148 = por %p146, %p147
      %p149 = scmp.ne.s32.totalorder %s141, %s143
      %p150 = scmp.eq.s32.totalorder %s28, 1
      %p151 = por %p149, %p150
      %p152 = scmp.ne.s32.totalorder %s143, %s144
      %p153 = scmp.eq.s32.totalorder %s28, 0
      %p154 = por %p152, %p153
      %p155 = scmp.ne.s32.totalorder %s143, %s144
      %p156 = scmp.eq.s32.totalorder %s29, 1
      %p157 = por %p155, %p156
      %p159 = scmp.ne.s32.totalorder %s144, %s158
      %p160 = scmp.eq.s32.totalorder %s29, 0
      %p161 = por %p159, %p160
      %s163 = sadd.s32 %s162, 1
      %p166 = scmp.eq.s32.totalorder %s23, 1
      %p167 = scmp.ne.s32.totalorder %s162, %s164
      %p168 = scmp.eq.s32.totalorder %s23, 0
      %p169 = por %p167, %p168
      %p170 = scmp.ne.s32.totalorder %s162, %s164
      %p171 = scmp.eq.s32.totalorder %s28, 1
      %p172 = por %p170, %p171
      %p173 = scmp.ne.s32.totalorder %s164, %s165
      %p174 = scmp.eq.s32.totalorder %s28, 0
      %p175 = por %p173, %p174
      %p176 = scmp.ne.s32.totalorder %s164, %s165
      %p177 = scmp.eq.s32.totalorder %s29, 1
      %p178 = por %p176, %p177
      %p180 = scmp.ne.s32.totalorder %s165, %s179
      %p181 = scmp.eq.s32.totalorder %s29, 0
      %p182 = por %p180, %p181
      %s184 = sadd.s32 %s183, 1
      %p187 = scmp.eq.s32.totalorder %s23, 1
      %p188 = scmp.ne.s32.totalorder %s183, %s185
      %p189 = scmp.eq.s32.totalorder %s23, 0
      %p190 = por %p188, %p189
      %p191 = scmp.ne.s32.totalorder %s183, %s185
      %p192 = scmp.eq.s32.totalorder %s28, 1
      %p193 = por %p191, %p192
      %p194 = scmp.ne.s32.totalorder %s185, %s186
      %p195 = scmp.eq.s32.totalorder %s28, 0
      %p196 = por %p194, %p195
      %p197 = scmp.ne.s32.totalorder %s185, %s186
      %p198 = scmp.eq.s32.totalorder %s29, 1
      %p199 = por %p197, %p198
      %p201 = scmp.ne.s32.totalorder %s186, %s200
      %p202 = scmp.eq.s32.totalorder %s29, 0
      %p203 = por %p201, %p202
      %s205 = sadd.s32 %s204, 1
      %p208 = scmp.eq.s32.totalorder %s23, 1
      %p209 = scmp.ne.s32.totalorder %s204, %s206
      %p210 = scmp.eq.s32.totalorder %s23, 0
      %p211 = por %p209, %p210
      %p212 = scmp.ne.s32.totalorder %s204, %s206
      %p213 = scmp.eq.s32.totalorder %s28, 1
      %p214 = por %p212, %p213
      %p215 = scmp.ne.s32.totalorder %s206, %s207
      %p216 = scmp.eq.s32.totalorder %s28, 0
      %p217 = por %p215, %p216
      %p218 = scmp.ne.s32.totalorder %s206, %s207
      %p219 = scmp.eq.s32.totalorder %s29, 1
      %p220 = por %p218, %p219
      %p222 = scmp.ne.s32.totalorder %s207, %s221
      %p223 = scmp.eq.s32.totalorder %s29, 0
      %p224 = por %p222, %p223
      %s226 = sadd.s32 %s225, 1
      %p229 = scmp.eq.s32.totalorder %s23, 1
      %p230 = scmp.ne.s32.totalorder %s225, %s227
      %p231 = scmp.eq.s32.totalorder %s23, 0
      %p232 = por %p230, %p231
      %p233 = scmp.ne.s32.totalorder %s225, %s227
      %p234 = scmp.eq.s32.totalorder %s28, 1
      %p235 = por %p233, %p234
      %p236 = scmp.ne.s32.totalorder %s227, %s228
      %p237 = scmp.eq.s32.totalorder %s28, 0
      %p238 = por %p236, %p237
      %p239 = scmp.ne.s32.totalorder %s227, %s228
      %p240 = scmp.eq.s32.totalorder %s29, 1
      %p241 = por %p239, %p240
      %p243 = scmp.ne.s32.totalorder %s228, %s242
      %p244 = scmp.eq.s32.totalorder %s29, 0
      %p245 = por %p243, %p244
      %s247 = sadd.s32 %s246, 1
      %p250 = scmp.eq.s32.totalorder %s23, 1
      %p251 = scmp.ne.s32.totalorder %s246, %s248
      %p252 = scmp.eq.s32.totalorder %s23, 0
      %p253 = por %p251, %p252
      %p254 = scmp.ne.s32.totalorder %s246, %s248
      %p255 = scmp.eq.s32.totalorder %s28, 1
      %p256 = por %p254, %p255
      %p257 = scmp.ne.s32.totalorder %s248, %s249
      %p258 = scmp.eq.s32.totalorder %s28, 0
      %p259 = por %p257, %p258
      %p260 = scmp.ne.s32.totalorder %s248, %s249
      %p261 = scmp.eq.s32.totalorder %s29, 1
      %p262 = por %p260, %p261
      %p264 = scmp.ne.s32.totalorder %s249, %s263
      %p265 = scmp.eq.s32.totalorder %s29, 0
      %p266 = por %p264, %p265
      %s268 = sadd.s32 %s267, 1
      %p271 = scmp.eq.s32.totalorder %s23, 1
      %p272 = scmp.ne.s32.totalorder %s267, %s269
      %p273 = scmp.eq.s32.totalorder %s23, 0
      %p274 = por %p272, %p273
      %p275 = scmp.ne.s32.totalorder %s267, %s269
      %p276 = scmp.eq.s32.totalorder %s28, 1
      %p277 = por %p275, %p276
      %p278 = scmp.ne.s32.totalorder %s269, %s270
      %p279 = scmp.eq.s32.totalorder %s28, 0
      %p280 = por %p278, %p279
      %p281 = scmp.ne.s32.totalorder %s269, %s270
      %p282 = scmp.eq.s32.totalorder %s29, 1
      %p283 = por %p281, %p282
      %p285 = scmp.ne.s32.totalorder %s270, %s284
      %p286 = scmp.eq.s32.totalorder %s29, 0
      %p287 = por %p285, %p286
      %s289 = sadd.s32 %s288, 1
      %p292 = scmp.eq.s32.totalorder %s23, 1
      %p293 = scmp.ne.s32.totalorder %s288, %s290
      %p294 = scmp.eq.s32.totalorder %s23, 0
      %p295 = por %p293, %p294
      %p296 = scmp.ne.s32.totalorder %s288, %s290
      %p297 = scmp.eq.s32.totalorder %s28, 1
      %p298 = por %p296, %p297
      %p299 = scmp.ne.s32.totalorder %s290, %s291
      %p300 = scmp.eq.s32.totalorder %s28, 0
      %p301 = por %p299, %p300
      %p302 = scmp.ne.s32.totalorder %s290, %s291
      %p303 = scmp.eq.s32.totalorder %s29, 1
      %p304 = por %p302, %p303
      %p306 = scmp.ne.s32.totalorder %s291, %s305
      %p307 = scmp.eq.s32.totalorder %s29, 0
      %p308 = por %p306, %p307
      %s310 = sadd.s32 %s309, 1
      %p313 = scmp.eq.s32.totalorder %s23, 1
      %p314 = scmp.ne.s32.totalorder %s309, %s311
      %p315 = scmp.eq.s32.totalorder %s23, 0
      %p316 = por %p314, %p315
      %p317 = scmp.ne.s32.totalorder %s309, %s311
      %p318 = scmp.eq.s32.totalorder %s28, 1
      %p319 = por %p317, %p318
      %p320 = scmp.ne.s32.totalorder %s311, %s312
      %p321 = scmp.eq.s32.totalorder %s28, 0
      %p322 = por %p320, %p321
      %p323 = scmp.ne.s32.totalorder %s311, %s312
      %p324 = scmp.eq.s32.totalorder %s29, 1
      %p325 = por %p323, %p324
      %p327 = scmp.ne.s32.totalorder %s312, %s326
      %p328 = scmp.eq.s32.totalorder %s29, 0
      %p329 = por %p327, %p328
      %s330 = ssub.s32 %s23, %s30
      %p331 = scmp.eq.s32.totalorder %s330, 0
      %s333 = sadd.s32 %s332, 1
      %s334 = scalar_select %p331, %s332, %s333
      %p337 = pneg %p331
      %p338 = scmp.eq.s32.totalorder %s23, 1
      %p339 = por %p337, %p338
      %p340 = scmp.ne.s32.totalorder %s332, %s335
      %p341 = scmp.eq.s32.totalorder %s23, 0
      %p342 = por %p340, %p341
      %p343 = scmp.ne.s32.totalorder %s332, %s335
      %p344 = scmp.eq.s32.totalorder %s28, 1
      %p345 = por %p343, %p344
      %p346 = scmp.ne.s32.totalorder %s335, %s336
      %p347 = scmp.eq.s32.totalorder %s28, 0
      %p348 = por %p346, %p347
      %p349 = scmp.ne.s32.totalorder %s335, %s336
      %p350 = scmp.eq.s32.totalorder %s29, 1
      %p351 = por %p349, %p350
      %p353 = scmp.ne.s32.totalorder %s336, %s352
      %p354 = scmp.eq.s32.totalorder %s29, 0
      %p355 = por %p353, %p354
      %p356 = scmp.le.s32.totalorder 1, %s23
      %p357 = scmp.lt.s32.totalorder %s23, 3
      %p358 = pnand %p356, %p357
      %p359 = pneg %p358
      // Predicated region
      $region9: #{tpu_custom_call.1} parent=5 // pred_check
        _
      $region10: #{tpu_custom_call.1} parent=5 // pred_check_branch
        %361 = sbr.rel (%p358) target = $region12
      $region11: #{tpu_custom_call.1} parent=5 // pred_region
        %s362 = ssub.s32 %s23, 1
        // Predicated region
        $region13: #{tpu_custom_call.1} parent=11 // pred_check
          %p363 = pneg %p70
        $region14: #{tpu_custom_call.1} parent=11 // pred_check_branch
          %365 = sbr.rel (%p363) target = $region16
        $region15: #{tpu_custom_call.1} parent=11 // pred_region
          _
        $region16: #{tpu_custom_call.1} parent=11 // pred_fallthru
          _
        // Predicated region
        $region17: #{tpu_custom_call.1} parent=11 // pred_check
          %p366 = pneg %p91
        $region18: #{tpu_custom_call.1} parent=11 // pred_check_branch
          %368 = sbr.rel (%p366) target = $region20
        $region19: #{tpu_custom_call.1} parent=11 // pred_region
          _
        $region20: #{tpu_custom_call.1} parent=11 // pred_fallthru
          _
        // Predicated region
        $region21: #{tpu_custom_call.1} parent=11 // pred_check
          %p369 = pneg %p112
        $region22: #{tpu_custom_call.1} parent=11 // pred_check_branch
          %371 = sbr.rel (%p369) target = $region24
        $region23: #{tpu_custom_call.1} parent=11 // pred_region
          _
        $region24: #{tpu_custom_call.1} parent=11 // pred_fallthru
          _
        // Predicated region
        $region25: #{tpu_custom_call.1} parent=11 // pred_check
          %p372 = pneg %p133
        $region26: #{tpu_custom_call.1} parent=11 // pred_check_branch
          %374 = sbr.rel (%p372) target = $region28
        $region27: #{tpu_custom_call.1} parent=11 // pred_region
          _
        $region28: #{tpu_custom_call.1} parent=11 // pred_fallthru
          _
        // Predicated region
        $region29: #{tpu_custom_call.1} parent=11 // pred_check
          %p375 = pneg %p154
        $region30: #{tpu_custom_call.1} parent=11 // pred_check_branch
          %377 = sbr.rel (%p375) target = $region32
        $region31: #{tpu_custom_call.1} parent=11 // pred_region
          _
        $region32: #{tpu_custom_call.1} parent=11 // pred_fallthru
          _
        // Predicated region
        $region33: #{tpu_custom_call.1} parent=11 // pred_check
          %p378 = pneg %p175
        $region34: #{tpu_custom_call.1} parent=11 // pred_check_branch
          %380 = sbr.rel (%p378) target = $region36
        $region35: #{tpu_custom_call.1} parent=11 // pred_region
          _
        $region36: #{tpu_custom_call.1} parent=11 // pred_fallthru
          _
        // Predicated region
        $region37: #{tpu_custom_call.1} parent=11 // pred_check
          %p381 = pneg %p196
        $region38: #{tpu_custom_call.1} parent=11 // pred_check_branch
          %383 = sbr.rel (%p381) target = $region40
        $region39: #{tpu_custom_call.1} parent=11 // pred_region
          _
        $region40: #{tpu_custom_call.1} parent=11 // pred_fallthru
          _
        // Predicated region
        $region41: #{tpu_custom_call.1} parent=11 // pred_check
          %p384 = pneg %p217
        $region42: #{tpu_custom_call.1} parent=11 // pred_check_branch
          %386 = sbr.rel (%p384) target = $region44
        $region43: #{tpu_custom_call.1} parent=11 // pred_region
          _
        $region44: #{tpu_custom_call.1} parent=11 // pred_fallthru
          _
        // Predicated region
        $region45: #{tpu_custom_call.1} parent=11 // pred_check
          %p387 = pneg %p238
        $region46: #{tpu_custom_call.1} parent=11 // pred_check_branch
          %389 = sbr.rel (%p387) target = $region48
        $region47: #{tpu_custom_call.1} parent=11 // pred_region
          _
        $region48: #{tpu_custom_call.1} parent=11 // pred_fallthru
          _
        // Predicated region
        $region49: #{tpu_custom_call.1} parent=11 // pred_check
          %p390 = pneg %p259
        $region50: #{tpu_custom_call.1} parent=11 // pred_check_branch
          %392 = sbr.rel (%p390) target = $region52
        $region51: #{tpu_custom_call.1} parent=11 // pred_region
          _
        $region52: #{tpu_custom_call.1} parent=11 // pred_fallthru
          _
        // Predicated region
        $region53: #{tpu_custom_call.1} parent=11 // pred_check
          %p393 = pneg %p280
        $region54: #{tpu_custom_call.1} parent=11 // pred_check_branch
          %395 = sbr.rel (%p393) target = $region56
        $region55: #{tpu_custom_call.1} parent=11 // pred_region
          _
        $region56: #{tpu_custom_call.1} parent=11 // pred_fallthru
          _
        // Predicated region
        $region57: #{tpu_custom_call.1} parent=11 // pred_check
          %p396 = pneg %p301
        $region58: #{tpu_custom_call.1} parent=11 // pred_check_branch
          %398 = sbr.rel (%p396) target = $region60
        $region59: #{tpu_custom_call.1} parent=11 // pred_region
          _
        $region60: #{tpu_custom_call.1} parent=11 // pred_fallthru
          _
        // Predicated region
        $region61: #{tpu_custom_call.1} parent=11 // pred_check
          %p399 = pneg %p322
        $region62: #{tpu_custom_call.1} parent=11 // pred_check_branch
          %401 = sbr.rel (%p399) target = $region64
        $region63: #{tpu_custom_call.1} parent=11 // pred_region
          _
        $region64: #{tpu_custom_call.1} parent=11 // pred_fallthru
          _
      $region12: #{tpu_custom_call.1} parent=5 // pred_fallthru
        _
      %p402 = scmp.lt.s32.totalorder %s23, 2
      // Predicated region
      $region65: #{tpu_custom_call.1} parent=5 // pred_check
        %p403 = pneg %p402
      $region66: #{tpu_custom_call.1} parent=5 // pred_check_branch
        %405 = sbr.rel (%p403) target = $region68
      $region67: #{tpu_custom_call.1} parent=5 // pred_region
        // Predicated region
        $region69: #{tpu_custom_call.1} parent=67 // pred_check
          %p406 = pneg %p43
        $region70: #{tpu_custom_call.1} parent=67 // pred_check_branch
          %408 = sbr.rel (%p406) target = $region72
        $region71: #{tpu_custom_call.1} parent=67 // pred_region
          %p409 = scmp.lt.s32.totalorder %s23, 1
          %s410 = scalar_select %p409, %s23, 1
          %s411 = smul.addr %s410, 2
          %s412 = smul.addr %s411, 8
          %s413 = scalar_lea.vmem %s0, %s412
        $region72: #{tpu_custom_call.1} parent=67 // pred_fallthru
          _
      $region68: #{tpu_custom_call.1} parent=5 // pred_fallthru
        _
      %p414 = scmp.le.s32.totalorder 1, %s23
      %p415 = scmp.lt.s32.totalorder %s23, 3
      %p416 = pnand %p414, %p415
      %p417 = pneg %p416
      // Predicated region
      $region73: #{tpu_custom_call.1} parent=5 // pred_check
        _
      $region74: #{tpu_custom_call.1} parent=5 // pred_check_branch
        %419 = sbr.rel (%p416) target = $region76
      $region75: #{tpu_custom_call.1} parent=5 // pred_region
        %s420 = ssub.s32 %s23, 1
        %p421 = scmp.lt.s32.totalorder %s28, 1
        %s422 = scalar_select %p421, %s28, 1
        %s423 = smul.addr %s422, 2
        %s424 = smul.addr %s423, 8
        %s425 = scalar_lea.vmem %s0, %s424
        %p426 = pneg %p49
        %p427 = pneg %p46
        %p428 = pneg %p70
        %p429 = pneg %p67
        %p430 = pneg %p91
        %p431 = pneg %p88
        %p432 = pneg %p112
        %p433 = pneg %p109
        %p434 = pneg %p133
        %p435 = pneg %p130
        %p436 = pneg %p154
        %p437 = pneg %p151
        %p438 = pneg %p175
        %p439 = pneg %p172
        %p440 = pneg %p196
        %p441 = pneg %p193
        %p442 = pneg %p217
        %p443 = pneg %p214
        %p444 = pneg %p238
        %p445 = pneg %p235
        %p446 = pneg %p259
        %p447 = pneg %p256
        %p448 = pneg %p280
        %p449 = pneg %p277
        %p450 = pneg %p301
        %p451 = pneg %p298
        %p452 = pneg %p322
        %p453 = pneg %p319
        %p454 = pneg %p348
        %p455 = pneg %p345
        %s456 = sand.u32 %s335, 1
        %s457 = scalar_lea.sflag [#allocation3], %s456
        %s458 = sand.u32 %s335, 1
        %s459 = smul.addr %s458, 16
        %s460 = scalar_lea.vmem [#allocation2], %s459
        %p461 = scmp.lt.s32.totalorder %s28, 1
        %s462 = scalar_select %p461, %s28, 1
        %s463 = smul.addr %s462, 2
        %s464 = smul.addr %s463, 8
        %s465 = scalar_lea.vmem %s0, %s464
        %v466 = vld [vmem:[%s465] sm:$0xff]
        %v467 = vld [vmem:[%s465 + $0x8] sm:$0xff]
        %v468 = vld [vmem:[%s1] sm:$0xff]
        %v469 = vld [vmem:[%s1 + $0x8] sm:$0xff]
        %v470 = vld [vmem:[%s1 + $0x10] sm:$0x1]
        %v471 = vld [vmem:[%s1 + $0x18] sm:$0x1]
        %v472 = vadd.f32 %v466, %v467
        %473 = vadd.xlane.f32.xlu0 %v472
        %v474 = vpop.xlane.xlu0 %473
        %v475 = vrcp.pop 256.0
        %v476 = vmul.f32 %v474, %v475
        %v477 = vld [vmem:[%s2] sm:$0x7]
        %vm478 = vcmask 64512
        %v480 = vsel %vm478, %v477, 0
        %482 = vmatprep.subr.mxu0 0.0
        %483 = vmatpush1.msra.mxu0 0.0
        %484 = vmatprep.subr.mxu0 0.0
        %485 = vmatpush1.msra.mxu0 0.0
        %486 = vmatprep.subr.mxu0 0.0
        %487 = vmatpush1.msra.mxu0 0.0
        %488 = vmatprep.subr.mxu0 0.0
        %489 = vmatpush1.msra.mxu0 0.0
        %490 = vmatprep.subr.mxu0 0.0
        %491 = vmatpush1.msra.mxu0 0.0
        %492 = vmatprep.subr.mxu0 0.0
        %493 = vmatpush1.msra.mxu0 0.0
        %494 = vmatprep.subr.mxu0 0.0
        %495 = vmatpush1.msra.mxu0 0.0
        %496 = vmatprep.subr.mxu0 0.0
        %497 = vmatpush1.msra.mxu0 0.0
        %498 = vmatprep.subr.mxu0 0.0
        %499 = vmatpush1.msra.mxu0 0.0
        %500 = vmatprep.subr.mxu0 0.0
        %501 = vmatpush1.msra.mxu0 0.0
        %502 = vmatprep.subr.mxu0 0.0
        %503 = vmatpush1.msra.mxu0 0.0
        %504 = vmatprep.subr.mxu0 0.0
        %505 = vmatpush1.msra.mxu0 0.0
        %506 = vmatprep.subr.mxu0 0.0
        %507 = vmatpush1.msra.mxu0 0.0
        %508 = vmatprep.subr.mxu0 0.0
        %509 = vmatpush1.msra.mxu0 0.0
        %510 = vmatprep.subr.mxu0 0.0
        %511 = vmatpush1.msra.mxu0 0.0
        %512 = vmatprep.subr.mxu0 0.0
        %513 = vmatpush1.msra.mxu0 %v476
        %514 = vmatprep.subr.mxu0 0.0
        %515 = vmatpush2.msra.mxu0 0.0
        %516 = vmatprep.subr.mxu0 0.0
        %517 = vmatpush2.msra.mxu0 0.0
        %518 = vmatprep.subr.mxu0 0.0
        %519 = vmatpush2.msra.mxu0 0.0
        %520 = vmatprep.subr.mxu0 0.0
        %521 = vmatpush2.msra.mxu0 0.0
        %522 = vmatprep.subr.mxu0 0.0
        %523 = vmatpush2.msra.mxu0 0.0
        %524 = vmatprep.subr.mxu0 0.0
        %525 = vmatpush2.msra.mxu0 0.0
        %526 = vmatprep.subr.mxu0 0.0
        %527 = vmatpush2.msra.mxu0 0.0
        %528 = vmatprep.subr.mxu0 0.0
        %529 = vmatpush2.msra.mxu0 0.0
        %530 = vmatprep.subr.mxu0 0.0
        %531 = vmatpush2.msra.mxu0 0.0
        %532 = vmatprep.subr.mxu0 0.0
        %533 = vmatpush2.msra.mxu0 0.0
        %534 = vmatprep.subr.mxu0 0.0
        %535 = vmatpush2.msra.mxu0 0.0
        %536 = vmatprep.subr.mxu0 0.0
        %537 = vmatpush2.msra.mxu0 0.0
        %538 = vmatprep.subr.mxu0 0.0
        %539 = vmatpush2.msra.mxu0 0.0
        %540 = vmatprep.subr.mxu0 0.0
        %541 = vmatpush2.msra.mxu0 0.0
        %542 = vmatprep.subr.mxu0 0.0
        %543 = vmatpush2.msra.mxu0 0.0
        %544 = vmatprep.subr.mxu0 0.0
        %545 = vmatpush2.msra.mxu0 0.0
        %546 = vmatprep.mubr.f32.mxu0 0.0
        %547 = vmatmul.mubr.f32.gmra.mxu0 %v480
        %v548 = vpop.f32.mrf.mxu0
        %v549 = vadd.f32 0.0, %v548
        %v550 = vpop.f32.mrf.mxu0
        %551 = vdwg.mxu0
        %v552 = vmax.f32 %v549, 0.0
        %v553 = vld [vmem:[%s3] sm:$0xf]
        %v554 = vld [vmem:[%s4] sm:$0xf]
        %vm555 = vcmask 23552
        %v557 = vsel %vm555, %v553, 0
        %vm559 = vcmask 1042432
        %v561 = vsel %vm559, %v552, 0
        %563 = vmatprep.subr.mxu0 0.0
        %564 = vmatpush1.msra.mxu0 0.0
        %565 = vmatprep.subr.mxu0 0.0
        %566 = vmatpush1.msra.mxu0 0.0
        %567 = vmatprep.subr.mxu0 0.0
        %568 = vmatpush1.msra.mxu0 0.0
        %569 = vmatprep.subr.mxu0 0.0
        %570 = vmatpush1.msra.mxu0 0.0
        %571 = vmatprep.subr.mxu0 0.0
        %572 = vmatpush1.msra.mxu0 0.0
        %573 = vmatprep.subr.mxu0 0.0
        %574 = vmatpush1.msra.mxu0 0.0
        %575 = vmatprep.subr.mxu0 0.0
        %576 = vmatpush1.msra.mxu0 0.0
        %577 = vmatprep.subr.mxu0 0.0
        %578 = vmatpush1.msra.mxu0 0.0
        %579 = vmatprep.subr.mxu0 0.0
        %580 = vmatpush1.msra.mxu0 0.0
        %581 = vmatprep.subr.mxu0 0.0
        %582 = vmatpush1.msra.mxu0 0.0
        %583 = vmatprep.subr.mxu0 0.0
        %584 = vmatpush1.msra.mxu0 0.0
        %585 = vmatprep.subr.mxu0 0.0
        %586 = vmatpush1.msra.mxu0 0.0
        %587 = vmatprep.subr.mxu0 0.0
        %588 = vmatpush1.msra.mxu0 0.0
        %589 = vmatprep.subr.mxu0 0.0
        %590 = vmatpush1.msra.mxu0 0.0
        %591 = vmatprep.subr.mxu0 0.0
        %592 = vmatpush1.msra.mxu0 0.0
        %593 = vmatprep.subr.mxu0 0.0
        %594 = vmatpush1.msra.mxu0 %v561
        %595 = vmatprep.subr.mxu0 0.0
        %596 = vmatpush2.msra.mxu0 0.0
        %597 = vmatprep.subr.mxu0 0.0
        %598 = vmatpush2.msra.mxu0 0.0
        %599 = vmatprep.subr.mxu0 0.0
        %600 = vmatpush2.msra.mxu0 0.0
        %601 = vmatprep.subr.mxu0 0.0
        %602 = vmatpush2.msra.mxu0 0.0
        %603 = vmatprep.subr.mxu0 0.0
        %604 = vmatpush2.msra.mxu0 0.0
        %605 = vmatprep.subr.mxu0 0.0
        %606 = vmatpush2.msra.mxu0 0.0
        %607 = vmatprep.subr.mxu0 0.0
        %608 = vmatpush2.msra.mxu0 0.0
        %609 = vmatprep.subr.mxu0 0.0
        %610 = vmatpush2.msra.mxu0 0.0
        %611 = vmatprep.subr.mxu0 0.0
        %612 = vmatpush2.msra.mxu0 0.0
        %613 = vmatprep.subr.mxu0 0.0
        %614 = vmatpush2.msra.mxu0 0.0
        %615 = vmatprep.subr.mxu0 0.0
        %616 = vmatpush2.msra.mxu0 0.0
        %617 = vmatprep.subr.mxu0 0.0
        %618 = vmatpush2.msra.mxu0 0.0
        %619 = vmatprep.subr.mxu0 0.0
        %620 = vmatpush2.msra.mxu0 0.0
        %621 = vmatprep.subr.mxu0 0.0
        %622 = vmatpush2.msra.mxu0 0.0
        %623 = vmatprep.subr.mxu0 0.0
        %624 = vmatpush2.msra.mxu0 0.0
        %625 = vmatprep.subr.mxu0 0.0
        %626 = vmatpush2.msra.mxu0 0.0
        %627 = vmatprep.mubr.f32.mxu0 0.0
        %628 = vmatmul.mubr.f32.gmra.mxu0 %v557
        %v629 = vpop.f32.mrf.mxu0
        %v630 = vadd.f32 %v554, %v629
        %v631 = vpop.f32.mrf.mxu0
        %632 = vdwg.mxu0
        %v633 = vrcp.pop 34.0
        %v634 = vmul.f32 %v630, %v633
        %v636 = vrot.slane %v634, 1
        %v638 = vmax.f32 %v634, %v636
        %v639 = vrot.slane %v634, 2
        %v641 = vmax.f32 %v638, %v639
        %v642 = vrot.slane %v634, 3
        %v644 = vmax.f32 %v641, %v642
        %v645 = vlaneseq
        %v646 = vshrl.u32 %v645, 7
        %v647 = vsub.s32 0, %v646
        %v648 = vrot.slane %v644, %v647
        %v649 = vsub.f32 %v634, %v648
        %v650 = vmul.f32 %v649, 1.442695
        %v651 = vpow.pop %v650
        %v653 = vrot.slane %v651, 1
        %v655 = vadd.f32 %v651, %v653
        %v656 = vrot.slane %v651, 2
        %v658 = vadd.f32 %v655, %v656
        %v659 = vrot.slane %v651, 3
        %v661 = vadd.f32 %v658, %v659
        %v662 = vlaneseq
        %v663 = vshrl.u32 %v662, 7
        %v664 = vsub.s32 0, %v663
        %v665 = vrot.slane %v661, %v664
        %v666 = vrcp.pop %v665
        %v667 = vmul.f32 %v651, %v666
        %v668 = vld [vmem:[%s5] sm:$0xff]
        %v669 = vld [vmem:[%s5 + $0x8] sm:$0xff]
        %v670 = vld [vmem:[%s5 + $0x10] sm:$0xff]
        %v671 = vld [vmem:[%s5 + $0x18] sm:$0xff]
        %v672 = vld [vmem:[%s5 + $0x20] sm:$0xff]
        %v673 = vld [vmem:[%s5 + $0x28] sm:$0xff]
        %v674 = vld [vmem:[%s5 + $0x30] sm:$0xff]
        %v675 = vld [vmem:[%s5 + $0x38] sm:$0xff]
        %v676 = vld [vmem:[%s5 + $0x40] sm:$0xff]
        %s678 = vtos %v667
        %v679 = vstv %s678
        %v681 = vmul.f32 %v679, %v668
        %v682 = vmul.f32 %v679, %v669
        %v683 = vmul.f32 %v679, %v670
        %v684 = vmul.f32 %v679, %v671
        %v685 = vmul.f32 %v679, %v672
        %v686 = vmul.f32 %v679, %v673
        %v687 = vmul.f32 %v679, %v674
        %v688 = vmul.f32 %v679, %v675
        %v689 = vmul.f32 %v679, %v676
        %s690 = scalar_lea.vmem %s5, 72
        %v691 = vld [vmem:[%s690] sm:$0xff]
        %v692 = vld [vmem:[%s690 + $0x8] sm:$0xff]
        %v693 = vld [vmem:[%s690 + $0x10] sm:$0xff]
        %v694 = vld [vmem:[%s690 + $0x18] sm:$0xff]
        %v695 = vld [vmem:[%s690 + $0x20] sm:$0xff]
        %v696 = vld [vmem:[%s690 + $0x28] sm:$0xff]
        %v697 = vld [vmem:[%s690 + $0x30] sm:$0xff]
        %v698 = vld [vmem:[%s690 + $0x38] sm:$0xff]
        %v699 = vld [vmem:[%s690 + $0x40] sm:$0xff]
        %v700 = vrot.slane %v667, 1
        %s701 = vtos %v700
        %v702 = vstv %s701
        %v704 = vmul.f32 %v702, %v691
        %v705 = vmul.f32 %v702, %v692
        %v706 = vmul.f32 %v702, %v693
        %v707 = vmul.f32 %v702, %v694
        %v708 = vmul.f32 %v702, %v695
        %v709 = vmul.f32 %v702, %v696
        %v710 = vmul.f32 %v702, %v697
        %v711 = vmul.f32 %v702, %v698
        %v712 = vmul.f32 %v702, %v699
        %v713 = vadd.f32 %v681, %v704
        %v714 = vadd.f32 %v682, %v705
        %v715 = vadd.f32 %v683, %v706
        %v716 = vadd.f32 %v684, %v707
        %v717 = vadd.f32 %v685, %v708
        %v718 = vadd.f32 %v686, %v709
        %v719 = vadd.f32 %v687, %v710
        %v720 = vadd.f32 %v688, %v711
        %v721 = vadd.f32 %v689, %v712
        %s722 = scalar_lea.vmem %s5, 144
        %v723 = vld [vmem:[%s722] sm:$0xff]
        %v724 = vld [vmem:[%s722 + $0x8] sm:$0xff]
        %v725 = vld [vmem:[%s722 + $0x10] sm:$0xff]
        %v726 = vld [vmem:[%s722 + $0x18] sm:$0xff]
        %v727 = vld [vmem:[%s722 + $0x20] sm:$0xff]
        %v728 = vld [vmem:[%s722 + $0x28] sm:$0xff]
        %v729 = vld [vmem:[%s722 + $0x30] sm:$0xff]
        %v730 = vld [vmem:[%s722 + $0x38] sm:$0xff]
        %v731 = vld [vmem:[%s722 + $0x40] sm:$0xff]
        %v732 = vrot.slane %v667, 2
        %s733 = vtos %v732
        %v734 = vstv %s733
        %v736 = vmul.f32 %v734, %v723
        %v737 = vmul.f32 %v734, %v724
        %v738 = vmul.f32 %v734, %v725
        %v739 = vmul.f32 %v734, %v726
        %v740 = vmul.f32 %v734, %v727
        %v741 = vmul.f32 %v734, %v728
        %v742 = vmul.f32 %v734, %v729
        %v743 = vmul.f32 %v734, %v730
        %v744 = vmul.f32 %v734, %v731
        %v745 = vadd.f32 %v713, %v736
        %v746 = vadd.f32 %v714, %v737
        %v747 = vadd.f32 %v715, %v738
        %v748 = vadd.f32 %v716, %v739
        %v749 = vadd.f32 %v717, %v740
        %v750 = vadd.f32 %v718, %v741
        %v751 = vadd.f32 %v719, %v742
        %v752 = vadd.f32 %v720, %v743
        %v753 = vadd.f32 %v721, %v744
        %s754 = scalar_lea.vmem %s5, 216
        %v755 = vld [vmem:[%s754] sm:$0xff]
        %v756 = vld [vmem:[%s754 + $0x8] sm:$0xff]
        %v757 = vld [vmem:[%s754 + $0x10] sm:$0xff]
        %v758 = vld [vmem:[%s754 + $0x18] sm:$0xff]
        %v759 = vld [vmem:[%s754 + $0x20] sm:$0xff]
        %v760 = vld [vmem:[%s754 + $0x28] sm:$0xff]
        %v761 = vld [vmem:[%s754 + $0x30] sm:$0xff]
        %v762 = vld [vmem:[%s754 + $0x38] sm:$0xff]
        %v763 = vld [vmem:[%s754 + $0x40] sm:$0xff]
        %v764 = vrot.slane %v667, 3
        %s765 = vtos %v764
        %v766 = vstv %s765
        %v768 = vmul.f32 %v766, %v755
        %v769 = vmul.f32 %v766, %v756
        %v770 = vmul.f32 %v766, %v757
        %v771 = vmul.f32 %v766, %v758
        %v772 = vmul.f32 %v766, %v759
        %v773 = vmul.f32 %v766, %v760
        %v774 = vmul.f32 %v766, %v761
        %v775 = vmul.f32 %v766, %v762
        %v776 = vmul.f32 %v766, %v763
        %v777 = vadd.f32 %v745, %v768
        %v778 = vadd.f32 %v746, %v769
        %v779 = vadd.f32 %v747, %v770
        %v780 = vadd.f32 %v748, %v771
        %v781 = vadd.f32 %v749, %v772
        %v782 = vadd.f32 %v750, %v773
        %v783 = vadd.f32 %v751, %v774
        %v784 = vadd.f32 %v752, %v775
        %v785 = vadd.f32 %v753, %v776
        %787 = vrot.lane.b32.xlu0 %v467, 17
        %v788 = vpop.permute.xlu0 %787
        %791 = vrot.lane.b32.xlu0 %v466, 17
        %v792 = vpop.permute.xlu0 %791
        %vm793 = vcmask 138240
        %v794 = vsel %vm793, %v792, %v788
        %v797 = vsel %vm793, %v788, %v792
        %v798 = vlaneseq
        %v799 = vshrl.u32 %v798, 7
        %v800 = vsub.s32 0, %v799
        %v801 = vrot.slane %v468, %v800
        %v802 = vlaneseq
        %v803 = vshrl.u32 %v802, 7
        %v804 = vsub.s32 0, %v803
        %v805 = vrot.slane %v469, %v804
        %v806 = vmul.f32 %v797, %v801
        %v807 = vmul.f32 %v794, %v805
        %808 = vrot.lane.b32.xlu0 %v467, 16
        %v809 = vpop.permute.xlu0 %808
        %811 = vrot.lane.b32.xlu0 %v466, 16
        %v812 = vpop.permute.xlu0 %811
        %vm813 = vcmask 130048
        %v814 = vsel %vm813, %v812, %v809
        %v817 = vsel %vm813, %v809, %v812
        %v818 = vlaneseq
        %v819 = vshrl.u32 %v818, 7
        %v820 = vsub.s32 1, %v819
        %v821 = vrot.slane %v468, %v820
        %v822 = vlaneseq
        %v823 = vshrl.u32 %v822, 7
        %v824 = vsub.s32 1, %v823
        %v825 = vrot.slane %v469, %v824
        %v826 = vmul.f32 %v817, %v821
        %v827 = vmul.f32 %v814, %v825
        %v829 = vsel %vm478, %v778, 0
        %831 = vmatprep.subr.mxu0 0.0
        %832 = vmatpush1.msra.mxu0 0.0
        %833 = vmatprep.subr.mxu0 0.0
        %834 = vmatpush1.msra.mxu0 0.0
        %835 = vmatprep.subr.mxu0 0.0
        %836 = vmatpush1.msra.mxu0 0.0
        %837 = vmatprep.subr.mxu0 0.0
        %838 = vmatpush1.msra.mxu0 0.0
        %839 = vmatprep.subr.mxu0 0.0
        %840 = vmatpush1.msra.mxu0 0.0
        %841 = vmatprep.subr.mxu0 0.0
        %842 = vmatpush1.msra.mxu0 0.0
        %843 = vmatprep.subr.mxu0 0.0
        %844 = vmatpush1.msra.mxu0 0.0
        %845 = vmatprep.subr.mxu0 0.0
        %846 = vmatpush1.msra.mxu0 0.0
        %847 = vmatprep.subr.mxu0 0.0
        %848 = vmatpush1.msra.mxu0 0.0
        %849 = vmatprep.subr.mxu0 0.0
        %850 = vmatpush1.msra.mxu0 0.0
        %851 = vmatprep.subr.mxu0 0.0
        %852 = vmatpush1.msra.mxu0 0.0
        %853 = vmatprep.subr.mxu0 0.0
        %854 = vmatpush1.msra.mxu0 0.0
        %855 = vmatprep.subr.mxu0 0.0
        %856 = vmatpush1.msra.mxu0 0.0
        %857 = vmatprep.subr.mxu0 0.0
        %858 = vmatpush1.msra.mxu0 0.0
        %859 = vmatprep.subr.mxu0 0.0
        %860 = vmatpush1.msra.mxu0 0.0
        %861 = vmatprep.subr.mxu0 %v827
        %862 = vmatpush1.msra.mxu0 %v826
        %863 = vmatprep.subr.mxu0 0.0
        %864 = vmatpush2.msra.mxu0 0.0
        %865 = vmatprep.subr.mxu0 0.0
        %866 = vmatpush2.msra.mxu0 0.0
        %867 = vmatprep.subr.mxu0 0.0
        %868 = vmatpush2.msra.mxu0 0.0
        %869 = vmatprep.subr.mxu0 0.0
        %870 = vmatpush2.msra.mxu0 0.0
        %871 = vmatprep.subr.mxu0 0.0
        %872 = vmatpush2.msra.mxu0 0.0
        %873 = vmatprep.subr.mxu0 0.0
        %874 = vmatpush2.msra.mxu0 0.0
        %875 = vmatprep.subr.mxu0 0.0
        %876 = vmatpush2.msra.mxu0 0.0
        %877 = vmatprep.subr.mxu0 0.0
        %878 = vmatpush2.msra.mxu0 0.0
        %879 = vmatprep.subr.mxu0 0.0
        %880 = vmatpush2.msra.mxu0 0.0
        %881 = vmatprep.subr.mxu0 0.0
        %882 = vmatpush2.msra.mxu0 0.0
        %883 = vmatprep.subr.mxu0 0.0
        %884 = vmatpush2.msra.mxu0 0.0
        %885 = vmatprep.subr.mxu0 0.0
        %886 = vmatpush2.msra.mxu0 0.0
        %887 = vmatprep.subr.mxu0 0.0
        %888 = vmatpush2.msra.mxu0 0.0
        %889 = vmatprep.subr.mxu0 0.0
        %890 = vmatpush2.msra.mxu0 0.0
        %891 = vmatprep.subr.mxu0 0.0
        %892 = vmatpush2.msra.mxu0 0.0
        %893 = vmatprep.subr.mxu0 0.0
        %894 = vmatpush2.msra.mxu0 0.0
        %895 = vmatprep.mubr.f32.mxu0 0.0
        %896 = vmatmul.mubr.f32.gmra.mxu0 %v829
        %v897 = vpop.f32.mrf.mxu0
        %v898 = vadd.f32 0.0, %v897
        %v899 = vpop.f32.mrf.mxu0
        %v900 = vadd.f32 0.0, %v899
        %901 = vdwg.mxu0
        %v903 = vsel %vm478, %v777, 0
        %905 = vmatprep.subr.mxu0 0.0
        %906 = vmatpush1.msra.mxu0 0.0
        %907 = vmatprep.subr.mxu0 0.0
        %908 = vmatpush1.msra.mxu0 0.0
        %909 = vmatprep.subr.mxu0 0.0
        %910 = vmatpush1.msra.mxu0 0.0
        %911 = vmatprep.subr.mxu0 0.0
        %912 = vmatpush1.msra.mxu0 0.0
        %913 = vmatprep.subr.mxu0 0.0
        %914 = vmatpush1.msra.mxu0 0.0
        %915 = vmatprep.subr.mxu0 0.0
        %916 = vmatpush1.msra.mxu0 0.0
        %917 = vmatprep.subr.mxu0 0.0
        %918 = vmatpush1.msra.mxu0 0.0
        %919 = vmatprep.subr.mxu0 0.0
        %920 = vmatpush1.msra.mxu0 0.0
        %921 = vmatprep.subr.mxu0 0.0
        %922 = vmatpush1.msra.mxu0 0.0
        %923 = vmatprep.subr.mxu0 0.0
        %924 = vmatpush1.msra.mxu0 0.0
        %925 = vmatprep.subr.mxu0 0.0
        %926 = vmatpush1.msra.mxu0 0.0
        %927 = vmatprep.subr.mxu0 0.0
        %928 = vmatpush1.msra.mxu0 0.0
        %929 = vmatprep.subr.mxu0 0.0
        %930 = vmatpush1.msra.mxu0 0.0
        %931 = vmatprep.subr.mxu0 0.0
        %932 = vmatpush1.msra.mxu0 0.0
        %933 = vmatprep.subr.mxu0 0.0
        %934 = vmatpush1.msra.mxu0 0.0
        %935 = vmatprep.subr.mxu0 %v807
        %936 = vmatpush1.msra.mxu0 %v806
        %937 = vmatprep.subr.mxu0 0.0
        %938 = vmatpush2.msra.mxu0 0.0
        %939 = vmatprep.subr.mxu0 0.0
        %940 = vmatpush2.msra.mxu0 0.0
        %941 = vmatprep.subr.mxu0 0.0
        %942 = vmatpush2.msra.mxu0 0.0
        %943 = vmatprep.subr.mxu0 0.0
        %944 = vmatpush2.msra.mxu0 0.0
        %945 = vmatprep.subr.mxu0 0.0
        %946 = vmatpush2.msra.mxu0 0.0
        %947 = vmatprep.subr.mxu0 0.0
        %948 = vmatpush2.msra.mxu0 0.0
        %949 = vmatprep.subr.mxu0 0.0
        %950 = vmatpush2.msra.mxu0 0.0
        %951 = vmatprep.subr.mxu0 0.0
        %952 = vmatpush2.msra.mxu0 0.0
        %953 = vmatprep.subr.mxu0 0.0
        %954 = vmatpush2.msra.mxu0 0.0
        %955 = vmatprep.subr.mxu0 0.0
        %956 = vmatpush2.msra.mxu0 0.0
        %957 = vmatprep.subr.mxu0 0.0
        %958 = vmatpush2.msra.mxu0 0.0
        %959 = vmatprep.subr.mxu0 0.0
        %960 = vmatpush2.msra.mxu0 0.0
        %961 = vmatprep.subr.mxu0 0.0
        %962 = vmatpush2.msra.mxu0 0.0
        %963 = vmatprep.subr.mxu0 0.0
        %964 = vmatpush2.msra.mxu0 0.0
        %965 = vmatprep.subr.mxu0 0.0
        %966 = vmatpush2.msra.mxu0 0.0
        %967 = vmatprep.subr.mxu0 0.0
        %968 = vmatpush2.msra.mxu0 0.0
        %969 = vmatprep.mubr.f32.mxu0 0.0
        %970 = vmatmul.mubr.f32.gmra.mxu0 %v903
        %v971 = vpop.f32.mrf.mxu0
        %v972 = vadd.f32 %v898, %v971
        %v973 = vpop.f32.mrf.mxu0
        %v974 = vadd.f32 %v900, %v973
        %975 = vdwg.mxu0
        %976 = vrot.lane.b32.xlu0 %v467, 15
        %v977 = vpop.permute.xlu0 %976
        %979 = vrot.lane.b32.xlu0 %v466, 15
        %v980 = vpop.permute.xlu0 %979
        %vm981 = vcmask 121856
        %v982 = vsel %vm981, %v980, %v977
        %v985 = vsel %vm981, %v977, %v980
        %v986 = vlaneseq
        %v987 = vshrl.u32 %v986, 7
        %v988 = vsub.s32 2, %v987
        %v989 = vrot.slane %v468, %v988
        %v990 = vlaneseq
        %v991 = vshrl.u32 %v990, 7
        %v992 = vsub.s32 2, %v991
        %v993 = vrot.slane %v469, %v992
        %v994 = vmul.f32 %v985, %v989
        %v995 = vmul.f32 %v982, %v993
        %v997 = vsel %vm478, %v779, 0
        %999 = vmatprep.subr.mxu0 0.0
        %1000 = vmatpush1.msra.mxu0 0.0
        %1001 = vmatprep.subr.mxu0 0.0
        %1002 = vmatpush1.msra.mxu0 0.0
        %1003 = vmatprep.subr.mxu0 0.0
        %1004 = vmatpush1.msra.mxu0 0.0
        %1005 = vmatprep.subr.mxu0 0.0
        %1006 = vmatpush1.msra.mxu0 0.0
        %1007 = vmatprep.subr.mxu0 0.0
        %1008 = vmatpush1.msra.mxu0 0.0
        %1009 = vmatprep.subr.mxu0 0.0
        %1010 = vmatpush1.msra.mxu0 0.0
        %1011 = vmatprep.subr.mxu0 0.0
        %1012 = vmatpush1.msra.mxu0 0.0
        %1013 = vmatprep.subr.mxu0 0.0
        %1014 = vmatpush1.msra.mxu0 0.0
        %1015 = vmatprep.subr.mxu0 0.0
        %1016 = vmatpush1.msra.mxu0 0.0
        %1017 = vmatprep.subr.mxu0 0.0
        %1018 = vmatpush1.msra.mxu0 0.0
        %1019 = vmatprep.subr.mxu0 0.0
        %1020 = vmatpush1.msra.mxu0 0.0
        %1021 = vmatprep.subr.mxu0 0.0
        %1022 = vmatpush1.msra.mxu0 0.0
        %1023 = vmatprep.subr.mxu0 0.0
        %1024 = vmatpush1.msra.mxu0 0.0
        %1025 = vmatprep.subr.mxu0 0.0
        %1026 = vmatpush1.msra.mxu0 0.0
        %1027 = vmatprep.subr.mxu0 0.0
        %1028 = vmatpush1.msra.mxu0 0.0
        %1029 = vmatprep.subr.mxu0 %v995
        %1030 = vmatpush1.msra.mxu0 %v994
        %1031 = vmatprep.subr.mxu0 0.0
        %1032 = vmatpush2.msra.mxu0 0.0
        %1033 = vmatprep.subr.mxu0 0.0
        %1034 = vmatpush2.msra.mxu0 0.0
        %1035 = vmatprep.subr.mxu0 0.0
        %1036 = vmatpush2.msra.mxu0 0.0
        %1037 = vmatprep.subr.mxu0 0.0
        %1038 = vmatpush2.msra.mxu0 0.0
        %1039 = vmatprep.subr.mxu0 0.0
        %1040 = vmatpush2.msra.mxu0 0.0
        %1041 = vmatprep.subr.mxu0 0.0
        %1042 = vmatpush2.msra.mxu0 0.0
        %1043 = vmatprep.subr.mxu0 0.0
        %1044 = vmatpush2.msra.mxu0 0.0
        %1045 = vmatprep.subr.mxu0 0.0
        %1046 = vmatpush2.msra.mxu0 0.0
        %1047 = vmatprep.subr.mxu0 0.0
        %1048 = vmatpush2.msra.mxu0 0.0
        %1049 = vmatprep.subr.mxu0 0.0
        %1050 = vmatpush2.msra.mxu0 0.0
        %1051 = vmatprep.subr.mxu0 0.0
        %1052 = vmatpush2.msra.mxu0 0.0
        %1053 = vmatprep.subr.mxu0 0.0
        %1054 = vmatpush2.msra.mxu0 0.0
        %1055 = vmatprep.subr.mxu0 0.0
        %1056 = vmatpush2.msra.mxu0 0.0
        %1057 = vmatprep.subr.mxu0 0.0
        %1058 = vmatpush2.msra.mxu0 0.0
        %1059 = vmatprep.subr.mxu0 0.0
        %1060 = vmatpush2.msra.mxu0 0.0
        %1061 = vmatprep.subr.mxu0 0.0
        %1062 = vmatpush2.msra.mxu0 0.0
        %1063 = vmatprep.mubr.f32.mxu0 0.0
        %1064 = vmatmul.mubr.f32.gmra.mxu0 %v997
        %v1065 = vpop.f32.mrf.mxu0
        %v1066 = vadd.f32 0.0, %v1065
        %v1067 = vpop.f32.mrf.mxu0
        %v1068 = vadd.f32 0.0, %v1067
        %1069 = vdwg.mxu0
        %v1070 = vadd.f32 %v972, %v1066
        %v1071 = vadd.f32 %v974, %v1068
        %1072 = vrot.lane.b32.xlu0 %v467, 1
        %v1073 = vpop.permute.xlu0 %1072
        %1075 = vrot.lane.b32.xlu0 %v466, 1
        %v1076 = vpop.permute.xlu0 %1075
        %vm1077 = vcmask 7168
        %v1078 = vsel %vm1077, %v1076, %v1073
        %v1081 = vsel %vm1077, %v1073, %v1076
        %v1082 = vlaneseq
        %v1083 = vshrl.u32 %v1082, 7
        %v1084 = vsub.s32 3, %v1083
        %v1085 = vrot.slane %v468, %v1084
        %v1086 = vlaneseq
        %v1087 = vshrl.u32 %v1086, 7
        %v1088 = vsub.s32 3, %v1087
        %v1089 = vrot.slane %v469, %v1088
        %v1090 = vmul.f32 %v1081, %v1085
        %v1091 = vmul.f32 %v1078, %v1089
        %v1093 = vsel %vm478, %v780, 0
        %1095 = vmatprep.subr.mxu0 0.0
        %1096 = vmatpush1.msra.mxu0 0.0
        %1097 = vmatprep.subr.mxu0 0.0
        %1098 = vmatpush1.msra.mxu0 0.0
        %1099 = vmatprep.subr.mxu0 0.0
        %1100 = vmatpush1.msra.mxu0 0.0
        %1101 = vmatprep.subr.mxu0 0.0
        %1102 = vmatpush1.msra.mxu0 0.0
        %1103 = vmatprep.subr.mxu0 0.0
        %1104 = vmatpush1.msra.mxu0 0.0
        %1105 = vmatprep.subr.mxu0 0.0
        %1106 = vmatpush1.msra.mxu0 0.0
        %1107 = vmatprep.subr.mxu0 0.0
        %1108 = vmatpush1.msra.mxu0 0.0
        %1109 = vmatprep.subr.mxu0 0.0
        %1110 = vmatpush1.msra.mxu0 0.0
        %1111 = vmatprep.subr.mxu0 0.0
        %1112 = vmatpush1.msra.mxu0 0.0
        %1113 = vmatprep.subr.mxu0 0.0
        %1114 = vmatpush1.msra.mxu0 0.0
        %1115 = vmatprep.subr.mxu0 0.0
        %1116 = vmatpush1.msra.mxu0 0.0
        %1117 = vmatprep.subr.mxu0 0.0
        %1118 = vmatpush1.msra.mxu0 0.0
        %1119 = vmatprep.subr.mxu0 0.0
        %1120 = vmatpush1.msra.mxu0 0.0
        %1121 = vmatprep.subr.mxu0 0.0
        %1122 = vmatpush1.msra.mxu0 0.0
        %1123 = vmatprep.subr.mxu0 0.0
        %1124 = vmatpush1.msra.mxu0 0.0
        %1125 = vmatprep.subr.mxu0 %v1091
        %1126 = vmatpush1.msra.mxu0 %v1090
        %1127 = vmatprep.subr.mxu0 0.0
        %1128 = vmatpush2.msra.mxu0 0.0
        %1129 = vmatprep.subr.mxu0 0.0
        %1130 = vmatpush2.msra.mxu0 0.0
        %1131 = vmatprep.subr.mxu0 0.0
        %1132 = vmatpush2.msra.mxu0 0.0
        %1133 = vmatprep.subr.mxu0 0.0
        %1134 = vmatpush2.msra.mxu0 0.0
        %1135 = vmatprep.subr.mxu0 0.0
        %1136 = vmatpush2.msra.mxu0 0.0
        %1137 = vmatprep.subr.mxu0 0.0
        %1138 = vmatpush2.msra.mxu0 0.0
        %1139 = vmatprep.subr.mxu0 0.0
        %1140 = vmatpush2.msra.mxu0 0.0
        %1141 = vmatprep.subr.mxu0 0.0
        %1142 = vmatpush2.msra.mxu0 0.0
        %1143 = vmatprep.subr.mxu0 0.0
        %1144 = vmatpush2.msra.mxu0 0.0
        %1145 = vmatprep.subr.mxu0 0.0
        %1146 = vmatpush2.msra.mxu0 0.0
        %1147 = vmatprep.subr.mxu0 0.0
        %1148 = vmatpush2.msra.mxu0 0.0
        %1149 = vmatprep.subr.mxu0 0.0
        %1150 = vmatpush2.msra.mxu0 0.0
        %1151 = vmatprep.subr.mxu0 0.0
        %1152 = vmatpush2.msra.mxu0 0.0
        %1153 = vmatprep.subr.mxu0 0.0
        %1154 = vmatpush2.msra.mxu0 0.0
        %1155 = vmatprep.subr.mxu0 0.0
        %1156 = vmatpush2.msra.mxu0 0.0
        %1157 = vmatprep.subr.mxu0 0.0
        %1158 = vmatpush2.msra.mxu0 0.0
        %1159 = vmatprep.mubr.f32.mxu0 0.0
        %1160 = vmatmul.mubr.f32.gmra.mxu0 %v1093
        %v1161 = vpop.f32.mrf.mxu0
        %v1162 = vadd.f32 0.0, %v1161
        %v1163 = vpop.f32.mrf.mxu0
        %v1164 = vadd.f32 0.0, %v1163
        %1165 = vdwg.mxu0
        %v1166 = vadd.f32 %v1070, %v1162
        %v1167 = vadd.f32 %v1071, %v1164
        %v1169 = vsel %vm478, %v781, 0
        %1171 = vmatprep.subr.mxu0 0.0
        %1172 = vmatpush1.msra.mxu0 0.0
        %1173 = vmatprep.subr.mxu0 0.0
        %1174 = vmatpush1.msra.mxu0 0.0
        %1175 = vmatprep.subr.mxu0 0.0
        %1176 = vmatpush1.msra.mxu0 0.0
        %1177 = vmatprep.subr.mxu0 0.0
        %1178 = vmatpush1.msra.mxu0 0.0
        %1179 = vmatprep.subr.mxu0 0.0
        %1180 = vmatpush1.msra.mxu0 0.0
        %1181 = vmatprep.subr.mxu0 0.0
        %1182 = vmatpush1.msra.mxu0 0.0
        %1183 = vmatprep.subr.mxu0 0.0
        %1184 = vmatpush1.msra.mxu0 0.0
        %1185 = vmatprep.subr.mxu0 0.0
        %1186 = vmatpush1.msra.mxu0 0.0
        %1187 = vmatprep.subr.mxu0 0.0
        %1188 = vmatpush1.msra.mxu0 0.0
        %1189 = vmatprep.subr.mxu0 0.0
        %1190 = vmatpush1.msra.mxu0 0.0
        %1191 = vmatprep.subr.mxu0 0.0
        %1192 = vmatpush1.msra.mxu0 0.0
        %1193 = vmatprep.subr.mxu0 0.0
        %1194 = vmatpush1.msra.mxu0 0.0
        %1195 = vmatprep.subr.mxu0 0.0
        %1196 = vmatpush1.msra.mxu0 0.0
        %1197 = vmatprep.subr.mxu0 0.0
        %1198 = vmatpush1.msra.mxu0 0.0
        %1199 = vmatprep.subr.mxu0 0.0
        %1200 = vmatpush1.msra.mxu0 0.0
        %1201 = vmatprep.subr.mxu0 %v467
        %1202 = vmatpush1.msra.mxu0 %v466
        %1203 = vmatprep.subr.mxu0 0.0
        %1204 = vmatpush2.msra.mxu0 0.0
        %1205 = vmatprep.subr.mxu0 0.0
        %1206 = vmatpush2.msra.mxu0 0.0
        %1207 = vmatprep.subr.mxu0 0.0
        %1208 = vmatpush2.msra.mxu0 0.0
        %1209 = vmatprep.subr.mxu0 0.0
        %1210 = vmatpush2.msra.mxu0 0.0
        %1211 = vmatprep.subr.mxu0 0.0
        %1212 = vmatpush2.msra.mxu0 0.0
        %1213 = vmatprep.subr.mxu0 0.0
        %1214 = vmatpush2.msra.mxu0 0.0
        %1215 = vmatprep.subr.mxu0 0.0
        %1216 = vmatpush2.msra.mxu0 0.0
        %1217 = vmatprep.subr.mxu0 0.0
        %1218 = vmatpush2.msra.mxu0 0.0
        %1219 = vmatprep.subr.mxu0 0.0
        %1220 = vmatpush2.msra.mxu0 0.0
        %1221 = vmatprep.subr.mxu0 0.0
        %1222 = vmatpush2.msra.mxu0 0.0
        %1223 = vmatprep.subr.mxu0 0.0
        %1224 = vmatpush2.msra.mxu0 0.0
        %1225 = vmatprep.subr.mxu0 0.0
        %1226 = vmatpush2.msra.mxu0 0.0
        %1227 = vmatprep.subr.mxu0 0.0
        %1228 = vmatpush2.msra.mxu0 0.0
        %1229 = vmatprep.subr.mxu0 0.0
        %1230 = vmatpush2.msra.mxu0 0.0
        %1231 = vmatprep.subr.mxu0 0.0
        %1232 = vmatpush2.msra.mxu0 0.0
        %1233 = vmatprep.subr.mxu0 0.0
        %1234 = vmatpush2.msra.mxu0 0.0
        %1235 = vmatprep.mubr.f32.mxu0 0.0
        %1236 = vmatmul.mubr.f32.gmra.mxu0 %v1169
        %v1237 = vpop.f32.mrf.mxu0
        %v1238 = vadd.f32 0.0, %v1237
        %v1239 = vpop.f32.mrf.mxu0
        %v1240 = vadd.f32 0.0, %v1239
        %1241 = vdwg.mxu0
        %v1242 = vadd.f32 %v1166, %v1238
        %v1243 = vadd.f32 %v1167, %v1240
        %1244 = vrot.lane.b32.xlu0 %v466, 127
        %v1245 = vpop.permute.xlu0 %1244
        %1246 = vrot.lane.b32.xlu0 %v467, 127
        %v1247 = vpop.permute.xlu0 %1246
        %vm1248 = vcmask 1039360
        %v1249 = vsel %vm1248, %v1245, %v1247
        %v1253 = vsel %vm1248, %v1247, %v1245
        %v1254 = vlaneseq
        %v1255 = vshrl.u32 %v1254, 7
        %v1256 = vsub.s32 5, %v1255
        %v1257 = vrot.slane %v468, %v1256
        %v1258 = vlaneseq
        %v1259 = vshrl.u32 %v1258, 7
        %v1260 = vsub.s32 5, %v1259
        %v1261 = vrot.slane %v469, %v1260
        %v1262 = vmul.f32 %v1249, %v1257
        %v1263 = vmul.f32 %v1253, %v1261
        %v1265 = vsel %vm478, %v782, 0
        %1267 = vmatprep.subr.mxu0 0.0
        %1268 = vmatpush1.msra.mxu0 0.0
        %1269 = vmatprep.subr.mxu0 0.0
        %1270 = vmatpush1.msra.mxu0 0.0
        %1271 = vmatprep.subr.mxu0 0.0
        %1272 = vmatpush1.msra.mxu0 0.0
        %1273 = vmatprep.subr.mxu0 0.0
        %1274 = vmatpush1.msra.mxu0 0.0
        %1275 = vmatprep.subr.mxu0 0.0
        %1276 = vmatpush1.msra.mxu0 0.0
        %1277 = vmatprep.subr.mxu0 0.0
        %1278 = vmatpush1.msra.mxu0 0.0
        %1279 = vmatprep.subr.mxu0 0.0
        %1280 = vmatpush1.msra.mxu0 0.0
        %1281 = vmatprep.subr.mxu0 0.0
        %1282 = vmatpush1.msra.mxu0 0.0
        %1283 = vmatprep.subr.mxu0 0.0
        %1284 = vmatpush1.msra.mxu0 0.0
        %1285 = vmatprep.subr.mxu0 0.0
        %1286 = vmatpush1.msra.mxu0 0.0
        %1287 = vmatprep.subr.mxu0 0.0
        %1288 = vmatpush1.msra.mxu0 0.0
        %1289 = vmatprep.subr.mxu0 0.0
        %1290 = vmatpush1.msra.mxu0 0.0
        %1291 = vmatprep.subr.mxu0 0.0
        %1292 = vmatpush1.msra.mxu0 0.0
        %1293 = vmatprep.subr.mxu0 0.0
        %1294 = vmatpush1.msra.mxu0 0.0
        %1295 = vmatprep.subr.mxu0 0.0
        %1296 = vmatpush1.msra.mxu0 0.0
        %1297 = vmatprep.subr.mxu0 %v1263
        %1298 = vmatpush1.msra.mxu0 %v1262
        %1299 = vmatprep.subr.mxu0 0.0
        %1300 = vmatpush2.msra.mxu0 0.0
        %1301 = vmatprep.subr.mxu0 0.0
        %1302 = vmatpush2.msra.mxu0 0.0
        %1303 = vmatprep.subr.mxu0 0.0
        %1304 = vmatpush2.msra.mxu0 0.0
        %1305 = vmatprep.subr.mxu0 0.0
        %1306 = vmatpush2.msra.mxu0 0.0
        %1307 = vmatprep.subr.mxu0 0.0
        %1308 = vmatpush2.msra.mxu0 0.0
        %1309 = vmatprep.subr.mxu0 0.0
        %1310 = vmatpush2.msra.mxu0 0.0
        %1311 = vmatprep.subr.mxu0 0.0
        %1312 = vmatpush2.msra.mxu0 0.0
        %1313 = vmatprep.subr.mxu0 0.0
        %1314 = vmatpush2.msra.mxu0 0.0
        %1315 = vmatprep.subr.mxu0 0.0
        %1316 = vmatpush2.msra.mxu0 0.0
        %1317 = vmatprep.subr.mxu0 0.0
        %1318 = vmatpush2.msra.mxu0 0.0
        %1319 = vmatprep.subr.mxu0 0.0
        %1320 = vmatpush2.msra.mxu0 0.0
        %1321 = vmatprep.subr.mxu0 0.0
        %1322 = vmatpush2.msra.mxu0 0.0
        %1323 = vmatprep.subr.mxu0 0.0
        %1324 = vmatpush2.msra.mxu0 0.0
        %1325 = vmatprep.subr.mxu0 0.0
        %1326 = vmatpush2.msra.mxu0 0.0
        %1327 = vmatprep.subr.mxu0 0.0
        %1328 = vmatpush2.msra.mxu0 0.0
        %1329 = vmatprep.subr.mxu0 0.0
        %1330 = vmatpush2.msra.mxu0 0.0
        %1331 = vmatprep.mubr.f32.mxu0 0.0
        %1332 = vmatmul.mubr.f32.gmra.mxu0 %v1265
        %v1333 = vpop.f32.mrf.mxu0
        %v1334 = vadd.f32 0.0, %v1333
        %v1335 = vpop.f32.mrf.mxu0
        %v1336 = vadd.f32 0.0, %v1335
        %1337 = vdwg.mxu0
        %v1338 = vadd.f32 %v1242, %v1334
        %v1339 = vadd.f32 %v1243, %v1336
        %1340 = vrot.lane.b32.xlu0 %v466, 113
        %v1341 = vpop.permute.xlu0 %1340
        %1342 = vrot.lane.b32.xlu0 %v467, 113
        %v1343 = vpop.permute.xlu0 %1342
        %vm1344 = vcmask 924672
        %v1345 = vsel %vm1344, %v1341, %v1343
        %v1349 = vsel %vm1344, %v1343, %v1341
        %v1350 = vlaneseq
        %v1351 = vshrl.u32 %v1350, 7
        %v1352 = vsub.s32 6, %v1351
        %v1353 = vrot.slane %v468, %v1352
        %v1354 = vlaneseq
        %v1355 = vshrl.u32 %v1354, 7
        %v1356 = vsub.s32 6, %v1355
        %v1357 = vrot.slane %v469, %v1356
        %v1358 = vmul.f32 %v1345, %v1353
        %v1359 = vmul.f32 %v1349, %v1357
        %v1361 = vsel %vm478, %v783, 0
        %1363 = vmatprep.subr.mxu0 0.0
        %1364 = vmatpush1.msra.mxu0 0.0
        %1365 = vmatprep.subr.mxu0 0.0
        %1366 = vmatpush1.msra.mxu0 0.0
        %1367 = vmatprep.subr.mxu0 0.0
        %1368 = vmatpush1.msra.mxu0 0.0
        %1369 = vmatprep.subr.mxu0 0.0
        %1370 = vmatpush1.msra.mxu0 0.0
        %1371 = vmatprep.subr.mxu0 0.0
        %1372 = vmatpush1.msra.mxu0 0.0
        %1373 = vmatprep.subr.mxu0 0.0
        %1374 = vmatpush1.msra.mxu0 0.0
        %1375 = vmatprep.subr.mxu0 0.0
        %1376 = vmatpush1.msra.mxu0 0.0
        %1377 = vmatprep.subr.mxu0 0.0
        %1378 = vmatpush1.msra.mxu0 0.0
        %1379 = vmatprep.subr.mxu0 0.0
        %1380 = vmatpush1.msra.mxu0 0.0
        %1381 = vmatprep.subr.mxu0 0.0
        %1382 = vmatpush1.msra.mxu0 0.0
        %1383 = vmatprep.subr.mxu0 0.0
        %1384 = vmatpush1.msra.mxu0 0.0
        %1385 = vmatprep.subr.mxu0 0.0
        %1386 = vmatpush1.msra.mxu0 0.0
        %1387 = vmatprep.subr.mxu0 0.0
        %1388 = vmatpush1.msra.mxu0 0.0
        %1389 = vmatprep.subr.mxu0 0.0
        %1390 = vmatpush1.msra.mxu0 0.0
        %1391 = vmatprep.subr.mxu0 0.0
        %1392 = vmatpush1.msra.mxu0 0.0
        %1393 = vmatprep.subr.mxu0 %v1359
        %1394 = vmatpush1.msra.mxu0 %v1358
        %1395 = vmatprep.subr.mxu0 0.0
        %1396 = vmatpush2.msra.mxu0 0.0
        %1397 = vmatprep.subr.mxu0 0.0
        %1398 = vmatpush2.msra.mxu0 0.0
        %1399 = vmatprep.subr.mxu0 0.0
        %1400 = vmatpush2.msra.mxu0 0.0
        %1401 = vmatprep.subr.mxu0 0.0
        %1402 = vmatpush2.msra.mxu0 0.0
        %1403 = vmatprep.subr.mxu0 0.0
        %1404 = vmatpush2.msra.mxu0 0.0
        %1405 = vmatprep.subr.mxu0 0.0
        %1406 = vmatpush2.msra.mxu0 0.0
        %1407 = vmatprep.subr.mxu0 0.0
        %1408 = vmatpush2.msra.mxu0 0.0
        %1409 = vmatprep.subr.mxu0 0.0
        %1410 = vmatpush2.msra.mxu0 0.0
        %1411 = vmatprep.subr.mxu0 0.0
        %1412 = vmatpush2.msra.mxu0 0.0
        %1413 = vmatprep.subr.mxu0 0.0
        %1414 = vmatpush2.msra.mxu0 0.0
        %1415 = vmatprep.subr.mxu0 0.0
        %1416 = vmatpush2.msra.mxu0 0.0
        %1417 = vmatprep.subr.mxu0 0.0
        %1418 = vmatpush2.msra.mxu0 0.0
        %1419 = vmatprep.subr.mxu0 0.0
        %1420 = vmatpush2.msra.mxu0 0.0
        %1421 = vmatprep.subr.mxu0 0.0
        %1422 = vmatpush2.msra.mxu0 0.0
        %1423 = vmatprep.subr.mxu0 0.0
        %1424 = vmatpush2.msra.mxu0 0.0
        %1425 = vmatprep.subr.mxu0 0.0
        %1426 = vmatpush2.msra.mxu0 0.0
        %1427 = vmatprep.mubr.f32.mxu0 0.0
        %1428 = vmatmul.mubr.f32.gmra.mxu0 %v1361
        %v1429 = vpop.f32.mrf.mxu0
        %v1430 = vadd.f32 0.0, %v1429
        %v1431 = vpop.f32.mrf.mxu0
        %v1432 = vadd.f32 0.0, %v1431
        %1433 = vdwg.mxu0
        %v1434 = vadd.f32 %v1338, %v1430
        %v1435 = vadd.f32 %v1339, %v1432
        %1436 = vrot.lane.b32.xlu0 %v466, 112
        %v1437 = vpop.permute.xlu0 %1436
        %1438 = vrot.lane.b32.xlu0 %v467, 112
        %v1439 = vpop.permute.xlu0 %1438
        %vm1440 = vcmask 916480
        %v1441 = vsel %vm1440, %v1437, %v1439
        %v1445 = vsel %vm1440, %v1439, %v1437
        %v1446 = vlaneseq
        %v1447 = vshrl.u32 %v1446, 7
        %v1448 = vsub.s32 7, %v1447
        %v1449 = vrot.slane %v468, %v1448
        %v1450 = vlaneseq
        %v1451 = vshrl.u32 %v1450, 7
        %v1452 = vsub.s32 7, %v1451
        %v1453 = vrot.slane %v469, %v1452
        %v1454 = vmul.f32 %v1441, %v1449
        %v1455 = vmul.f32 %v1445, %v1453
        %v1457 = vsel %vm478, %v784, 0
        %1459 = vmatprep.subr.mxu0 0.0
        %1460 = vmatpush1.msra.mxu0 0.0
        %1461 = vmatprep.subr.mxu0 0.0
        %1462 = vmatpush1.msra.mxu0 0.0
        %1463 = vmatprep.subr.mxu0 0.0
        %1464 = vmatpush1.msra.mxu0 0.0
        %1465 = vmatprep.subr.mxu0 0.0
        %1466 = vmatpush1.msra.mxu0 0.0
        %1467 = vmatprep.subr.mxu0 0.0
        %1468 = vmatpush1.msra.mxu0 0.0
        %1469 = vmatprep.subr.mxu0 0.0
        %1470 = vmatpush1.msra.mxu0 0.0
        %1471 = vmatprep.subr.mxu0 0.0
        %1472 = vmatpush1.msra.mxu0 0.0
        %1473 = vmatprep.subr.mxu0 0.0
        %1474 = vmatpush1.msra.mxu0 0.0
        %1475 = vmatprep.subr.mxu0 0.0
        %1476 = vmatpush1.msra.mxu0 0.0
        %1477 = vmatprep.subr.mxu0 0.0
        %1478 = vmatpush1.msra.mxu0 0.0
        %1479 = vmatprep.subr.mxu0 0.0
        %1480 = vmatpush1.msra.mxu0 0.0
        %1481 = vmatprep.subr.mxu0 0.0
        %1482 = vmatpush1.msra.mxu0 0.0
        %1483 = vmatprep.subr.mxu0 0.0
        %1484 = vmatpush1.msra.mxu0 0.0
        %1485 = vmatprep.subr.mxu0 0.0
        %1486 = vmatpush1.msra.mxu0 0.0
        %1487 = vmatprep.subr.mxu0 0.0
        %1488 = vmatpush1.msra.mxu0 0.0
        %1489 = vmatprep.subr.mxu0 %v1455
        %1490 = vmatpush1.msra.mxu0 %v1454
        %1491 = vmatprep.subr.mxu0 0.0
        %1492 = vmatpush2.msra.mxu0 0.0
        %1493 = vmatprep.subr.mxu0 0.0
        %1494 = vmatpush2.msra.mxu0 0.0
        %1495 = vmatprep.subr.mxu0 0.0
        %1496 = vmatpush2.msra.mxu0 0.0
        %1497 = vmatprep.subr.mxu0 0.0
        %1498 = vmatpush2.msra.mxu0 0.0
        %1499 = vmatprep.subr.mxu0 0.0
        %1500 = vmatpush2.msra.mxu0 0.0
        %1501 = vmatprep.subr.mxu0 0.0
        %1502 = vmatpush2.msra.mxu0 0.0
        %1503 = vmatprep.subr.mxu0 0.0
        %1504 = vmatpush2.msra.mxu0 0.0
        %1505 = vmatprep.subr.mxu0 0.0
        %1506 = vmatpush2.msra.mxu0 0.0
        %1507 = vmatprep.subr.mxu0 0.0
        %1508 = vmatpush2.msra.mxu0 0.0
        %1509 = vmatprep.subr.mxu0 0.0
        %1510 = vmatpush2.msra.mxu0 0.0
        %1511 = vmatprep.subr.mxu0 0.0
        %1512 = vmatpush2.msra.mxu0 0.0
        %1513 = vmatprep.subr.mxu0 0.0
        %1514 = vmatpush2.msra.mxu0 0.0
        %1515 = vmatprep.subr.mxu0 0.0
        %1516 = vmatpush2.msra.mxu0 0.0
        %1517 = vmatprep.subr.mxu0 0.0
        %1518 = vmatpush2.msra.mxu0 0.0
        %1519 = vmatprep.subr.mxu0 0.0
        %1520 = vmatpush2.msra.mxu0 0.0
        %1521 = vmatprep.subr.mxu0 0.0
        %1522 = vmatpush2.msra.mxu0 0.0
        %1523 = vmatprep.mubr.f32.mxu0 0.0
        %1524 = vmatmul.mubr.f32.gmra.mxu0 %v1457
        %v1525 = vpop.f32.mrf.mxu0
        %v1526 = vadd.f32 0.0, %v1525
        %v1527 = vpop.f32.mrf.mxu0
        %v1528 = vadd.f32 0.0, %v1527
        %1529 = vdwg.mxu0
        %v1530 = vadd.f32 %v1434, %v1526
        %v1531 = vadd.f32 %v1435, %v1528
        %1532 = vrot.lane.b32.xlu0 %v466, 111
        %v1533 = vpop.permute.xlu0 %1532
        %1534 = vrot.lane.b32.xlu0 %v467, 111
        %v1535 = vpop.permute.xlu0 %1534
        %vm1536 = vcmask 908288
        %v1537 = vsel %vm1536, %v1533, %v1535
        %v1541 = vsel %vm1536, %v1535, %v1533
        %v1542 = vlaneseq
        %v1543 = vshrl.u32 %v1542, 7
        %v1544 = vsub.s32 0, %v1543
        %v1545 = vrot.slane %v470, %v1544
        %v1546 = vlaneseq
        %v1547 = vshrl.u32 %v1546, 7
        %v1548 = vsub.s32 0, %v1547
        %v1549 = vrot.slane %v471, %v1548
        %v1550 = vmul.f32 %v1537, %v1545
        %v1551 = vmul.f32 %v1541, %v1549
        %v1553 = vsel %vm478, %v785, 0
        %1555 = vmatprep.subr.mxu0 0.0
        %1556 = vmatpush1.msra.mxu0 0.0
        %1557 = vmatprep.subr.mxu0 0.0
        %1558 = vmatpush1.msra.mxu0 0.0
        %1559 = vmatprep.subr.mxu0 0.0
        %1560 = vmatpush1.msra.mxu0 0.0
        %1561 = vmatprep.subr.mxu0 0.0
        %1562 = vmatpush1.msra.mxu0 0.0
        %1563 = vmatprep.subr.mxu0 0.0
        %1564 = vmatpush1.msra.mxu0 0.0
        %1565 = vmatprep.subr.mxu0 0.0
        %1566 = vmatpush1.msra.mxu0 0.0
        %1567 = vmatprep.subr.mxu0 0.0
        %1568 = vmatpush1.msra.mxu0 0.0
        %1569 = vmatprep.subr.mxu0 0.0
        %1570 = vmatpush1.msra.mxu0 0.0
        %1571 = vmatprep.subr.mxu0 0.0
        %1572 = vmatpush1.msra.mxu0 0.0
        %1573 = vmatprep.subr.mxu0 0.0
        %1574 = vmatpush1.msra.mxu0 0.0
        %1575 = vmatprep.subr.mxu0 0.0
        %1576 = vmatpush1.msra.mxu0 0.0
        %1577 = vmatprep.subr.mxu0 0.0
        %1578 = vmatpush1.msra.mxu0 0.0
        %1579 = vmatprep.subr.mxu0 0.0
        %1580 = vmatpush1.msra.mxu0 0.0
        %1581 = vmatprep.subr.mxu0 0.0
        %1582 = vmatpush1.msra.mxu0 0.0
        %1583 = vmatprep.subr.mxu0 0.0
        %1584 = vmatpush1.msra.mxu0 0.0
        %1585 = vmatprep.subr.mxu0 %v1551
        %1586 = vmatpush1.msra.mxu0 %v1550
        %1587 = vmatprep.subr.mxu0 0.0
        %1588 = vmatpush2.msra.mxu0 0.0
        %1589 = vmatprep.subr.mxu0 0.0
        %1590 = vmatpush2.msra.mxu0 0.0
        %1591 = vmatprep.subr.mxu0 0.0
        %1592 = vmatpush2.msra.mxu0 0.0
        %1593 = vmatprep.subr.mxu0 0.0
        %1594 = vmatpush2.msra.mxu0 0.0
        %1595 = vmatprep.subr.mxu0 0.0
        %1596 = vmatpush2.msra.mxu0 0.0
        %1597 = vmatprep.subr.mxu0 0.0
        %1598 = vmatpush2.msra.mxu0 0.0
        %1599 = vmatprep.subr.mxu0 0.0
        %1600 = vmatpush2.msra.mxu0 0.0
        %1601 = vmatprep.subr.mxu0 0.0
        %1602 = vmatpush2.msra.mxu0 0.0
        %1603 = vmatprep.subr.mxu0 0.0
        %1604 = vmatpush2.msra.mxu0 0.0
        %1605 = vmatprep.subr.mxu0 0.0
        %1606 = vmatpush2.msra.mxu0 0.0
        %1607 = vmatprep.subr.mxu0 0.0
        %1608 = vmatpush2.msra.mxu0 0.0
        %1609 = vmatprep.subr.mxu0 0.0
        %1610 = vmatpush2.msra.mxu0 0.0
        %1611 = vmatprep.subr.mxu0 0.0
        %1612 = vmatpush2.msra.mxu0 0.0
        %1613 = vmatprep.subr.mxu0 0.0
        %1614 = vmatpush2.msra.mxu0 0.0
        %1615 = vmatprep.subr.mxu0 0.0
        %1616 = vmatpush2.msra.mxu0 0.0
        %1617 = vmatprep.subr.mxu0 0.0
        %1618 = vmatpush2.msra.mxu0 0.0
        %1619 = vmatprep.mubr.f32.mxu0 0.0
        %1620 = vmatmul.mubr.f32.gmra.mxu0 %v1553
        %v1621 = vpop.f32.mrf.mxu0
        %v1622 = vadd.f32 0.0, %v1621
        %v1623 = vpop.f32.mrf.mxu0
        %v1624 = vadd.f32 0.0, %v1623
        %1625 = vdwg.mxu0
        %v1626 = vadd.f32 %v1530, %v1622
        %v1627 = vadd.f32 %v1531, %v1624
        %v1628 = vld [vmem:[%s12] sm:$0xff]
        %1630 = vset.pattern.permute.xlu0 0
        %1631 = vperm.xlu0 %1630, %v1628
        %v1632 = vpop.permute.xlu0 %1631
        %v1634 = vmul.f32 %v1626, %v1632
        %v1635 = vmul.f32 %v1627, %v1632
        %v1636 = vld [vmem:[%s13] sm:$0xff]
        %1638 = vset.pattern.permute.xlu0 0
        %1639 = vperm.xlu0 %1638, %v1636
        %v1640 = vpop.permute.xlu0 %1639
        %v1642 = vadd.f32 %v1634, %v1640
        %v1643 = vadd.f32 %v1635, %v1640
        %v1644 = vmax.f32 %v1642, 0.0
        %v1645 = vmax.f32 %v1643, 0.0
        %v1646 = vadd.f32 %v1644, %v1645
        %1647 = vadd.xlane.f32.xlu0 %v1646
        %v1648 = vpop.xlane.xlu0 %1647
        %v1649 = vmul.f32 %v1648, %v475
        %v1650 = vld [vmem:[%s6] sm:$0x7]
        %v1652 = vsel %vm478, %v1650, 0
        %1654 = vmatprep.subr.mxu0 0.0
        %1655 = vmatpush1.msra.mxu0 0.0
        %1656 = vmatprep.subr.mxu0 0.0
        %1657 = vmatpush1.msra.mxu0 0.0
        %1658 = vmatprep.subr.mxu0 0.0
        %1659 = vmatpush1.msra.mxu0 0.0
        %1660 = vmatprep.subr.mxu0 0.0
        %1661 = vmatpush1.msra.mxu0 0.0
        %1662 = vmatprep.subr.mxu0 0.0
        %1663 = vmatpush1.msra.mxu0 0.0
        %1664 = vmatprep.subr.mxu0 0.0
        %1665 = vmatpush1.msra.mxu0 0.0
        %1666 = vmatprep.subr.mxu0 0.0
        %1667 = vmatpush1.msra.mxu0 0.0
        %1668 = vmatprep.subr.mxu0 0.0
        %1669 = vmatpush1.msra.mxu0 0.0
        %1670 = vmatprep.subr.mxu0 0.0
        %1671 = vmatpush1.msra.mxu0 0.0
        %1672 = vmatprep.subr.mxu0 0.0
        %1673 = vmatpush1.msra.mxu0 0.0
        %1674 = vmatprep.subr.mxu0 0.0
        %1675 = vmatpush1.msra.mxu0 0.0
        %1676 = vmatprep.subr.mxu0 0.0
        %1677 = vmatpush1.msra.mxu0 0.0
        %1678 = vmatprep.subr.mxu0 0.0
        %1679 = vmatpush1.msra.mxu0 0.0
        %1680 = vmatprep.subr.mxu0 0.0
        %1681 = vmatpush1.msra.mxu0 0.0
        %1682 = vmatprep.subr.mxu0 0.0
        %1683 = vmatpush1.msra.mxu0 0.0
        %1684 = vmatprep.subr.mxu0 0.0
        %1685 = vmatpush1.msra.mxu0 %v1649
        %1686 = vmatprep.subr.mxu0 0.0
        %1687 = vmatpush2.msra.mxu0 0.0
        %1688 = vmatprep.subr.mxu0 0.0
        %1689 = vmatpush2.msra.mxu0 0.0
        %1690 = vmatprep.subr.mxu0 0.0
        %1691 = vmatpush2.msra.mxu0 0.0
        %1692 = vmatprep.subr.mxu0 0.0
        %1693 = vmatpush2.msra.mxu0 0.0
        %1694 = vmatprep.subr.mxu0 0.0
        %1695 = vmatpush2.msra.mxu0 0.0
        %1696 = vmatprep.subr.mxu0 0.0
        %1697 = vmatpush2.msra.mxu0 0.0
        %1698 = vmatprep.subr.mxu0 0.0
        %1699 = vmatpush2.msra.mxu0 0.0
        %1700 = vmatprep.subr.mxu0 0.0
        %1701 = vmatpush2.msra.mxu0 0.0
        %1702 = vmatprep.subr.mxu0 0.0
        %1703 = vmatpush2.msra.mxu0 0.0
        %1704 = vmatprep.subr.mxu0 0.0
        %1705 = vmatpush2.msra.mxu0 0.0
        %1706 = vmatprep.subr.mxu0 0.0
        %1707 = vmatpush2.msra.mxu0 0.0
        %1708 = vmatprep.subr.mxu0 0.0
        %1709 = vmatpush2.msra.mxu0 0.0
        %1710 = vmatprep.subr.mxu0 0.0
        %1711 = vmatpush2.msra.mxu0 0.0
        %1712 = vmatprep.subr.mxu0 0.0
        %1713 = vmatpush2.msra.mxu0 0.0
        %1714 = vmatprep.subr.mxu0 0.0
        %1715 = vmatpush2.msra.mxu0 0.0
        %1716 = vmatprep.subr.mxu0 0.0
        %1717 = vmatpush2.msra.mxu0 0.0
        %1718 = vmatprep.mubr.f32.mxu0 0.0
        %1719 = vmatmul.mubr.f32.gmra.mxu0 %v1652
        %v1720 = vpop.f32.mrf.mxu0
        %v1721 = vadd.f32 0.0, %v1720
        %v1722 = vpop.f32.mrf.mxu0
        %1723 = vdwg.mxu0
        %v1724 = vmax.f32 %v1721, 0.0
        %v1725 = vld [vmem:[%s7] sm:$0xf]
        %v1726 = vld [vmem:[%s8] sm:$0xf]
        %v1728 = vsel %vm555, %v1725, 0
        %v1731 = vsel %vm559, %v1724, 0
        %1733 = vmatprep.subr.mxu0 0.0
        %1734 = vmatpush1.msra.mxu0 0.0
        %1735 = vmatprep.subr.mxu0 0.0
        %1736 = vmatpush1.msra.mxu0 0.0
        %1737 = vmatprep.subr.mxu0 0.0
        %1738 = vmatpush1.msra.mxu0 0.0
        %1739 = vmatprep.subr.mxu0 0.0
        %1740 = vmatpush1.msra.mxu0 0.0
        %1741 = vmatprep.subr.mxu0 0.0
        %1742 = vmatpush1.msra.mxu0 0.0
        %1743 = vmatprep.subr.mxu0 0.0
        %1744 = vmatpush1.msra.mxu0 0.0
        %1745 = vmatprep.subr.mxu0 0.0
        %1746 = vmatpush1.msra.mxu0 0.0
        %1747 = vmatprep.subr.mxu0 0.0
        %1748 = vmatpush1.msra.mxu0 0.0
        %1749 = vmatprep.subr.mxu0 0.0
        %1750 = vmatpush1.msra.mxu0 0.0
        %1751 = vmatprep.subr.mxu0 0.0
        %1752 = vmatpush1.msra.mxu0 0.0
        %1753 = vmatprep.subr.mxu0 0.0
        %1754 = vmatpush1.msra.mxu0 0.0
        %1755 = vmatprep.subr.mxu0 0.0
        %1756 = vmatpush1.msra.mxu0 0.0
        %1757 = vmatprep.subr.mxu0 0.0
        %1758 = vmatpush1.msra.mxu0 0.0
        %1759 = vmatprep.subr.mxu0 0.0
        %1760 = vmatpush1.msra.mxu0 0.0
        %1761 = vmatprep.subr.mxu0 0.0
        %1762 = vmatpush1.msra.mxu0 0.0
        %1763 = vmatprep.subr.mxu0 0.0
        %1764 = vmatpush1.msra.mxu0 %v1731
        %1765 = vmatprep.subr.mxu0 0.0
        %1766 = vmatpush2.msra.mxu0 0.0
        %1767 = vmatprep.subr.mxu0 0.0
        %1768 = vmatpush2.msra.mxu0 0.0
        %1769 = vmatprep.subr.mxu0 0.0
        %1770 = vmatpush2.msra.mxu0 0.0
        %1771 = vmatprep.subr.mxu0 0.0
        %1772 = vmatpush2.msra.mxu0 0.0
        %1773 = vmatprep.subr.mxu0 0.0
        %1774 = vmatpush2.msra.mxu0 0.0
        %1775 = vmatprep.subr.mxu0 0.0
        %1776 = vmatpush2.msra.mxu0 0.0
        %1777 = vmatprep.subr.mxu0 0.0
        %1778 = vmatpush2.msra.mxu0 0.0
        %1779 = vmatprep.subr.mxu0 0.0
        %1780 = vmatpush2.msra.mxu0 0.0
        %1781 = vmatprep.subr.mxu0 0.0
        %1782 = vmatpush2.msra.mxu0 0.0
        %1783 = vmatprep.subr.mxu0 0.0
        %1784 = vmatpush2.msra.mxu0 0.0
        %1785 = vmatprep.subr.mxu0 0.0
        %1786 = vmatpush2.msra.mxu0 0.0
        %1787 = vmatprep.subr.mxu0 0.0
        %1788 = vmatpush2.msra.mxu0 0.0
        %1789 = vmatprep.subr.mxu0 0.0
        %1790 = vmatpush2.msra.mxu0 0.0
        %1791 = vmatprep.subr.mxu0 0.0
        %1792 = vmatpush2.msra.mxu0 0.0
        %1793 = vmatprep.subr.mxu0 0.0
        %1794 = vmatpush2.msra.mxu0 0.0
        %1795 = vmatprep.subr.mxu0 0.0
        %1796 = vmatpush2.msra.mxu0 0.0
        %1797 = vmatprep.mubr.f32.mxu0 0.0
        %1798 = vmatmul.mubr.f32.gmra.mxu0 %v1728
        %v1799 = vpop.f32.mrf.mxu0
        %v1800 = vadd.f32 %v1726, %v1799
        %v1801 = vpop.f32.mrf.mxu0
        %1802 = vdwg.mxu0
        %v1803 = vmul.f32 %v1800, %v633
        %v1805 = vrot.slane %v1803, 1
        %v1807 = vmax.f32 %v1803, %v1805
        %v1808 = vrot.slane %v1803, 2
        %v1810 = vmax.f32 %v1807, %v1808
        %v1811 = vrot.slane %v1803, 3
        %v1813 = vmax.f32 %v1810, %v1811
        %v1814 = vlaneseq
        %v1815 = vshrl.u32 %v1814, 7
        %v1816 = vsub.s32 0, %v1815
        %v1817 = vrot.slane %v1813, %v1816
        %v1818 = vsub.f32 %v1803, %v1817
        %v1819 = vmul.f32 %v1818, 1.442695
        %v1820 = vpow.pop %v1819
        %v1822 = vrot.slane %v1820, 1
        %v1824 = vadd.f32 %v1820, %v1822
        %v1825 = vrot.slane %v1820, 2
        %v1827 = vadd.f32 %v1824, %v1825
        %v1828 = vrot.slane %v1820, 3
        %v1830 = vadd.f32 %v1827, %v1828
        %v1831 = vlaneseq
        %v1832 = vshrl.u32 %v1831, 7
        %v1833 = vsub.s32 0, %v1832
        %v1834 = vrot.slane %v1830, %v1833
        %v1835 = vrcp.pop %v1834
        %v1836 = vmul.f32 %v1820, %v1835
        %v1837 = vld [vmem:[%s9] sm:$0xff]
        %v1838 = vld [vmem:[%s9 + $0x8] sm:$0xff]
        %v1839 = vld [vmem:[%s9 + $0x10] sm:$0xff]
        %v1840 = vld [vmem:[%s9 + $0x18] sm:$0xff]
        %v1841 = vld [vmem:[%s9 + $0x20] sm:$0xff]
        %v1842 = vld [vmem:[%s9 + $0x28] sm:$0xff]
        %v1843 = vld [vmem:[%s9 + $0x30] sm:$0xff]
        %v1844 = vld [vmem:[%s9 + $0x38] sm:$0xff]
        %v1845 = vld [vmem:[%s9 + $0x40] sm:$0xff]
        %s1847 = vtos %v1836
        %v1848 = vstv %s1847
        %v1850 = vmul.f32 %v1848, %v1837
        %v1851 = vmul.f32 %v1848, %v1838
        %v1852 = vmul.f32 %v1848, %v1839
        %v1853 = vmul.f32 %v1848, %v1840
        %v1854 = vmul.f32 %v1848, %v1841
        %v1855 = vmul.f32 %v1848, %v1842
        %v1856 = vmul.f32 %v1848, %v1843
        %v1857 = vmul.f32 %v1848, %v1844
        %v1858 = vmul.f32 %v1848, %v1845
        %s1859 = scalar_lea.vmem %s9, 72
        %v1860 = vld [vmem:[%s1859] sm:$0xff]
        %v1861 = vld [vmem:[%s1859 + $0x8] sm:$0xff]
        %v1862 = vld [vmem:[%s1859 + $0x10] sm:$0xff]
        %v1863 = vld [vmem:[%s1859 + $0x18] sm:$0xff]
        %v1864 = vld [vmem:[%s1859 + $0x20] sm:$0xff]
        %v1865 = vld [vmem:[%s1859 + $0x28] sm:$0xff]
        %v1866 = vld [vmem:[%s1859 + $0x30] sm:$0xff]
        %v1867 = vld [vmem:[%s1859 + $0x38] sm:$0xff]
        %v1868 = vld [vmem:[%s1859 + $0x40] sm:$0xff]
        %v1869 = vrot.slane %v1836, 1
        %s1870 = vtos %v1869
        %v1871 = vstv %s1870
        %v1873 = vmul.f32 %v1871, %v1860
        %v1874 = vmul.f32 %v1871, %v1861
        %v1875 = vmul.f32 %v1871, %v1862
        %v1876 = vmul.f32 %v1871, %v1863
        %v1877 = vmul.f32 %v1871, %v1864
        %v1878 = vmul.f32 %v1871, %v1865
        %v1879 = vmul.f32 %v1871, %v1866
        %v1880 = vmul.f32 %v1871, %v1867
        %v1881 = vmul.f32 %v1871, %v1868
        %v1882 = vadd.f32 %v1850, %v1873
        %v1883 = vadd.f32 %v1851, %v1874
        %v1884 = vadd.f32 %v1852, %v1875
        %v1885 = vadd.f32 %v1853, %v1876
        %v1886 = vadd.f32 %v1854, %v1877
        %v1887 = vadd.f32 %v1855, %v1878
        %v1888 = vadd.f32 %v1856, %v1879
        %v1889 = vadd.f32 %v1857, %v1880
        %v1890 = vadd.f32 %v1858, %v1881
        %s1891 = scalar_lea.vmem %s9, 144
        %v1892 = vld [vmem:[%s1891] sm:$0xff]
        %v1893 = vld [vmem:[%s1891 + $0x8] sm:$0xff]
        %v1894 = vld [vmem:[%s1891 + $0x10] sm:$0xff]
        %v1895 = vld [vmem:[%s1891 + $0x18] sm:$0xff]
        %v1896 = vld [vmem:[%s1891 + $0x20] sm:$0xff]
        %v1897 = vld [vmem:[%s1891 + $0x28] sm:$0xff]
        %v1898 = vld [vmem:[%s1891 + $0x30] sm:$0xff]
        %v1899 = vld [vmem:[%s1891 + $0x38] sm:$0xff]
        %v1900 = vld [vmem:[%s1891 + $0x40] sm:$0xff]
        %v1901 = vrot.slane %v1836, 2
        %s1902 = vtos %v1901
        %v1903 = vstv %s1902
        %v1905 = vmul.f32 %v1903, %v1892
        %v1906 = vmul.f32 %v1903, %v1893
        %v1907 = vmul.f32 %v1903, %v1894
        %v1908 = vmul.f32 %v1903, %v1895
        %v1909 = vmul.f32 %v1903, %v1896
        %v1910 = vmul.f32 %v1903, %v1897
        %v1911 = vmul.f32 %v1903, %v1898
        %v1912 = vmul.f32 %v1903, %v1899
        %v1913 = vmul.f32 %v1903, %v1900
        %v1914 = vadd.f32 %v1882, %v1905
        %v1915 = vadd.f32 %v1883, %v1906
        %v1916 = vadd.f32 %v1884, %v1907
        %v1917 = vadd.f32 %v1885, %v1908
        %v1918 = vadd.f32 %v1886, %v1909
        %v1919 = vadd.f32 %v1887, %v1910
        %v1920 = vadd.f32 %v1888, %v1911
        %v1921 = vadd.f32 %v1889, %v1912
        %v1922 = vadd.f32 %v1890, %v1913
        %s1923 = scalar_lea.vmem %s9, 216
        %v1924 = vld [vmem:[%s1923] sm:$0xff]
        %v1925 = vld [vmem:[%s1923 + $0x8] sm:$0xff]
        %v1926 = vld [vmem:[%s1923 + $0x10] sm:$0xff]
        %v1927 = vld [vmem:[%s1923 + $0x18] sm:$0xff]
        %v1928 = vld [vmem:[%s1923 + $0x20] sm:$0xff]
        %v1929 = vld [vmem:[%s1923 + $0x28] sm:$0xff]
        %v1930 = vld [vmem:[%s1923 + $0x30] sm:$0xff]
        %v1931 = vld [vmem:[%s1923 + $0x38] sm:$0xff]
        %v1932 = vld [vmem:[%s1923 + $0x40] sm:$0xff]
        %v1933 = vrot.slane %v1836, 3
        %s1934 = vtos %v1933
        %v1935 = vstv %s1934
        %v1937 = vmul.f32 %v1935, %v1924
        %v1938 = vmul.f32 %v1935, %v1925
        %v1939 = vmul.f32 %v1935, %v1926
        %v1940 = vmul.f32 %v1935, %v1927
        %v1941 = vmul.f32 %v1935, %v1928
        %v1942 = vmul.f32 %v1935, %v1929
        %v1943 = vmul.f32 %v1935, %v1930
        %v1944 = vmul.f32 %v1935, %v1931
        %v1945 = vmul.f32 %v1935, %v1932
        %v1946 = vadd.f32 %v1914, %v1937
        %v1947 = vadd.f32 %v1915, %v1938
        %v1948 = vadd.f32 %v1916, %v1939
        %v1949 = vadd.f32 %v1917, %v1940
        %v1950 = vadd.f32 %v1918, %v1941
        %v1951 = vadd.f32 %v1919, %v1942
        %v1952 = vadd.f32 %v1920, %v1943
        %v1953 = vadd.f32 %v1921, %v1944
        %v1954 = vadd.f32 %v1922, %v1945
        %1956 = vrot.lane.b32.xlu0 %v1645, 17
        %v1957 = vpop.permute.xlu0 %1956
        %1960 = vrot.lane.b32.xlu0 %v1644, 17
        %v1961 = vpop.permute.xlu0 %1960
        %v1962 = vsel %vm793, %v1961, %v1957
        %v1965 = vsel %vm793, %v1957, %v1961
        %v1966 = vmul.f32 %v1965, %v801
        %v1967 = vmul.f32 %v1962, %v805
        %1968 = vrot.lane.b32.xlu0 %v1645, 16
        %v1969 = vpop.permute.xlu0 %1968
        %1971 = vrot.lane.b32.xlu0 %v1644, 16
        %v1972 = vpop.permute.xlu0 %1971
        %v1973 = vsel %vm813, %v1972, %v1969
        %v1976 = vsel %vm813, %v1969, %v1972
        %v1977 = vmul.f32 %v1976, %v821
        %v1978 = vmul.f32 %v1973, %v825
        %v1980 = vsel %vm478, %v1947, 0
        %1982 = vmatprep.subr.mxu0 0.0
        %1983 = vmatpush1.msra.mxu0 0.0
        %1984 = vmatprep.subr.mxu0 0.0
        %1985 = vmatpush1.msra.mxu0 0.0
        %1986 = vmatprep.subr.mxu0 0.0
        %1987 = vmatpush1.msra.mxu0 0.0
        %1988 = vmatprep.subr.mxu0 0.0
        %1989 = vmatpush1.msra.mxu0 0.0
        %1990 = vmatprep.subr.mxu0 0.0
        %1991 = vmatpush1.msra.mxu0 0.0
        %1992 = vmatprep.subr.mxu0 0.0
        %1993 = vmatpush1.msra.mxu0 0.0
        %1994 = vmatprep.subr.mxu0 0.0
        %1995 = vmatpush1.msra.mxu0 0.0
        %1996 = vmatprep.subr.mxu0 0.0
        %1997 = vmatpush1.msra.mxu0 0.0
        %1998 = vmatprep.subr.mxu0 0.0
        %1999 = vmatpush1.msra.mxu0 0.0
        %2000 = vmatprep.subr.mxu0 0.0
        %2001 = vmatpush1.msra.mxu0 0.0
        %2002 = vmatprep.subr.mxu0 0.0
        %2003 = vmatpush1.msra.mxu0 0.0
        %2004 = vmatprep.subr.mxu0 0.0
        %2005 = vmatpush1.msra.mxu0 0.0
        %2006 = vmatprep.subr.mxu0 0.0
        %2007 = vmatpush1.msra.mxu0 0.0
        %2008 = vmatprep.subr.mxu0 0.0
        %2009 = vmatpush1.msra.mxu0 0.0
        %2010 = vmatprep.subr.mxu0 0.0
        %2011 = vmatpush1.msra.mxu0 0.0
        %2012 = vmatprep.subr.mxu0 %v1978
        %2013 = vmatpush1.msra.mxu0 %v1977
        %2014 = vmatprep.subr.mxu0 0.0
        %2015 = vmatpush2.msra.mxu0 0.0
        %2016 = vmatprep.subr.mxu0 0.0
        %2017 = vmatpush2.msra.mxu0 0.0
        %2018 = vmatprep.subr.mxu0 0.0
        %2019 = vmatpush2.msra.mxu0 0.0
        %2020 = vmatprep.subr.mxu0 0.0
        %2021 = vmatpush2.msra.mxu0 0.0
        %2022 = vmatprep.subr.mxu0 0.0
        %2023 = vmatpush2.msra.mxu0 0.0
        %2024 = vmatprep.subr.mxu0 0.0
        %2025 = vmatpush2.msra.mxu0 0.0
        %2026 = vmatprep.subr.mxu0 0.0
        %2027 = vmatpush2.msra.mxu0 0.0
        %2028 = vmatprep.subr.mxu0 0.0
        %2029 = vmatpush2.msra.mxu0 0.0
        %2030 = vmatprep.subr.mxu0 0.0
        %2031 = vmatpush2.msra.mxu0 0.0
        %2032 = vmatprep.subr.mxu0 0.0
        %2033 = vmatpush2.msra.mxu0 0.0
        %2034 = vmatprep.subr.mxu0 0.0
        %2035 = vmatpush2.msra.mxu0 0.0
        %2036 = vmatprep.subr.mxu0 0.0
        %2037 = vmatpush2.msra.mxu0 0.0
        %2038 = vmatprep.subr.mxu0 0.0
        %2039 = vmatpush2.msra.mxu0 0.0
        %2040 = vmatprep.subr.mxu0 0.0
        %2041 = vmatpush2.msra.mxu0 0.0
        %2042 = vmatprep.subr.mxu0 0.0
        %2043 = vmatpush2.msra.mxu0 0.0
        %2044 = vmatprep.subr.mxu0 0.0
        %2045 = vmatpush2.msra.mxu0 0.0
        %2046 = vmatprep.mubr.f32.mxu0 0.0
        %2047 = vmatmul.mubr.f32.gmra.mxu0 %v1980
        %v2048 = vpop.f32.mrf.mxu0
        %v2049 = vadd.f32 0.0, %v2048
        %v2050 = vpop.f32.mrf.mxu0
        %v2051 = vadd.f32 0.0, %v2050
        %2052 = vdwg.mxu0
        %v2054 = vsel %vm478, %v1946, 0
        %2056 = vmatprep.subr.mxu0 0.0
        %2057 = vmatpush1.msra.mxu0 0.0
        %2058 = vmatprep.subr.mxu0 0.0
        %2059 = vmatpush1.msra.mxu0 0.0
        %2060 = vmatprep.subr.mxu0 0.0
        %2061 = vmatpush1.msra.mxu0 0.0
        %2062 = vmatprep.subr.mxu0 0.0
        %2063 = vmatpush1.msra.mxu0 0.0
        %2064 = vmatprep.subr.mxu0 0.0
        %2065 = vmatpush1.msra.mxu0 0.0
        %2066 = vmatprep.subr.mxu0 0.0
        %2067 = vmatpush1.msra.mxu0 0.0
        %2068 = vmatprep.subr.mxu0 0.0
        %2069 = vmatpush1.msra.mxu0 0.0
        %2070 = vmatprep.subr.mxu0 0.0
        %2071 = vmatpush1.msra.mxu0 0.0
        %2072 = vmatprep.subr.mxu0 0.0
        %2073 = vmatpush1.msra.mxu0 0.0
        %2074 = vmatprep.subr.mxu0 0.0
        %2075 = vmatpush1.msra.mxu0 0.0
        %2076 = vmatprep.subr.mxu0 0.0
        %2077 = vmatpush1.msra.mxu0 0.0
        %2078 = vmatprep.subr.mxu0 0.0
        %2079 = vmatpush1.msra.mxu0 0.0
        %2080 = vmatprep.subr.mxu0 0.0
        %2081 = vmatpush1.msra.mxu0 0.0
        %2082 = vmatprep.subr.mxu0 0.0
        %2083 = vmatpush1.msra.mxu0 0.0
        %2084 = vmatprep.subr.mxu0 0.0
        %2085 = vmatpush1.msra.mxu0 0.0
        %2086 = vmatprep.subr.mxu0 %v1967
        %2087 = vmatpush1.msra.mxu0 %v1966
        %2088 = vmatprep.subr.mxu0 0.0
        %2089 = vmatpush2.msra.mxu0 0.0
        %2090 = vmatprep.subr.mxu0 0.0
        %2091 = vmatpush2.msra.mxu0 0.0
        %2092 = vmatprep.subr.mxu0 0.0
        %2093 = vmatpush2.msra.mxu0 0.0
        %2094 = vmatprep.subr.mxu0 0.0
        %2095 = vmatpush2.msra.mxu0 0.0
        %2096 = vmatprep.subr.mxu0 0.0
        %2097 = vmatpush2.msra.mxu0 0.0
        %2098 = vmatprep.subr.mxu0 0.0
        %2099 = vmatpush2.msra.mxu0 0.0
        %2100 = vmatprep.subr.mxu0 0.0
        %2101 = vmatpush2.msra.mxu0 0.0
        %2102 = vmatprep.subr.mxu0 0.0
        %2103 = vmatpush2.msra.mxu0 0.0
        %2104 = vmatprep.subr.mxu0 0.0
        %2105 = vmatpush2.msra.mxu0 0.0
        %2106 = vmatprep.subr.mxu0 0.0
        %2107 = vmatpush2.msra.mxu0 0.0
        %2108 = vmatprep.subr.mxu0 0.0
        %2109 = vmatpush2.msra.mxu0 0.0
        %2110 = vmatprep.subr.mxu0 0.0
        %2111 = vmatpush2.msra.mxu0 0.0
        %2112 = vmatprep.subr.mxu0 0.0
        %2113 = vmatpush2.msra.mxu0 0.0
        %2114 = vmatprep.subr.mxu0 0.0
        %2115 = vmatpush2.msra.mxu0 0.0
        %2116 = vmatprep.subr.mxu0 0.0
        %2117 = vmatpush2.msra.mxu0 0.0
        %2118 = vmatprep.subr.mxu0 0.0
        %2119 = vmatpush2.msra.mxu0 0.0
        %2120 = vmatprep.mubr.f32.mxu0 0.0
        %2121 = vmatmul.mubr.f32.gmra.mxu0 %v2054
        %v2122 = vpop.f32.mrf.mxu0
        %v2123 = vadd.f32 %v2049, %v2122
        %v2124 = vpop.f32.mrf.mxu0
        %v2125 = vadd.f32 %v2051, %v2124
        %2126 = vdwg.mxu0
        %2127 = vrot.lane.b32.xlu0 %v1645, 15
        %v2128 = vpop.permute.xlu0 %2127
        %2130 = vrot.lane.b32.xlu0 %v1644, 15
        %v2131 = vpop.permute.xlu0 %2130
        %v2132 = vsel %vm981, %v2131, %v2128
        %v2135 = vsel %vm981, %v2128, %v2131
        %v2136 = vmul.f32 %v2135, %v989
        %v2137 = vmul.f32 %v2132, %v993
        %v2139 = vsel %vm478, %v1948, 0
        %2141 = vmatprep.subr.mxu0 0.0
        %2142 = vmatpush1.msra.mxu0 0.0
        %2143 = vmatprep.subr.mxu0 0.0
        %2144 = vmatpush1.msra.mxu0 0.0
        %2145 = vmatprep.subr.mxu0 0.0
        %2146 = vmatpush1.msra.mxu0 0.0
        %2147 = vmatprep.subr.mxu0 0.0
        %2148 = vmatpush1.msra.mxu0 0.0
        %2149 = vmatprep.subr.mxu0 0.0
        %2150 = vmatpush1.msra.mxu0 0.0
        %2151 = vmatprep.subr.mxu0 0.0
        %2152 = vmatpush1.msra.mxu0 0.0
        %2153 = vmatprep.subr.mxu0 0.0
        %2154 = vmatpush1.msra.mxu0 0.0
        %2155 = vmatprep.subr.mxu0 0.0
        %2156 = vmatpush1.msra.mxu0 0.0
        %2157 = vmatprep.subr.mxu0 0.0
        %2158 = vmatpush1.msra.mxu0 0.0
        %2159 = vmatprep.subr.mxu0 0.0
        %2160 = vmatpush1.msra.mxu0 0.0
        %2161 = vmatprep.subr.mxu0 0.0
        %2162 = vmatpush1.msra.mxu0 0.0
        %2163 = vmatprep.subr.mxu0 0.0
        %2164 = vmatpush1.msra.mxu0 0.0
        %2165 = vmatprep.subr.mxu0 0.0
        %2166 = vmatpush1.msra.mxu0 0.0
        %2167 = vmatprep.subr.mxu0 0.0
        %2168 = vmatpush1.msra.mxu0 0.0
        %2169 = vmatprep.subr.mxu0 0.0
        %2170 = vmatpush1.msra.mxu0 0.0
        %2171 = vmatprep.subr.mxu0 %v2137
        %2172 = vmatpush1.msra.mxu0 %v2136
        %2173 = vmatprep.subr.mxu0 0.0
        %2174 = vmatpush2.msra.mxu0 0.0
        %2175 = vmatprep.subr.mxu0 0.0
        %2176 = vmatpush2.msra.mxu0 0.0
        %2177 = vmatprep.subr.mxu0 0.0
        %2178 = vmatpush2.msra.mxu0 0.0
        %2179 = vmatprep.subr.mxu0 0.0
        %2180 = vmatpush2.msra.mxu0 0.0
        %2181 = vmatprep.subr.mxu0 0.0
        %2182 = vmatpush2.msra.mxu0 0.0
        %2183 = vmatprep.subr.mxu0 0.0
        %2184 = vmatpush2.msra.mxu0 0.0
        %2185 = vmatprep.subr.mxu0 0.0
        %2186 = vmatpush2.msra.mxu0 0.0
        %2187 = vmatprep.subr.mxu0 0.0
        %2188 = vmatpush2.msra.mxu0 0.0
        %2189 = vmatprep.subr.mxu0 0.0
        %2190 = vmatpush2.msra.mxu0 0.0
        %2191 = vmatprep.subr.mxu0 0.0
        %2192 = vmatpush2.msra.mxu0 0.0
        %2193 = vmatprep.subr.mxu0 0.0
        %2194 = vmatpush2.msra.mxu0 0.0
        %2195 = vmatprep.subr.mxu0 0.0
        %2196 = vmatpush2.msra.mxu0 0.0
        %2197 = vmatprep.subr.mxu0 0.0
        %2198 = vmatpush2.msra.mxu0 0.0
        %2199 = vmatprep.subr.mxu0 0.0
        %2200 = vmatpush2.msra.mxu0 0.0
        %2201 = vmatprep.subr.mxu0 0.0
        %2202 = vmatpush2.msra.mxu0 0.0
        %2203 = vmatprep.subr.mxu0 0.0
        %2204 = vmatpush2.msra.mxu0 0.0
        %2205 = vmatprep.mubr.f32.mxu0 0.0
        %2206 = vmatmul.mubr.f32.gmra.mxu0 %v2139
        %v2207 = vpop.f32.mrf.mxu0
        %v2208 = vadd.f32 0.0, %v2207
        %v2209 = vpop.f32.mrf.mxu0
        %v2210 = vadd.f32 0.0, %v2209
        %2211 = vdwg.mxu0
        %v2212 = vadd.f32 %v2123, %v2208
        %v2213 = vadd.f32 %v2125, %v2210
        %2214 = vrot.lane.b32.xlu0 %v1645, 1
        %v2215 = vpop.permute.xlu0 %2214
        %2217 = vrot.lane.b32.xlu0 %v1644, 1
        %v2218 = vpop.permute.xlu0 %2217
        %v2219 = vsel %vm1077, %v2218, %v2215
        %v2222 = vsel %vm1077, %v2215, %v2218
        %v2223 = vmul.f32 %v2222, %v1085
        %v2224 = vmul.f32 %v2219, %v1089
        %v2226 = vsel %vm478, %v1949, 0
        %2228 = vmatprep.subr.mxu0 0.0
        %2229 = vmatpush1.msra.mxu0 0.0
        %2230 = vmatprep.subr.mxu0 0.0
        %2231 = vmatpush1.msra.mxu0 0.0
        %2232 = vmatprep.subr.mxu0 0.0
        %2233 = vmatpush1.msra.mxu0 0.0
        %2234 = vmatprep.subr.mxu0 0.0
        %2235 = vmatpush1.msra.mxu0 0.0
        %2236 = vmatprep.subr.mxu0 0.0
        %2237 = vmatpush1.msra.mxu0 0.0
        %2238 = vmatprep.subr.mxu0 0.0
        %2239 = vmatpush1.msra.mxu0 0.0
        %2240 = vmatprep.subr.mxu0 0.0
        %2241 = vmatpush1.msra.mxu0 0.0
        %2242 = vmatprep.subr.mxu0 0.0
        %2243 = vmatpush1.msra.mxu0 0.0
        %2244 = vmatprep.subr.mxu0 0.0
        %2245 = vmatpush1.msra.mxu0 0.0
        %2246 = vmatprep.subr.mxu0 0.0
        %2247 = vmatpush1.msra.mxu0 0.0
        %2248 = vmatprep.subr.mxu0 0.0
        %2249 = vmatpush1.msra.mxu0 0.0
        %2250 = vmatprep.subr.mxu0 0.0
        %2251 = vmatpush1.msra.mxu0 0.0
        %2252 = vmatprep.subr.mxu0 0.0
        %2253 = vmatpush1.msra.mxu0 0.0
        %2254 = vmatprep.subr.mxu0 0.0
        %2255 = vmatpush1.msra.mxu0 0.0
        %2256 = vmatprep.subr.mxu0 0.0
        %2257 = vmatpush1.msra.mxu0 0.0
        %2258 = vmatprep.subr.mxu0 %v2224
        %2259 = vmatpush1.msra.mxu0 %v2223
        %2260 = vmatprep.subr.mxu0 0.0
        %2261 = vmatpush2.msra.mxu0 0.0
        %2262 = vmatprep.subr.mxu0 0.0
        %2263 = vmatpush2.msra.mxu0 0.0
        %2264 = vmatprep.subr.mxu0 0.0
        %2265 = vmatpush2.msra.mxu0 0.0
        %2266 = vmatprep.subr.mxu0 0.0
        %2267 = vmatpush2.msra.mxu0 0.0
        %2268 = vmatprep.subr.mxu0 0.0
        %2269 = vmatpush2.msra.mxu0 0.0
        %2270 = vmatprep.subr.mxu0 0.0
        %2271 = vmatpush2.msra.mxu0 0.0
        %2272 = vmatprep.subr.mxu0 0.0
        %2273 = vmatpush2.msra.mxu0 0.0
        %2274 = vmatprep.subr.mxu0 0.0
        %2275 = vmatpush2.msra.mxu0 0.0
        %2276 = vmatprep.subr.mxu0 0.0
        %2277 = vmatpush2.msra.mxu0 0.0
        %2278 = vmatprep.subr.mxu0 0.0
        %2279 = vmatpush2.msra.mxu0 0.0
        %2280 = vmatprep.subr.mxu0 0.0
        %2281 = vmatpush2.msra.mxu0 0.0
        %2282 = vmatprep.subr.mxu0 0.0
        %2283 = vmatpush2.msra.mxu0 0.0
        %2284 = vmatprep.subr.mxu0 0.0
        %2285 = vmatpush2.msra.mxu0 0.0
        %2286 = vmatprep.subr.mxu0 0.0
        %2287 = vmatpush2.msra.mxu0 0.0
        %2288 = vmatprep.subr.mxu0 0.0
        %2289 = vmatpush2.msra.mxu0 0.0
        %2290 = vmatprep.subr.mxu0 0.0
        %2291 = vmatpush2.msra.mxu0 0.0
        %2292 = vmatprep.mubr.f32.mxu0 0.0
        %2293 = vmatmul.mubr.f32.gmra.mxu0 %v2226
        %v2294 = vpop.f32.mrf.mxu0
        %v2295 = vadd.f32 0.0, %v2294
        %v2296 = vpop.f32.mrf.mxu0
        %v2297 = vadd.f32 0.0, %v2296
        %2298 = vdwg.mxu0
        %v2299 = vadd.f32 %v2212, %v2295
        %v2300 = vadd.f32 %v2213, %v2297
        %v2302 = vsel %vm478, %v1950, 0
        %2304 = vmatprep.subr.mxu0 0.0
        %2305 = vmatpush1.msra.mxu0 0.0
        %2306 = vmatprep.subr.mxu0 0.0
        %2307 = vmatpush1.msra.mxu0 0.0
        %2308 = vmatprep.subr.mxu0 0.0
        %2309 = vmatpush1.msra.mxu0 0.0
        %2310 = vmatprep.subr.mxu0 0.0
        %2311 = vmatpush1.msra.mxu0 0.0
        %2312 = vmatprep.subr.mxu0 0.0
        %2313 = vmatpush1.msra.mxu0 0.0
        %2314 = vmatprep.subr.mxu0 0.0
        %2315 = vmatpush1.msra.mxu0 0.0
        %2316 = vmatprep.subr.mxu0 0.0
        %2317 = vmatpush1.msra.mxu0 0.0
        %2318 = vmatprep.subr.mxu0 0.0
        %2319 = vmatpush1.msra.mxu0 0.0
        %2320 = vmatprep.subr.mxu0 0.0
        %2321 = vmatpush1.msra.mxu0 0.0
        %2322 = vmatprep.subr.mxu0 0.0
        %2323 = vmatpush1.msra.mxu0 0.0
        %2324 = vmatprep.subr.mxu0 0.0
        %2325 = vmatpush1.msra.mxu0 0.0
        %2326 = vmatprep.subr.mxu0 0.0
        %2327 = vmatpush1.msra.mxu0 0.0
        %2328 = vmatprep.subr.mxu0 0.0
        %2329 = vmatpush1.msra.mxu0 0.0
        %2330 = vmatprep.subr.mxu0 0.0
        %2331 = vmatpush1.msra.mxu0 0.0
        %2332 = vmatprep.subr.mxu0 0.0
        %2333 = vmatpush1.msra.mxu0 0.0
        %2334 = vmatprep.subr.mxu0 %v1645
        %2335 = vmatpush1.msra.mxu0 %v1644
        %2336 = vmatprep.subr.mxu0 0.0
        %2337 = vmatpush2.msra.mxu0 0.0
        %2338 = vmatprep.subr.mxu0 0.0
        %2339 = vmatpush2.msra.mxu0 0.0
        %2340 = vmatprep.subr.mxu0 0.0
        %2341 = vmatpush2.msra.mxu0 0.0
        %2342 = vmatprep.subr.mxu0 0.0
        %2343 = vmatpush2.msra.mxu0 0.0
        %2344 = vmatprep.subr.mxu0 0.0
        %2345 = vmatpush2.msra.mxu0 0.0
        %2346 = vmatprep.subr.mxu0 0.0
        %2347 = vmatpush2.msra.mxu0 0.0
        %2348 = vmatprep.subr.mxu0 0.0
        %2349 = vmatpush2.msra.mxu0 0.0
        %2350 = vmatprep.subr.mxu0 0.0
        %2351 = vmatpush2.msra.mxu0 0.0
        %2352 = vmatprep.subr.mxu0 0.0
        %2353 = vmatpush2.msra.mxu0 0.0
        %2354 = vmatprep.subr.mxu0 0.0
        %2355 = vmatpush2.msra.mxu0 0.0
        %2356 = vmatprep.subr.mxu0 0.0
        %2357 = vmatpush2.msra.mxu0 0.0
        %2358 = vmatprep.subr.mxu0 0.0
        %2359 = vmatpush2.msra.mxu0 0.0
        %2360 = vmatprep.subr.mxu0 0.0
        %2361 = vmatpush2.msra.mxu0 0.0
        %2362 = vmatprep.subr.mxu0 0.0
        %2363 = vmatpush2.msra.mxu0 0.0
        %2364 = vmatprep.subr.mxu0 0.0
        %2365 = vmatpush2.msra.mxu0 0.0
        %2366 = vmatprep.subr.mxu0 0.0
        %2367 = vmatpush2.msra.mxu0 0.0
        %2368 = vmatprep.mubr.f32.mxu0 0.0
        %2369 = vmatmul.mubr.f32.gmra.mxu0 %v2302
        %v2370 = vpop.f32.mrf.mxu0
        %v2371 = vadd.f32 0.0, %v2370
        %v2372 = vpop.f32.mrf.mxu0
        %v2373 = vadd.f32 0.0, %v2372
        %2374 = vdwg.mxu0
        %v2375 = vadd.f32 %v2299, %v2371
        %v2376 = vadd.f32 %v2300, %v2373
        %2377 = vrot.lane.b32.xlu0 %v1644, 127
        %v2378 = vpop.permute.xlu0 %2377
        %2379 = vrot.lane.b32.xlu0 %v1645, 127
        %v2380 = vpop.permute.xlu0 %2379
        %v2381 = vsel %vm1248, %v2378, %v2380
        %v2385 = vsel %vm1248, %v2380, %v2378
        %v2386 = vmul.f32 %v2381, %v1257
        %v2387 = vmul.f32 %v2385, %v1261
        %v2389 = vsel %vm478, %v1951, 0
        %2391 = vmatprep.subr.mxu0 0.0
        %2392 = vmatpush1.msra.mxu0 0.0
        %2393 = vmatprep.subr.mxu0 0.0
        %2394 = vmatpush1.msra.mxu0 0.0
        %2395 = vmatprep.subr.mxu0 0.0
        %2396 = vmatpush1.msra.mxu0 0.0
        %2397 = vmatprep.subr.mxu0 0.0
        %2398 = vmatpush1.msra.mxu0 0.0
        %2399 = vmatprep.subr.mxu0 0.0
        %2400 = vmatpush1.msra.mxu0 0.0
        %2401 = vmatprep.subr.mxu0 0.0
        %2402 = vmatpush1.msra.mxu0 0.0
        %2403 = vmatprep.subr.mxu0 0.0
        %2404 = vmatpush1.msra.mxu0 0.0
        %2405 = vmatprep.subr.mxu0 0.0
        %2406 = vmatpush1.msra.mxu0 0.0
        %2407 = vmatprep.subr.mxu0 0.0
        %2408 = vmatpush1.msra.mxu0 0.0
        %2409 = vmatprep.subr.mxu0 0.0
        %2410 = vmatpush1.msra.mxu0 0.0
        %2411 = vmatprep.subr.mxu0 0.0
        %2412 = vmatpush1.msra.mxu0 0.0
        %2413 = vmatprep.subr.mxu0 0.0
        %2414 = vmatpush1.msra.mxu0 0.0
        %2415 = vmatprep.subr.mxu0 0.0
        %2416 = vmatpush1.msra.mxu0 0.0
        %2417 = vmatprep.subr.mxu0 0.0
        %2418 = vmatpush1.msra.mxu0 0.0
        %2419 = vmatprep.subr.mxu0 0.0
        %2420 = vmatpush1.msra.mxu0 0.0
        %2421 = vmatprep.subr.mxu0 %v2387
        %2422 = vmatpush1.msra.mxu0 %v2386
        %2423 = vmatprep.subr.mxu0 0.0
        %2424 = vmatpush2.msra.mxu0 0.0
        %2425 = vmatprep.subr.mxu0 0.0
        %2426 = vmatpush2.msra.mxu0 0.0
        %2427 = vmatprep.subr.mxu0 0.0
        %2428 = vmatpush2.msra.mxu0 0.0
        %2429 = vmatprep.subr.mxu0 0.0
        %2430 = vmatpush2.msra.mxu0 0.0
        %2431 = vmatprep.subr.mxu0 0.0
        %2432 = vmatpush2.msra.mxu0 0.0
        %2433 = vmatprep.subr.mxu0 0.0
        %2434 = vmatpush2.msra.mxu0 0.0
        %2435 = vmatprep.subr.mxu0 0.0
        %2436 = vmatpush2.msra.mxu0 0.0
        %2437 = vmatprep.subr.mxu0 0.0
        %2438 = vmatpush2.msra.mxu0 0.0
        %2439 = vmatprep.subr.mxu0 0.0
        %2440 = vmatpush2.msra.mxu0 0.0
        %2441 = vmatprep.subr.mxu0 0.0
        %2442 = vmatpush2.msra.mxu0 0.0
        %2443 = vmatprep.subr.mxu0 0.0
        %2444 = vmatpush2.msra.mxu0 0.0
        %2445 = vmatprep.subr.mxu0 0.0
        %2446 = vmatpush2.msra.mxu0 0.0
        %2447 = vmatprep.subr.mxu0 0.0
        %2448 = vmatpush2.msra.mxu0 0.0
        %2449 = vmatprep.subr.mxu0 0.0
        %2450 = vmatpush2.msra.mxu0 0.0
        %2451 = vmatprep.subr.mxu0 0.0
        %2452 = vmatpush2.msra.mxu0 0.0
        %2453 = vmatprep.subr.mxu0 0.0
        %2454 = vmatpush2.msra.mxu0 0.0
        %2455 = vmatprep.mubr.f32.mxu0 0.0
        %2456 = vmatmul.mubr.f32.gmra.mxu0 %v2389
        %v2457 = vpop.f32.mrf.mxu0
        %v2458 = vadd.f32 0.0, %v2457
        %v2459 = vpop.f32.mrf.mxu0
        %v2460 = vadd.f32 0.0, %v2459
        %2461 = vdwg.mxu0
        %v2462 = vadd.f32 %v2375, %v2458
        %v2463 = vadd.f32 %v2376, %v2460
        %2464 = vrot.lane.b32.xlu0 %v1644, 113
        %v2465 = vpop.permute.xlu0 %2464
        %2466 = vrot.lane.b32.xlu0 %v1645, 113
        %v2467 = vpop.permute.xlu0 %2466
        %v2468 = vsel %vm1344, %v2465, %v2467
        %v2472 = vsel %vm1344, %v2467, %v2465
        %v2473 = vmul.f32 %v2468, %v1353
        %v2474 = vmul.f32 %v2472, %v1357
        %v2476 = vsel %vm478, %v1952, 0
        %2478 = vmatprep.subr.mxu0 0.0
        %2479 = vmatpush1.msra.mxu0 0.0
        %2480 = vmatprep.subr.mxu0 0.0
        %2481 = vmatpush1.msra.mxu0 0.0
        %2482 = vmatprep.subr.mxu0 0.0
        %2483 = vmatpush1.msra.mxu0 0.0
        %2484 = vmatprep.subr.mxu0 0.0
        %2485 = vmatpush1.msra.mxu0 0.0
        %2486 = vmatprep.subr.mxu0 0.0
        %2487 = vmatpush1.msra.mxu0 0.0
        %2488 = vmatprep.subr.mxu0 0.0
        %2489 = vmatpush1.msra.mxu0 0.0
        %2490 = vmatprep.subr.mxu0 0.0
        %2491 = vmatpush1.msra.mxu0 0.0
        %2492 = vmatprep.subr.mxu0 0.0
        %2493 = vmatpush1.msra.mxu0 0.0
        %2494 = vmatprep.subr.mxu0 0.0
        %2495 = vmatpush1.msra.mxu0 0.0
        %2496 = vmatprep.subr.mxu0 0.0
        %2497 = vmatpush1.msra.mxu0 0.0
        %2498 = vmatprep.subr.mxu0 0.0
        %2499 = vmatpush1.msra.mxu0 0.0
        %2500 = vmatprep.subr.mxu0 0.0
        %2501 = vmatpush1.msra.mxu0 0.0
        %2502 = vmatprep.subr.mxu0 0.0
        %2503 = vmatpush1.msra.mxu0 0.0
        %2504 = vmatprep.subr.mxu0 0.0
        %2505 = vmatpush1.msra.mxu0 0.0
        %2506 = vmatprep.subr.mxu0 0.0
        %2507 = vmatpush1.msra.mxu0 0.0
        %2508 = vmatprep.subr.mxu0 %v2474
        %2509 = vmatpush1.msra.mxu0 %v2473
        %2510 = vmatprep.subr.mxu0 0.0
        %2511 = vmatpush2.msra.mxu0 0.0
        %2512 = vmatprep.subr.mxu0 0.0
        %2513 = vmatpush2.msra.mxu0 0.0
        %2514 = vmatprep.subr.mxu0 0.0
        %2515 = vmatpush2.msra.mxu0 0.0
        %2516 = vmatprep.subr.mxu0 0.0
        %2517 = vmatpush2.msra.mxu0 0.0
        %2518 = vmatprep.subr.mxu0 0.0
        %2519 = vmatpush2.msra.mxu0 0.0
        %2520 = vmatprep.subr.mxu0 0.0
        %2521 = vmatpush2.msra.mxu0 0.0
        %2522 = vmatprep.subr.mxu0 0.0
        %2523 = vmatpush2.msra.mxu0 0.0
        %2524 = vmatprep.subr.mxu0 0.0
        %2525 = vmatpush2.msra.mxu0 0.0
        %2526 = vmatprep.subr.mxu0 0.0
        %2527 = vmatpush2.msra.mxu0 0.0
        %2528 = vmatprep.subr.mxu0 0.0
        %2529 = vmatpush2.msra.mxu0 0.0
        %2530 = vmatprep.subr.mxu0 0.0
        %2531 = vmatpush2.msra.mxu0 0.0
        %2532 = vmatprep.subr.mxu0 0.0
        %2533 = vmatpush2.msra.mxu0 0.0
        %2534 = vmatprep.subr.mxu0 0.0
        %2535 = vmatpush2.msra.mxu0 0.0
        %2536 = vmatprep.subr.mxu0 0.0
        %2537 = vmatpush2.msra.mxu0 0.0
        %2538 = vmatprep.subr.mxu0 0.0
        %2539 = vmatpush2.msra.mxu0 0.0
        %2540 = vmatprep.subr.mxu0 0.0
        %2541 = vmatpush2.msra.mxu0 0.0
        %2542 = vmatprep.mubr.f32.mxu0 0.0
        %2543 = vmatmul.mubr.f32.gmra.mxu0 %v2476
        %v2544 = vpop.f32.mrf.mxu0
        %v2545 = vadd.f32 0.0, %v2544
        %v2546 = vpop.f32.mrf.mxu0
        %v2547 = vadd.f32 0.0, %v2546
        %2548 = vdwg.mxu0
        %v2549 = vadd.f32 %v2462, %v2545
        %v2550 = vadd.f32 %v2463, %v2547
        %2551 = vrot.lane.b32.xlu0 %v1644, 112
        %v2552 = vpop.permute.xlu0 %2551
        %2553 = vrot.lane.b32.xlu0 %v1645, 112
        %v2554 = vpop.permute.xlu0 %2553
        %v2555 = vsel %vm1440, %v2552, %v2554
        %v2559 = vsel %vm1440, %v2554, %v2552
        %v2560 = vmul.f32 %v2555, %v1449
        %v2561 = vmul.f32 %v2559, %v1453
        %v2563 = vsel %vm478, %v1953, 0
        %2565 = vmatprep.subr.mxu0 0.0
        %2566 = vmatpush1.msra.mxu0 0.0
        %2567 = vmatprep.subr.mxu0 0.0
        %2568 = vmatpush1.msra.mxu0 0.0
        %2569 = vmatprep.subr.mxu0 0.0
        %2570 = vmatpush1.msra.mxu0 0.0
        %2571 = vmatprep.subr.mxu0 0.0
        %2572 = vmatpush1.msra.mxu0 0.0
        %2573 = vmatprep.subr.mxu0 0.0
        %2574 = vmatpush1.msra.mxu0 0.0
        %2575 = vmatprep.subr.mxu0 0.0
        %2576 = vmatpush1.msra.mxu0 0.0
        %2577 = vmatprep.subr.mxu0 0.0
        %2578 = vmatpush1.msra.mxu0 0.0
        %2579 = vmatprep.subr.mxu0 0.0
        %2580 = vmatpush1.msra.mxu0 0.0
        %2581 = vmatprep.subr.mxu0 0.0
        %2582 = vmatpush1.msra.mxu0 0.0
        %2583 = vmatprep.subr.mxu0 0.0
        %2584 = vmatpush1.msra.mxu0 0.0
        %2585 = vmatprep.subr.mxu0 0.0
        %2586 = vmatpush1.msra.mxu0 0.0
        %2587 = vmatprep.subr.mxu0 0.0
        %2588 = vmatpush1.msra.mxu0 0.0
        %2589 = vmatprep.subr.mxu0 0.0
        %2590 = vmatpush1.msra.mxu0 0.0
        %2591 = vmatprep.subr.mxu0 0.0
        %2592 = vmatpush1.msra.mxu0 0.0
        %2593 = vmatprep.subr.mxu0 0.0
        %2594 = vmatpush1.msra.mxu0 0.0
        %2595 = vmatprep.subr.mxu0 %v2561
        %2596 = vmatpush1.msra.mxu0 %v2560
        %2597 = vmatprep.subr.mxu0 0.0
        %2598 = vmatpush2.msra.mxu0 0.0
        %2599 = vmatprep.subr.mxu0 0.0
        %2600 = vmatpush2.msra.mxu0 0.0
        %2601 = vmatprep.subr.mxu0 0.0
        %2602 = vmatpush2.msra.mxu0 0.0
        %2603 = vmatprep.subr.mxu0 0.0
        %2604 = vmatpush2.msra.mxu0 0.0
        %2605 = vmatprep.subr.mxu0 0.0
        %2606 = vmatpush2.msra.mxu0 0.0
        %2607 = vmatprep.subr.mxu0 0.0
        %2608 = vmatpush2.msra.mxu0 0.0
        %2609 = vmatprep.subr.mxu0 0.0
        %2610 = vmatpush2.msra.mxu0 0.0
        %2611 = vmatprep.subr.mxu0 0.0
        %2612 = vmatpush2.msra.mxu0 0.0
        %2613 = vmatprep.subr.mxu0 0.0
        %2614 = vmatpush2.msra.mxu0 0.0
        %2615 = vmatprep.subr.mxu0 0.0
        %2616 = vmatpush2.msra.mxu0 0.0
        %2617 = vmatprep.subr.mxu0 0.0
        %2618 = vmatpush2.msra.mxu0 0.0
        %2619 = vmatprep.subr.mxu0 0.0
        %2620 = vmatpush2.msra.mxu0 0.0
        %2621 = vmatprep.subr.mxu0 0.0
        %2622 = vmatpush2.msra.mxu0 0.0
        %2623 = vmatprep.subr.mxu0 0.0
        %2624 = vmatpush2.msra.mxu0 0.0
        %2625 = vmatprep.subr.mxu0 0.0
        %2626 = vmatpush2.msra.mxu0 0.0
        %2627 = vmatprep.subr.mxu0 0.0
        %2628 = vmatpush2.msra.mxu0 0.0
        %2629 = vmatprep.mubr.f32.mxu0 0.0
        %2630 = vmatmul.mubr.f32.gmra.mxu0 %v2563
        %v2631 = vpop.f32.mrf.mxu0
        %v2632 = vadd.f32 0.0, %v2631
        %v2633 = vpop.f32.mrf.mxu0
        %v2634 = vadd.f32 0.0, %v2633
        %2635 = vdwg.mxu0
        %v2636 = vadd.f32 %v2549, %v2632
        %v2637 = vadd.f32 %v2550, %v2634
        %2638 = vrot.lane.b32.xlu0 %v1644, 111
        %v2639 = vpop.permute.xlu0 %2638
        %2640 = vrot.lane.b32.xlu0 %v1645, 111
        %v2641 = vpop.permute.xlu0 %2640
        %v2642 = vsel %vm1536, %v2639, %v2641
        %v2646 = vsel %vm1536, %v2641, %v2639
        %v2647 = vmul.f32 %v2642, %v1545
        %v2648 = vmul.f32 %v2646, %v1549
        %v2650 = vsel %vm478, %v1954, 0
        %2652 = vmatprep.subr.mxu0 0.0
        %2653 = vmatpush1.msra.mxu0 0.0
        %2654 = vmatprep.subr.mxu0 0.0
        %2655 = vmatpush1.msra.mxu0 0.0
        %2656 = vmatprep.subr.mxu0 0.0
        %2657 = vmatpush1.msra.mxu0 0.0
        %2658 = vmatprep.subr.mxu0 0.0
        %2659 = vmatpush1.msra.mxu0 0.0
        %2660 = vmatprep.subr.mxu0 0.0
        %2661 = vmatpush1.msra.mxu0 0.0
        %2662 = vmatprep.subr.mxu0 0.0
        %2663 = vmatpush1.msra.mxu0 0.0
        %2664 = vmatprep.subr.mxu0 0.0
        %2665 = vmatpush1.msra.mxu0 0.0
        %2666 = vmatprep.subr.mxu0 0.0
        %2667 = vmatpush1.msra.mxu0 0.0
        %2668 = vmatprep.subr.mxu0 0.0
        %2669 = vmatpush1.msra.mxu0 0.0
        %2670 = vmatprep.subr.mxu0 0.0
        %2671 = vmatpush1.msra.mxu0 0.0
        %2672 = vmatprep.subr.mxu0 0.0
        %2673 = vmatpush1.msra.mxu0 0.0
        %2674 = vmatprep.subr.mxu0 0.0
        %2675 = vmatpush1.msra.mxu0 0.0
        %2676 = vmatprep.subr.mxu0 0.0
        %2677 = vmatpush1.msra.mxu0 0.0
        %2678 = vmatprep.subr.mxu0 0.0
        %2679 = vmatpush1.msra.mxu0 0.0
        %2680 = vmatprep.subr.mxu0 0.0
        %2681 = vmatpush1.msra.mxu0 0.0
        %2682 = vmatprep.subr.mxu0 %v2648
        %2683 = vmatpush1.msra.mxu0 %v2647
        %2684 = vmatprep.subr.mxu0 0.0
        %2685 = vmatpush2.msra.mxu0 0.0
        %2686 = vmatprep.subr.mxu0 0.0
        %2687 = vmatpush2.msra.mxu0 0.0
        %2688 = vmatprep.subr.mxu0 0.0
        %2689 = vmatpush2.msra.mxu0 0.0
        %2690 = vmatprep.subr.mxu0 0.0
        %2691 = vmatpush2.msra.mxu0 0.0
        %2692 = vmatprep.subr.mxu0 0.0
        %2693 = vmatpush2.msra.mxu0 0.0
        %2694 = vmatprep.subr.mxu0 0.0
        %2695 = vmatpush2.msra.mxu0 0.0
        %2696 = vmatprep.subr.mxu0 0.0
        %2697 = vmatpush2.msra.mxu0 0.0
        %2698 = vmatprep.subr.mxu0 0.0
        %2699 = vmatpush2.msra.mxu0 0.0
        %2700 = vmatprep.subr.mxu0 0.0
        %2701 = vmatpush2.msra.mxu0 0.0
        %2702 = vmatprep.subr.mxu0 0.0
        %2703 = vmatpush2.msra.mxu0 0.0
        %2704 = vmatprep.subr.mxu0 0.0
        %2705 = vmatpush2.msra.mxu0 0.0
        %2706 = vmatprep.subr.mxu0 0.0
        %2707 = vmatpush2.msra.mxu0 0.0
        %2708 = vmatprep.subr.mxu0 0.0
        %2709 = vmatpush2.msra.mxu0 0.0
        %2710 = vmatprep.subr.mxu0 0.0
        %2711 = vmatpush2.msra.mxu0 0.0
        %2712 = vmatprep.subr.mxu0 0.0
        %2713 = vmatpush2.msra.mxu0 0.0
        %2714 = vmatprep.subr.mxu0 0.0
        %2715 = vmatpush2.msra.mxu0 0.0
        %2716 = vmatprep.mubr.f32.mxu0 0.0
        %2717 = vmatmul.mubr.f32.gmra.mxu0 %v2650
        %v2718 = vpop.f32.mrf.mxu0
        %v2719 = vadd.f32 0.0, %v2718
        %v2720 = vpop.f32.mrf.mxu0
        %v2721 = vadd.f32 0.0, %v2720
        %2722 = vdwg.mxu0
        %v2723 = vadd.f32 %v2636, %v2719
        %v2724 = vadd.f32 %v2637, %v2721
        %s2725 = scalar_lea.vmem %s12, 8
        %v2726 = vld [vmem:[%s2725] sm:$0xff]
        %2728 = vset.pattern.permute.xlu0 0
        %2729 = vperm.xlu0 %2728, %v2726
        %v2730 = vpop.permute.xlu0 %2729
        %v2732 = vmul.f32 %v2723, %v2730
        %v2733 = vmul.f32 %v2724, %v2730
        %s2734 = scalar_lea.vmem %s13, 8
        %v2735 = vld [vmem:[%s2734] sm:$0xff]
        %2737 = vset.pattern.permute.xlu0 0
        %2738 = vperm.xlu0 %2737, %v2735
        %v2739 = vpop.permute.xlu0 %2738
        %v2741 = vadd.f32 %v2732, %v2739
        %v2742 = vadd.f32 %v2733, %v2739
        %v2743 = vmax.f32 %v2741, 0.0
        %v2744 = vmax.f32 %v2742, 0.0
        %v2745 = vld [vmem:[%s10] sm:$0xff]
        %v2746 = vld [vmem:[%s10 + $0x8] sm:$0xff]
        %v2747 = vld [vmem:[%s10 + $0x10] sm:$0xff]
        %v2748 = vld [vmem:[%s10 + $0x18] sm:$0xff]
        %v2749 = vld [vmem:[%s10 + $0x20] sm:$0xff]
        %v2750 = vld [vmem:[%s10 + $0x28] sm:$0xff]
        %v2751 = vld [vmem:[%s10 + $0x30] sm:$0xff]
        %v2752 = vld [vmem:[%s10 + $0x38] sm:$0xff]
        %v2753 = vld [vmem:[%s10 + $0x40] sm:$0xff]
        %v2755 = vsel %vm478, %v2746, 0
        %2757 = vmatprep.subr.mxu0 0.0
        %2758 = vmatpush1.msra.mxu0 0.0
        %2759 = vmatprep.subr.mxu0 0.0
        %2760 = vmatpush1.msra.mxu0 0.0
        %2761 = vmatprep.subr.mxu0 0.0
        %2762 = vmatpush1.msra.mxu0 0.0
        %2763 = vmatprep.subr.mxu0 0.0
        %2764 = vmatpush1.msra.mxu0 0.0
        %2765 = vmatprep.subr.mxu0 0.0
        %2766 = vmatpush1.msra.mxu0 0.0
        %2767 = vmatprep.subr.mxu0 0.0
        %2768 = vmatpush1.msra.mxu0 0.0
        %2769 = vmatprep.subr.mxu0 0.0
        %2770 = vmatpush1.msra.mxu0 0.0
        %2771 = vmatprep.subr.mxu0 0.0
        %2772 = vmatpush1.msra.mxu0 0.0
        %2773 = vmatprep.subr.mxu0 0.0
        %2774 = vmatpush1.msra.mxu0 0.0
        %2775 = vmatprep.subr.mxu0 0.0
        %2776 = vmatpush1.msra.mxu0 0.0
        %2777 = vmatprep.subr.mxu0 0.0
        %2778 = vmatpush1.msra.mxu0 0.0
        %2779 = vmatprep.subr.mxu0 0.0
        %2780 = vmatpush1.msra.mxu0 0.0
        %2781 = vmatprep.subr.mxu0 0.0
        %2782 = vmatpush1.msra.mxu0 0.0
        %2783 = vmatprep.subr.mxu0 0.0
        %2784 = vmatpush1.msra.mxu0 0.0
        %2785 = vmatprep.subr.mxu0 0.0
        %2786 = vmatpush1.msra.mxu0 0.0
        %2787 = vmatprep.subr.mxu0 %v827
        %2788 = vmatpush1.msra.mxu0 %v826
        %2789 = vmatprep.subr.mxu0 0.0
        %2790 = vmatpush2.msra.mxu0 0.0
        %2791 = vmatprep.subr.mxu0 0.0
        %2792 = vmatpush2.msra.mxu0 0.0
        %2793 = vmatprep.subr.mxu0 0.0
        %2794 = vmatpush2.msra.mxu0 0.0
        %2795 = vmatprep.subr.mxu0 0.0
        %2796 = vmatpush2.msra.mxu0 0.0
        %2797 = vmatprep.subr.mxu0 0.0
        %2798 = vmatpush2.msra.mxu0 0.0
        %2799 = vmatprep.subr.mxu0 0.0
        %2800 = vmatpush2.msra.mxu0 0.0
        %2801 = vmatprep.subr.mxu0 0.0
        %2802 = vmatpush2.msra.mxu0 0.0
        %2803 = vmatprep.subr.mxu0 0.0
        %2804 = vmatpush2.msra.mxu0 0.0
        %2805 = vmatprep.subr.mxu0 0.0
        %2806 = vmatpush2.msra.mxu0 0.0
        %2807 = vmatprep.subr.mxu0 0.0
        %2808 = vmatpush2.msra.mxu0 0.0
        %2809 = vmatprep.subr.mxu0 0.0
        %2810 = vmatpush2.msra.mxu0 0.0
        %2811 = vmatprep.subr.mxu0 0.0
        %2812 = vmatpush2.msra.mxu0 0.0
        %2813 = vmatprep.subr.mxu0 0.0
        %2814 = vmatpush2.msra.mxu0 0.0
        %2815 = vmatprep.subr.mxu0 0.0
        %2816 = vmatpush2.msra.mxu0 0.0
        %2817 = vmatprep.subr.mxu0 0.0
        %2818 = vmatpush2.msra.mxu0 0.0
        %2819 = vmatprep.subr.mxu0 0.0
        %2820 = vmatpush2.msra.mxu0 0.0
        %2821 = vmatprep.mubr.f32.mxu0 0.0
        %2822 = vmatmul.mubr.f32.gmra.mxu0 %v2755
        %v2823 = vpop.f32.mrf.mxu0
        %v2824 = vadd.f32 0.0, %v2823
        %v2825 = vpop.f32.mrf.mxu0
        %v2826 = vadd.f32 0.0, %v2825
        %2827 = vdwg.mxu0
        %v2829 = vsel %vm478, %v2745, 0
        %2831 = vmatprep.subr.mxu0 0.0
        %2832 = vmatpush1.msra.mxu0 0.0
        %2833 = vmatprep.subr.mxu0 0.0
        %2834 = vmatpush1.msra.mxu0 0.0
        %2835 = vmatprep.subr.mxu0 0.0
        %2836 = vmatpush1.msra.mxu0 0.0
        %2837 = vmatprep.subr.mxu0 0.0
        %2838 = vmatpush1.msra.mxu0 0.0
        %2839 = vmatprep.subr.mxu0 0.0
        %2840 = vmatpush1.msra.mxu0 0.0
        %2841 = vmatprep.subr.mxu0 0.0
        %2842 = vmatpush1.msra.mxu0 0.0
        %2843 = vmatprep.subr.mxu0 0.0
        %2844 = vmatpush1.msra.mxu0 0.0
        %2845 = vmatprep.subr.mxu0 0.0
        %2846 = vmatpush1.msra.mxu0 0.0
        %2847 = vmatprep.subr.mxu0 0.0
        %2848 = vmatpush1.msra.mxu0 0.0
        %2849 = vmatprep.subr.mxu0 0.0
        %2850 = vmatpush1.msra.mxu0 0.0
        %2851 = vmatprep.subr.mxu0 0.0
        %2852 = vmatpush1.msra.mxu0 0.0
        %2853 = vmatprep.subr.mxu0 0.0
        %2854 = vmatpush1.msra.mxu0 0.0
        %2855 = vmatprep.subr.mxu0 0.0
        %2856 = vmatpush1.msra.mxu0 0.0
        %2857 = vmatprep.subr.mxu0 0.0
        %2858 = vmatpush1.msra.mxu0 0.0
        %2859 = vmatprep.subr.mxu0 0.0
        %2860 = vmatpush1.msra.mxu0 0.0
        %2861 = vmatprep.subr.mxu0 %v807
        %2862 = vmatpush1.msra.mxu0 %v806
        %2863 = vmatprep.subr.mxu0 0.0
        %2864 = vmatpush2.msra.mxu0 0.0
        %2865 = vmatprep.subr.mxu0 0.0
        %2866 = vmatpush2.msra.mxu0 0.0
        %2867 = vmatprep.subr.mxu0 0.0
        %2868 = vmatpush2.msra.mxu0 0.0
        %2869 = vmatprep.subr.mxu0 0.0
        %2870 = vmatpush2.msra.mxu0 0.0
        %2871 = vmatprep.subr.mxu0 0.0
        %2872 = vmatpush2.msra.mxu0 0.0
        %2873 = vmatprep.subr.mxu0 0.0
        %2874 = vmatpush2.msra.mxu0 0.0
        %2875 = vmatprep.subr.mxu0 0.0
        %2876 = vmatpush2.msra.mxu0 0.0
        %2877 = vmatprep.subr.mxu0 0.0
        %2878 = vmatpush2.msra.mxu0 0.0
        %2879 = vmatprep.subr.mxu0 0.0
        %2880 = vmatpush2.msra.mxu0 0.0
        %2881 = vmatprep.subr.mxu0 0.0
        %2882 = vmatpush2.msra.mxu0 0.0
        %2883 = vmatprep.subr.mxu0 0.0
        %2884 = vmatpush2.msra.mxu0 0.0
        %2885 = vmatprep.subr.mxu0 0.0
        %2886 = vmatpush2.msra.mxu0 0.0
        %2887 = vmatprep.subr.mxu0 0.0
        %2888 = vmatpush2.msra.mxu0 0.0
        %2889 = vmatprep.subr.mxu0 0.0
        %2890 = vmatpush2.msra.mxu0 0.0
        %2891 = vmatprep.subr.mxu0 0.0
        %2892 = vmatpush2.msra.mxu0 0.0
        %2893 = vmatprep.subr.mxu0 0.0
        %2894 = vmatpush2.msra.mxu0 0.0
        %2895 = vmatprep.mubr.f32.mxu0 0.0
        %2896 = vmatmul.mubr.f32.gmra.mxu0 %v2829
        %v2897 = vpop.f32.mrf.mxu0
        %v2898 = vadd.f32 %v2824, %v2897
        %v2899 = vpop.f32.mrf.mxu0
        %v2900 = vadd.f32 %v2826, %v2899
        %2901 = vdwg.mxu0
        %v2903 = vsel %vm478, %v2747, 0
        %2905 = vmatprep.subr.mxu0 0.0
        %2906 = vmatpush1.msra.mxu0 0.0
        %2907 = vmatprep.subr.mxu0 0.0
        %2908 = vmatpush1.msra.mxu0 0.0
        %2909 = vmatprep.subr.mxu0 0.0
        %2910 = vmatpush1.msra.mxu0 0.0
        %2911 = vmatprep.subr.mxu0 0.0
        %2912 = vmatpush1.msra.mxu0 0.0
        %2913 = vmatprep.subr.mxu0 0.0
        %2914 = vmatpush1.msra.mxu0 0.0
        %2915 = vmatprep.subr.mxu0 0.0
        %2916 = vmatpush1.msra.mxu0 0.0
        %2917 = vmatprep.subr.mxu0 0.0
        %2918 = vmatpush1.msra.mxu0 0.0
        %2919 = vmatprep.subr.mxu0 0.0
        %2920 = vmatpush1.msra.mxu0 0.0
        %2921 = vmatprep.subr.mxu0 0.0
        %2922 = vmatpush1.msra.mxu0 0.0
        %2923 = vmatprep.subr.mxu0 0.0
        %2924 = vmatpush1.msra.mxu0 0.0
        %2925 = vmatprep.subr.mxu0 0.0
        %2926 = vmatpush1.msra.mxu0 0.0
        %2927 = vmatprep.subr.mxu0 0.0
        %2928 = vmatpush1.msra.mxu0 0.0
        %2929 = vmatprep.subr.mxu0 0.0
        %2930 = vmatpush1.msra.mxu0 0.0
        %2931 = vmatprep.subr.mxu0 0.0
        %2932 = vmatpush1.msra.mxu0 0.0
        %2933 = vmatprep.subr.mxu0 0.0
        %2934 = vmatpush1.msra.mxu0 0.0
        %2935 = vmatprep.subr.mxu0 %v995
        %2936 = vmatpush1.msra.mxu0 %v994
        %2937 = vmatprep.subr.mxu0 0.0
        %2938 = vmatpush2.msra.mxu0 0.0
        %2939 = vmatprep.subr.mxu0 0.0
        %2940 = vmatpush2.msra.mxu0 0.0
        %2941 = vmatprep.subr.mxu0 0.0
        %2942 = vmatpush2.msra.mxu0 0.0
        %2943 = vmatprep.subr.mxu0 0.0
        %2944 = vmatpush2.msra.mxu0 0.0
        %2945 = vmatprep.subr.mxu0 0.0
        %2946 = vmatpush2.msra.mxu0 0.0
        %2947 = vmatprep.subr.mxu0 0.0
        %2948 = vmatpush2.msra.mxu0 0.0
        %2949 = vmatprep.subr.mxu0 0.0
        %2950 = vmatpush2.msra.mxu0 0.0
        %2951 = vmatprep.subr.mxu0 0.0
        %2952 = vmatpush2.msra.mxu0 0.0
        %2953 = vmatprep.subr.mxu0 0.0
        %2954 = vmatpush2.msra.mxu0 0.0
        %2955 = vmatprep.subr.mxu0 0.0
        %2956 = vmatpush2.msra.mxu0 0.0
        %2957 = vmatprep.subr.mxu0 0.0
        %2958 = vmatpush2.msra.mxu0 0.0
        %2959 = vmatprep.subr.mxu0 0.0
        %2960 = vmatpush2.msra.mxu0 0.0
        %2961 = vmatprep.subr.mxu0 0.0
        %2962 = vmatpush2.msra.mxu0 0.0
        %2963 = vmatprep.subr.mxu0 0.0
        %2964 = vmatpush2.msra.mxu0 0.0
        %2965 = vmatprep.subr.mxu0 0.0
        %2966 = vmatpush2.msra.mxu0 0.0
        %2967 = vmatprep.subr.mxu0 0.0
        %2968 = vmatpush2.msra.mxu0 0.0
        %2969 = vmatprep.mubr.f32.mxu0 0.0
        %2970 = vmatmul.mubr.f32.gmra.mxu0 %v2903
        %v2971 = vpop.f32.mrf.mxu0
        %v2972 = vadd.f32 0.0, %v2971
        %v2973 = vpop.f32.mrf.mxu0
        %v2974 = vadd.f32 0.0, %v2973
        %2975 = vdwg.mxu0
        %v2976 = vadd.f32 %v2898, %v2972
        %v2977 = vadd.f32 %v2900, %v2974
        %v2979 = vsel %vm478, %v2748, 0
        %2981 = vmatprep.subr.mxu0 0.0
        %2982 = vmatpush1.msra.mxu0 0.0
        %2983 = vmatprep.subr.mxu0 0.0
        %2984 = vmatpush1.msra.mxu0 0.0
        %2985 = vmatprep.subr.mxu0 0.0
        %2986 = vmatpush1.msra.mxu0 0.0
        %2987 = vmatprep.subr.mxu0 0.0
        %2988 = vmatpush1.msra.mxu0 0.0
        %2989 = vmatprep.subr.mxu0 0.0
        %2990 = vmatpush1.msra.mxu0 0.0
        %2991 = vmatprep.subr.mxu0 0.0
        %2992 = vmatpush1.msra.mxu0 0.0
        %2993 = vmatprep.subr.mxu0 0.0
        %2994 = vmatpush1.msra.mxu0 0.0
        %2995 = vmatprep.subr.mxu0 0.0
        %2996 = vmatpush1.msra.mxu0 0.0
        %2997 = vmatprep.subr.mxu0 0.0
        %2998 = vmatpush1.msra.mxu0 0.0
        %2999 = vmatprep.subr.mxu0 0.0
        %3000 = vmatpush1.msra.mxu0 0.0
        %3001 = vmatprep.subr.mxu0 0.0
        %3002 = vmatpush1.msra.mxu0 0.0
        %3003 = vmatprep.subr.mxu0 0.0
        %3004 = vmatpush1.msra.mxu0 0.0
        %3005 = vmatprep.subr.mxu0 0.0
        %3006 = vmatpush1.msra.mxu0 0.0
        %3007 = vmatprep.subr.mxu0 0.0
        %3008 = vmatpush1.msra.mxu0 0.0
        %3009 = vmatprep.subr.mxu0 0.0
        %3010 = vmatpush1.msra.mxu0 0.0
        %3011 = vmatprep.subr.mxu0 %v1091
        %3012 = vmatpush1.msra.mxu0 %v1090
        %3013 = vmatprep.subr.mxu0 0.0
        %3014 = vmatpush2.msra.mxu0 0.0
        %3015 = vmatprep.subr.mxu0 0.0
        %3016 = vmatpush2.msra.mxu0 0.0
        %3017 = vmatprep.subr.mxu0 0.0
        %3018 = vmatpush2.msra.mxu0 0.0
        %3019 = vmatprep.subr.mxu0 0.0
        %3020 = vmatpush2.msra.mxu0 0.0
        %3021 = vmatprep.subr.mxu0 0.0
        %3022 = vmatpush2.msra.mxu0 0.0
        %3023 = vmatprep.subr.mxu0 0.0
        %3024 = vmatpush2.msra.mxu0 0.0
        %3025 = vmatprep.subr.mxu0 0.0
        %3026 = vmatpush2.msra.mxu0 0.0
        %3027 = vmatprep.subr.mxu0 0.0
        %3028 = vmatpush2.msra.mxu0 0.0
        %3029 = vmatprep.subr.mxu0 0.0
        %3030 = vmatpush2.msra.mxu0 0.0
        %3031 = vmatprep.subr.mxu0 0.0
        %3032 = vmatpush2.msra.mxu0 0.0
        %3033 = vmatprep.subr.mxu0 0.0
        %3034 = vmatpush2.msra.mxu0 0.0
        %3035 = vmatprep.subr.mxu0 0.0
        %3036 = vmatpush2.msra.mxu0 0.0
        %3037 = vmatprep.subr.mxu0 0.0
        %3038 = vmatpush2.msra.mxu0 0.0
        %3039 = vmatprep.subr.mxu0 0.0
        %3040 = vmatpush2.msra.mxu0 0.0
        %3041 = vmatprep.subr.mxu0 0.0
        %3042 = vmatpush2.msra.mxu0 0.0
        %3043 = vmatprep.subr.mxu0 0.0
        %3044 = vmatpush2.msra.mxu0 0.0
        %3045 = vmatprep.mubr.f32.mxu0 0.0
        %3046 = vmatmul.mubr.f32.gmra.mxu0 %v2979
        %v3047 = vpop.f32.mrf.mxu0
        %v3048 = vadd.f32 0.0, %v3047
        %v3049 = vpop.f32.mrf.mxu0
        %v3050 = vadd.f32 0.0, %v3049
        %3051 = vdwg.mxu0
        %v3052 = vadd.f32 %v2976, %v3048
        %v3053 = vadd.f32 %v2977, %v3050
        %v3055 = vsel %vm478, %v2749, 0
        %3057 = vmatprep.subr.mxu0 0.0
        %3058 = vmatpush1.msra.mxu0 0.0
        %3059 = vmatprep.subr.mxu0 0.0
        %3060 = vmatpush1.msra.mxu0 0.0
        %3061 = vmatprep.subr.mxu0 0.0
        %3062 = vmatpush1.msra.mxu0 0.0
        %3063 = vmatprep.subr.mxu0 0.0
        %3064 = vmatpush1.msra.mxu0 0.0
        %3065 = vmatprep.subr.mxu0 0.0
        %3066 = vmatpush1.msra.mxu0 0.0
        %3067 = vmatprep.subr.mxu0 0.0
        %3068 = vmatpush1.msra.mxu0 0.0
        %3069 = vmatprep.subr.mxu0 0.0
        %3070 = vmatpush1.msra.mxu0 0.0
        %3071 = vmatprep.subr.mxu0 0.0
        %3072 = vmatpush1.msra.mxu0 0.0
        %3073 = vmatprep.subr.mxu0 0.0
        %3074 = vmatpush1.msra.mxu0 0.0
        %3075 = vmatprep.subr.mxu0 0.0
        %3076 = vmatpush1.msra.mxu0 0.0
        %3077 = vmatprep.subr.mxu0 0.0
        %3078 = vmatpush1.msra.mxu0 0.0
        %3079 = vmatprep.subr.mxu0 0.0
        %3080 = vmatpush1.msra.mxu0 0.0
        %3081 = vmatprep.subr.mxu0 0.0
        %3082 = vmatpush1.msra.mxu0 0.0
        %3083 = vmatprep.subr.mxu0 0.0
        %3084 = vmatpush1.msra.mxu0 0.0
        %3085 = vmatprep.subr.mxu0 0.0
        %3086 = vmatpush1.msra.mxu0 0.0
        %3087 = vmatprep.subr.mxu0 %v467
        %3088 = vmatpush1.msra.mxu0 %v466
        %3089 = vmatprep.subr.mxu0 0.0
        %3090 = vmatpush2.msra.mxu0 0.0
        %3091 = vmatprep.subr.mxu0 0.0
        %3092 = vmatpush2.msra.mxu0 0.0
        %3093 = vmatprep.subr.mxu0 0.0
        %3094 = vmatpush2.msra.mxu0 0.0
        %3095 = vmatprep.subr.mxu0 0.0
        %3096 = vmatpush2.msra.mxu0 0.0
        %3097 = vmatprep.subr.mxu0 0.0
        %3098 = vmatpush2.msra.mxu0 0.0
        %3099 = vmatprep.subr.mxu0 0.0
        %3100 = vmatpush2.msra.mxu0 0.0
        %3101 = vmatprep.subr.mxu0 0.0
        %3102 = vmatpush2.msra.mxu0 0.0
        %3103 = vmatprep.subr.mxu0 0.0
        %3104 = vmatpush2.msra.mxu0 0.0
        %3105 = vmatprep.subr.mxu0 0.0
        %3106 = vmatpush2.msra.mxu0 0.0
        %3107 = vmatprep.subr.mxu0 0.0
        %3108 = vmatpush2.msra.mxu0 0.0
        %3109 = vmatprep.subr.mxu0 0.0
        %3110 = vmatpush2.msra.mxu0 0.0
        %3111 = vmatprep.subr.mxu0 0.0
        %3112 = vmatpush2.msra.mxu0 0.0
        %3113 = vmatprep.subr.mxu0 0.0
        %3114 = vmatpush2.msra.mxu0 0.0
        %3115 = vmatprep.subr.mxu0 0.0
        %3116 = vmatpush2.msra.mxu0 0.0
        %3117 = vmatprep.subr.mxu0 0.0
        %3118 = vmatpush2.msra.mxu0 0.0
        %3119 = vmatprep.subr.mxu0 0.0
        %3120 = vmatpush2.msra.mxu0 0.0
        %3121 = vmatprep.mubr.f32.mxu0 0.0
        %3122 = vmatmul.mubr.f32.gmra.mxu0 %v3055
        %v3123 = vpop.f32.mrf.mxu0
        %v3124 = vadd.f32 0.0, %v3123
        %v3125 = vpop.f32.mrf.mxu0
        %v3126 = vadd.f32 0.0, %v3125
        %3127 = vdwg.mxu0
        %v3128 = vadd.f32 %v3052, %v3124
        %v3129 = vadd.f32 %v3053, %v3126
        %v3131 = vsel %vm478, %v2750, 0
        %3133 = vmatprep.subr.mxu0 0.0
        %3134 = vmatpush1.msra.mxu0 0.0
        %3135 = vmatprep.subr.mxu0 0.0
        %3136 = vmatpush1.msra.mxu0 0.0
        %3137 = vmatprep.subr.mxu0 0.0
        %3138 = vmatpush1.msra.mxu0 0.0
        %3139 = vmatprep.subr.mxu0 0.0
        %3140 = vmatpush1.msra.mxu0 0.0
        %3141 = vmatprep.subr.mxu0 0.0
        %3142 = vmatpush1.msra.mxu0 0.0
        %3143 = vmatprep.subr.mxu0 0.0
        %3144 = vmatpush1.msra.mxu0 0.0
        %3145 = vmatprep.subr.mxu0 0.0
        %3146 = vmatpush1.msra.mxu0 0.0
        %3147 = vmatprep.subr.mxu0 0.0
        %3148 = vmatpush1.msra.mxu0 0.0
        %3149 = vmatprep.subr.mxu0 0.0
        %3150 = vmatpush1.msra.mxu0 0.0
        %3151 = vmatprep.subr.mxu0 0.0
        %3152 = vmatpush1.msra.mxu0 0.0
        %3153 = vmatprep.subr.mxu0 0.0
        %3154 = vmatpush1.msra.mxu0 0.0
        %3155 = vmatprep.subr.mxu0 0.0
        %3156 = vmatpush1.msra.mxu0 0.0
        %3157 = vmatprep.subr.mxu0 0.0
        %3158 = vmatpush1.msra.mxu0 0.0
        %3159 = vmatprep.subr.mxu0 0.0
        %3160 = vmatpush1.msra.mxu0 0.0
        %3161 = vmatprep.subr.mxu0 0.0
        %3162 = vmatpush1.msra.mxu0 0.0
        %3163 = vmatprep.subr.mxu0 %v1263
        %3164 = vmatpush1.msra.mxu0 %v1262
        %3165 = vmatprep.subr.mxu0 0.0
        %3166 = vmatpush2.msra.mxu0 0.0
        %3167 = vmatprep.subr.mxu0 0.0
        %3168 = vmatpush2.msra.mxu0 0.0
        %3169 = vmatprep.subr.mxu0 0.0
        %3170 = vmatpush2.msra.mxu0 0.0
        %3171 = vmatprep.subr.mxu0 0.0
        %3172 = vmatpush2.msra.mxu0 0.0
        %3173 = vmatprep.subr.mxu0 0.0
        %3174 = vmatpush2.msra.mxu0 0.0
        %3175 = vmatprep.subr.mxu0 0.0
        %3176 = vmatpush2.msra.mxu0 0.0
        %3177 = vmatprep.subr.mxu0 0.0
        %3178 = vmatpush2.msra.mxu0 0.0
        %3179 = vmatprep.subr.mxu0 0.0
        %3180 = vmatpush2.msra.mxu0 0.0
        %3181 = vmatprep.subr.mxu0 0.0
        %3182 = vmatpush2.msra.mxu0 0.0
        %3183 = vmatprep.subr.mxu0 0.0
        %3184 = vmatpush2.msra.mxu0 0.0
        %3185 = vmatprep.subr.mxu0 0.0
        %3186 = vmatpush2.msra.mxu0 0.0
        %3187 = vmatprep.subr.mxu0 0.0
        %3188 = vmatpush2.msra.mxu0 0.0
        %3189 = vmatprep.subr.mxu0 0.0
        %3190 = vmatpush2.msra.mxu0 0.0
        %3191 = vmatprep.subr.mxu0 0.0
        %3192 = vmatpush2.msra.mxu0 0.0
        %3193 = vmatprep.subr.mxu0 0.0
        %3194 = vmatpush2.msra.mxu0 0.0
        %3195 = vmatprep.subr.mxu0 0.0
        %3196 = vmatpush2.msra.mxu0 0.0
        %3197 = vmatprep.mubr.f32.mxu0 0.0
        %3198 = vmatmul.mubr.f32.gmra.mxu0 %v3131
        %v3199 = vpop.f32.mrf.mxu0
        %v3200 = vadd.f32 0.0, %v3199
        %v3201 = vpop.f32.mrf.mxu0
        %v3202 = vadd.f32 0.0, %v3201
        %3203 = vdwg.mxu0
        %v3204 = vadd.f32 %v3128, %v3200
        %v3205 = vadd.f32 %v3129, %v3202
        %v3207 = vsel %vm478, %v2751, 0
        %3209 = vmatprep.subr.mxu0 0.0
        %3210 = vmatpush1.msra.mxu0 0.0
        %3211 = vmatprep.subr.mxu0 0.0
        %3212 = vmatpush1.msra.mxu0 0.0
        %3213 = vmatprep.subr.mxu0 0.0
        %3214 = vmatpush1.msra.mxu0 0.0
        %3215 = vmatprep.subr.mxu0 0.0
        %3216 = vmatpush1.msra.mxu0 0.0
        %3217 = vmatprep.subr.mxu0 0.0
        %3218 = vmatpush1.msra.mxu0 0.0
        %3219 = vmatprep.subr.mxu0 0.0
        %3220 = vmatpush1.msra.mxu0 0.0
        %3221 = vmatprep.subr.mxu0 0.0
        %3222 = vmatpush1.msra.mxu0 0.0
        %3223 = vmatprep.subr.mxu0 0.0
        %3224 = vmatpush1.msra.mxu0 0.0
        %3225 = vmatprep.subr.mxu0 0.0
        %3226 = vmatpush1.msra.mxu0 0.0
        %3227 = vmatprep.subr.mxu0 0.0
        %3228 = vmatpush1.msra.mxu0 0.0
        %3229 = vmatprep.subr.mxu0 0.0
        %3230 = vmatpush1.msra.mxu0 0.0
        %3231 = vmatprep.subr.mxu0 0.0
        %3232 = vmatpush1.msra.mxu0 0.0
        %3233 = vmatprep.subr.mxu0 0.0
        %3234 = vmatpush1.msra.mxu0 0.0
        %3235 = vmatprep.subr.mxu0 0.0
        %3236 = vmatpush1.msra.mxu0 0.0
        %3237 = vmatprep.subr.mxu0 0.0
        %3238 = vmatpush1.msra.mxu0 0.0
        %3239 = vmatprep.subr.mxu0 %v1359
        %3240 = vmatpush1.msra.mxu0 %v1358
        %3241 = vmatprep.subr.mxu0 0.0
        %3242 = vmatpush2.msra.mxu0 0.0
        %3243 = vmatprep.subr.mxu0 0.0
        %3244 = vmatpush2.msra.mxu0 0.0
        %3245 = vmatprep.subr.mxu0 0.0
        %3246 = vmatpush2.msra.mxu0 0.0
        %3247 = vmatprep.subr.mxu0 0.0
        %3248 = vmatpush2.msra.mxu0 0.0
        %3249 = vmatprep.subr.mxu0 0.0
        %3250 = vmatpush2.msra.mxu0 0.0
        %3251 = vmatprep.subr.mxu0 0.0
        %3252 = vmatpush2.msra.mxu0 0.0
        %3253 = vmatprep.subr.mxu0 0.0
        %3254 = vmatpush2.msra.mxu0 0.0
        %3255 = vmatprep.subr.mxu0 0.0
        %3256 = vmatpush2.msra.mxu0 0.0
        %3257 = vmatprep.subr.mxu0 0.0
        %3258 = vmatpush2.msra.mxu0 0.0
        %3259 = vmatprep.subr.mxu0 0.0
        %3260 = vmatpush2.msra.mxu0 0.0
        %3261 = vmatprep.subr.mxu0 0.0
        %3262 = vmatpush2.msra.mxu0 0.0
        %3263 = vmatprep.subr.mxu0 0.0
        %3264 = vmatpush2.msra.mxu0 0.0
        %3265 = vmatprep.subr.mxu0 0.0
        %3266 = vmatpush2.msra.mxu0 0.0
        %3267 = vmatprep.subr.mxu0 0.0
        %3268 = vmatpush2.msra.mxu0 0.0
        %3269 = vmatprep.subr.mxu0 0.0
        %3270 = vmatpush2.msra.mxu0 0.0
        %3271 = vmatprep.subr.mxu0 0.0
        %3272 = vmatpush2.msra.mxu0 0.0
        %3273 = vmatprep.mubr.f32.mxu0 0.0
        %3274 = vmatmul.mubr.f32.gmra.mxu0 %v3207
        %v3275 = vpop.f32.mrf.mxu0
        %v3276 = vadd.f32 0.0, %v3275
        %v3277 = vpop.f32.mrf.mxu0
        %v3278 = vadd.f32 0.0, %v3277
        %3279 = vdwg.mxu0
        %v3280 = vadd.f32 %v3204, %v3276
        %v3281 = vadd.f32 %v3205, %v3278
        %v3283 = vsel %vm478, %v2752, 0
        %3285 = vmatprep.subr.mxu0 0.0
        %3286 = vmatpush1.msra.mxu0 0.0
        %3287 = vmatprep.subr.mxu0 0.0
        %3288 = vmatpush1.msra.mxu0 0.0
        %3289 = vmatprep.subr.mxu0 0.0
        %3290 = vmatpush1.msra.mxu0 0.0
        %3291 = vmatprep.subr.mxu0 0.0
        %3292 = vmatpush1.msra.mxu0 0.0
        %3293 = vmatprep.subr.mxu0 0.0
        %3294 = vmatpush1.msra.mxu0 0.0
        %3295 = vmatprep.subr.mxu0 0.0
        %3296 = vmatpush1.msra.mxu0 0.0
        %3297 = vmatprep.subr.mxu0 0.0
        %3298 = vmatpush1.msra.mxu0 0.0
        %3299 = vmatprep.subr.mxu0 0.0
        %3300 = vmatpush1.msra.mxu0 0.0
        %3301 = vmatprep.subr.mxu0 0.0
        %3302 = vmatpush1.msra.mxu0 0.0
        %3303 = vmatprep.subr.mxu0 0.0
        %3304 = vmatpush1.msra.mxu0 0.0
        %3305 = vmatprep.subr.mxu0 0.0
        %3306 = vmatpush1.msra.mxu0 0.0
        %3307 = vmatprep.subr.mxu0 0.0
        %3308 = vmatpush1.msra.mxu0 0.0
        %3309 = vmatprep.subr.mxu0 0.0
        %3310 = vmatpush1.msra.mxu0 0.0
        %3311 = vmatprep.subr.mxu0 0.0
        %3312 = vmatpush1.msra.mxu0 0.0
        %3313 = vmatprep.subr.mxu0 0.0
        %3314 = vmatpush1.msra.mxu0 0.0
        %3315 = vmatprep.subr.mxu0 %v1455
        %3316 = vmatpush1.msra.mxu0 %v1454
        %3317 = vmatprep.subr.mxu0 0.0
        %3318 = vmatpush2.msra.mxu0 0.0
        %3319 = vmatprep.subr.mxu0 0.0
        %3320 = vmatpush2.msra.mxu0 0.0
        %3321 = vmatprep.subr.mxu0 0.0
        %3322 = vmatpush2.msra.mxu0 0.0
        %3323 = vmatprep.subr.mxu0 0.0
        %3324 = vmatpush2.msra.mxu0 0.0
        %3325 = vmatprep.subr.mxu0 0.0
        %3326 = vmatpush2.msra.mxu0 0.0
        %3327 = vmatprep.subr.mxu0 0.0
        %3328 = vmatpush2.msra.mxu0 0.0
        %3329 = vmatprep.subr.mxu0 0.0
        %3330 = vmatpush2.msra.mxu0 0.0
        %3331 = vmatprep.subr.mxu0 0.0
        %3332 = vmatpush2.msra.mxu0 0.0
        %3333 = vmatprep.subr.mxu0 0.0
        %3334 = vmatpush2.msra.mxu0 0.0
        %3335 = vmatprep.subr.mxu0 0.0
        %3336 = vmatpush2.msra.mxu0 0.0
        %3337 = vmatprep.subr.mxu0 0.0
        %3338 = vmatpush2.msra.mxu0 0.0
        %3339 = vmatprep.subr.mxu0 0.0
        %3340 = vmatpush2.msra.mxu0 0.0
        %3341 = vmatprep.subr.mxu0 0.0
        %3342 = vmatpush2.msra.mxu0 0.0
        %3343 = vmatprep.subr.mxu0 0.0
        %3344 = vmatpush2.msra.mxu0 0.0
        %3345 = vmatprep.subr.mxu0 0.0
        %3346 = vmatpush2.msra.mxu0 0.0
        %3347 = vmatprep.subr.mxu0 0.0
        %3348 = vmatpush2.msra.mxu0 0.0
        %3349 = vmatprep.mubr.f32.mxu0 0.0
        %3350 = vmatmul.mubr.f32.gmra.mxu0 %v3283
        %v3351 = vpop.f32.mrf.mxu0
        %v3352 = vadd.f32 0.0, %v3351
        %v3353 = vpop.f32.mrf.mxu0
        %v3354 = vadd.f32 0.0, %v3353
        %3355 = vdwg.mxu0
        %v3356 = vadd.f32 %v3280, %v3352
        %v3357 = vadd.f32 %v3281, %v3354
        %v3359 = vsel %vm478, %v2753, 0
        %3361 = vmatprep.subr.mxu0 0.0
        %3362 = vmatpush1.msra.mxu0 0.0
        %3363 = vmatprep.subr.mxu0 0.0
        %3364 = vmatpush1.msra.mxu0 0.0
        %3365 = vmatprep.subr.mxu0 0.0
        %3366 = vmatpush1.msra.mxu0 0.0
        %3367 = vmatprep.subr.mxu0 0.0
        %3368 = vmatpush1.msra.mxu0 0.0
        %3369 = vmatprep.subr.mxu0 0.0
        %3370 = vmatpush1.msra.mxu0 0.0
        %3371 = vmatprep.subr.mxu0 0.0
        %3372 = vmatpush1.msra.mxu0 0.0
        %3373 = vmatprep.subr.mxu0 0.0
        %3374 = vmatpush1.msra.mxu0 0.0
        %3375 = vmatprep.subr.mxu0 0.0
        %3376 = vmatpush1.msra.mxu0 0.0
        %3377 = vmatprep.subr.mxu0 0.0
        %3378 = vmatpush1.msra.mxu0 0.0
        %3379 = vmatprep.subr.mxu0 0.0
        %3380 = vmatpush1.msra.mxu0 0.0
        %3381 = vmatprep.subr.mxu0 0.0
        %3382 = vmatpush1.msra.mxu0 0.0
        %3383 = vmatprep.subr.mxu0 0.0
        %3384 = vmatpush1.msra.mxu0 0.0
        %3385 = vmatprep.subr.mxu0 0.0
        %3386 = vmatpush1.msra.mxu0 0.0
        %3387 = vmatprep.subr.mxu0 0.0
        %3388 = vmatpush1.msra.mxu0 0.0
        %3389 = vmatprep.subr.mxu0 0.0
        %3390 = vmatpush1.msra.mxu0 0.0
        %3391 = vmatprep.subr.mxu0 %v1551
        %3392 = vmatpush1.msra.mxu0 %v1550
        %3393 = vmatprep.subr.mxu0 0.0
        %3394 = vmatpush2.msra.mxu0 0.0
        %3395 = vmatprep.subr.mxu0 0.0
        %3396 = vmatpush2.msra.mxu0 0.0
        %3397 = vmatprep.subr.mxu0 0.0
        %3398 = vmatpush2.msra.mxu0 0.0
        %3399 = vmatprep.subr.mxu0 0.0
        %3400 = vmatpush2.msra.mxu0 0.0
        %3401 = vmatprep.subr.mxu0 0.0
        %3402 = vmatpush2.msra.mxu0 0.0
        %3403 = vmatprep.subr.mxu0 0.0
        %3404 = vmatpush2.msra.mxu0 0.0
        %3405 = vmatprep.subr.mxu0 0.0
        %3406 = vmatpush2.msra.mxu0 0.0
        %3407 = vmatprep.subr.mxu0 0.0
        %3408 = vmatpush2.msra.mxu0 0.0
        %3409 = vmatprep.subr.mxu0 0.0
        %3410 = vmatpush2.msra.mxu0 0.0
        %3411 = vmatprep.subr.mxu0 0.0
        %3412 = vmatpush2.msra.mxu0 0.0
        %3413 = vmatprep.subr.mxu0 0.0
        %3414 = vmatpush2.msra.mxu0 0.0
        %3415 = vmatprep.subr.mxu0 0.0
        %3416 = vmatpush2.msra.mxu0 0.0
        %3417 = vmatprep.subr.mxu0 0.0
        %3418 = vmatpush2.msra.mxu0 0.0
        %3419 = vmatprep.subr.mxu0 0.0
        %3420 = vmatpush2.msra.mxu0 0.0
        %3421 = vmatprep.subr.mxu0 0.0
        %3422 = vmatpush2.msra.mxu0 0.0
        %3423 = vmatprep.subr.mxu0 0.0
        %3424 = vmatpush2.msra.mxu0 0.0
        %3425 = vmatprep.mubr.f32.mxu0 0.0
        %3426 = vmatmul.mubr.f32.gmra.mxu0 %v3359
        %v3427 = vpop.f32.mrf.mxu0
        %v3428 = vadd.f32 0.0, %v3427
        %v3429 = vpop.f32.mrf.mxu0
        %v3430 = vadd.f32 0.0, %v3429
        %3431 = vdwg.mxu0
        %v3432 = vadd.f32 %v3356, %v3428
        %v3433 = vadd.f32 %v3357, %v3430
        %s3434 = scalar_lea.vmem %s12, 16
        %v3435 = vld [vmem:[%s3434] sm:$0xff]
        %3437 = vset.pattern.permute.xlu0 0
        %3438 = vperm.xlu0 %3437, %v3435
        %v3439 = vpop.permute.xlu0 %3438
        %v3441 = vmul.f32 %v3432, %v3439
        %v3442 = vmul.f32 %v3433, %v3439
        %s3443 = scalar_lea.vmem %s13, 16
        %v3444 = vld [vmem:[%s3443] sm:$0xff]
        %3446 = vset.pattern.permute.xlu0 0
        %3447 = vperm.xlu0 %3446, %v3444
        %v3448 = vpop.permute.xlu0 %3447
        %v3450 = vadd.f32 %v3441, %v3448
        %v3451 = vadd.f32 %v3442, %v3448
        %v3452 = vmax.f32 %v3450, 0.0
        %v3453 = vmax.f32 %v3451, 0.0
        %v3454 = vld [vmem:[%s11] sm:$0xff]
        %v3455 = vld [vmem:[%s11 + $0x8] sm:$0xff]
        %v3456 = vld [vmem:[%s11 + $0x10] sm:$0xff]
        %v3457 = vld [vmem:[%s11 + $0x18] sm:$0xff]
        %v3458 = vld [vmem:[%s11 + $0x20] sm:$0xff]
        %v3459 = vld [vmem:[%s11 + $0x28] sm:$0xff]
        %v3460 = vld [vmem:[%s11 + $0x30] sm:$0xff]
        %v3461 = vld [vmem:[%s11 + $0x38] sm:$0xff]
        %v3462 = vld [vmem:[%s11 + $0x40] sm:$0xff]
        %3464 = vrot.lane.b32.xlu0 %v3453, 17
        %v3465 = vpop.permute.xlu0 %3464
        %3468 = vrot.lane.b32.xlu0 %v3452, 17
        %v3469 = vpop.permute.xlu0 %3468
        %v3470 = vsel %vm793, %v3469, %v3465
        %v3473 = vsel %vm793, %v3465, %v3469
        %v3474 = vmul.f32 %v3473, %v801
        %v3475 = vmul.f32 %v3470, %v805
        %3476 = vrot.lane.b32.xlu0 %v3453, 16
        %v3477 = vpop.permute.xlu0 %3476
        %3479 = vrot.lane.b32.xlu0 %v3452, 16
        %v3480 = vpop.permute.xlu0 %3479
        %v3481 = vsel %vm813, %v3480, %v3477
        %v3484 = vsel %vm813, %v3477, %v3480
        %v3485 = vmul.f32 %v3484, %v821
        %v3486 = vmul.f32 %v3481, %v825
        %v3488 = vsel %vm478, %v3455, 0
        %3490 = vmatprep.subr.mxu0 0.0
        %3491 = vmatpush1.msra.mxu0 0.0
        %3492 = vmatprep.subr.mxu0 0.0
        %3493 = vmatpush1.msra.mxu0 0.0
        %3494 = vmatprep.subr.mxu0 0.0
        %3495 = vmatpush1.msra.mxu0 0.0
        %3496 = vmatprep.subr.mxu0 0.0
        %3497 = vmatpush1.msra.mxu0 0.0
        %3498 = vmatprep.subr.mxu0 0.0
        %3499 = vmatpush1.msra.mxu0 0.0
        %3500 = vmatprep.subr.mxu0 0.0
        %3501 = vmatpush1.msra.mxu0 0.0
        %3502 = vmatprep.subr.mxu0 0.0
        %3503 = vmatpush1.msra.mxu0 0.0
        %3504 = vmatprep.subr.mxu0 0.0
        %3505 = vmatpush1.msra.mxu0 0.0
        %3506 = vmatprep.subr.mxu0 0.0
        %3507 = vmatpush1.msra.mxu0 0.0
        %3508 = vmatprep.subr.mxu0 0.0
        %3509 = vmatpush1.msra.mxu0 0.0
        %3510 = vmatprep.subr.mxu0 0.0
        %3511 = vmatpush1.msra.mxu0 0.0
        %3512 = vmatprep.subr.mxu0 0.0
        %3513 = vmatpush1.msra.mxu0 0.0
        %3514 = vmatprep.subr.mxu0 0.0
        %3515 = vmatpush1.msra.mxu0 0.0
        %3516 = vmatprep.subr.mxu0 0.0
        %3517 = vmatpush1.msra.mxu0 0.0
        %3518 = vmatprep.subr.mxu0 0.0
        %3519 = vmatpush1.msra.mxu0 0.0
        %3520 = vmatprep.subr.mxu0 %v3486
        %3521 = vmatpush1.msra.mxu0 %v3485
        %3522 = vmatprep.subr.mxu0 0.0
        %3523 = vmatpush2.msra.mxu0 0.0
        %3524 = vmatprep.subr.mxu0 0.0
        %3525 = vmatpush2.msra.mxu0 0.0
        %3526 = vmatprep.subr.mxu0 0.0
        %3527 = vmatpush2.msra.mxu0 0.0
        %3528 = vmatprep.subr.mxu0 0.0
        %3529 = vmatpush2.msra.mxu0 0.0
        %3530 = vmatprep.subr.mxu0 0.0
        %3531 = vmatpush2.msra.mxu0 0.0
        %3532 = vmatprep.subr.mxu0 0.0
        %3533 = vmatpush2.msra.mxu0 0.0
        %3534 = vmatprep.subr.mxu0 0.0
        %3535 = vmatpush2.msra.mxu0 0.0
        %3536 = vmatprep.subr.mxu0 0.0
        %3537 = vmatpush2.msra.mxu0 0.0
        %3538 = vmatprep.subr.mxu0 0.0
        %3539 = vmatpush2.msra.mxu0 0.0
        %3540 = vmatprep.subr.mxu0 0.0
        %3541 = vmatpush2.msra.mxu0 0.0
        %3542 = vmatprep.subr.mxu0 0.0
        %3543 = vmatpush2.msra.mxu0 0.0
        %3544 = vmatprep.subr.mxu0 0.0
        %3545 = vmatpush2.msra.mxu0 0.0
        %3546 = vmatprep.subr.mxu0 0.0
        %3547 = vmatpush2.msra.mxu0 0.0
        %3548 = vmatprep.subr.mxu0 0.0
        %3549 = vmatpush2.msra.mxu0 0.0
        %3550 = vmatprep.subr.mxu0 0.0
        %3551 = vmatpush2.msra.mxu0 0.0
        %3552 = vmatprep.subr.mxu0 0.0
        %3553 = vmatpush2.msra.mxu0 0.0
        %3554 = vmatprep.mubr.f32.mxu0 0.0
        %3555 = vmatmul.mubr.f32.gmra.mxu0 %v3488
        %v3556 = vpop.f32.mrf.mxu0
        %v3557 = vadd.f32 0.0, %v3556
        %v3558 = vpop.f32.mrf.mxu0
        %v3559 = vadd.f32 0.0, %v3558
        %3560 = vdwg.mxu0
        %v3562 = vsel %vm478, %v3454, 0
        %3564 = vmatprep.subr.mxu0 0.0
        %3565 = vmatpush1.msra.mxu0 0.0
        %3566 = vmatprep.subr.mxu0 0.0
        %3567 = vmatpush1.msra.mxu0 0.0
        %3568 = vmatprep.subr.mxu0 0.0
        %3569 = vmatpush1.msra.mxu0 0.0
        %3570 = vmatprep.subr.mxu0 0.0
        %3571 = vmatpush1.msra.mxu0 0.0
        %3572 = vmatprep.subr.mxu0 0.0
        %3573 = vmatpush1.msra.mxu0 0.0
        %3574 = vmatprep.subr.mxu0 0.0
        %3575 = vmatpush1.msra.mxu0 0.0
        %3576 = vmatprep.subr.mxu0 0.0
        %3577 = vmatpush1.msra.mxu0 0.0
        %3578 = vmatprep.subr.mxu0 0.0
        %3579 = vmatpush1.msra.mxu0 0.0
        %3580 = vmatprep.subr.mxu0 0.0
        %3581 = vmatpush1.msra.mxu0 0.0
        %3582 = vmatprep.subr.mxu0 0.0
        %3583 = vmatpush1.msra.mxu0 0.0
        %3584 = vmatprep.subr.mxu0 0.0
        %3585 = vmatpush1.msra.mxu0 0.0
        %3586 = vmatprep.subr.mxu0 0.0
        %3587 = vmatpush1.msra.mxu0 0.0
        %3588 = vmatprep.subr.mxu0 0.0
        %3589 = vmatpush1.msra.mxu0 0.0
        %3590 = vmatprep.subr.mxu0 0.0
        %3591 = vmatpush1.msra.mxu0 0.0
        %3592 = vmatprep.subr.mxu0 0.0
        %3593 = vmatpush1.msra.mxu0 0.0
        %3594 = vmatprep.subr.mxu0 %v3475
        %3595 = vmatpush1.msra.mxu0 %v3474
        %3596 = vmatprep.subr.mxu0 0.0
        %3597 = vmatpush2.msra.mxu0 0.0
        %3598 = vmatprep.subr.mxu0 0.0
        %3599 = vmatpush2.msra.mxu0 0.0
        %3600 = vmatprep.subr.mxu0 0.0
        %3601 = vmatpush2.msra.mxu0 0.0
        %3602 = vmatprep.subr.mxu0 0.0
        %3603 = vmatpush2.msra.mxu0 0.0
        %3604 = vmatprep.subr.mxu0 0.0
        %3605 = vmatpush2.msra.mxu0 0.0
        %3606 = vmatprep.subr.mxu0 0.0
        %3607 = vmatpush2.msra.mxu0 0.0
        %3608 = vmatprep.subr.mxu0 0.0
        %3609 = vmatpush2.msra.mxu0 0.0
        %3610 = vmatprep.subr.mxu0 0.0
        %3611 = vmatpush2.msra.mxu0 0.0
        %3612 = vmatprep.subr.mxu0 0.0
        %3613 = vmatpush2.msra.mxu0 0.0
        %3614 = vmatprep.subr.mxu0 0.0
        %3615 = vmatpush2.msra.mxu0 0.0
        %3616 = vmatprep.subr.mxu0 0.0
        %3617 = vmatpush2.msra.mxu0 0.0
        %3618 = vmatprep.subr.mxu0 0.0
        %3619 = vmatpush2.msra.mxu0 0.0
        %3620 = vmatprep.subr.mxu0 0.0
        %3621 = vmatpush2.msra.mxu0 0.0
        %3622 = vmatprep.subr.mxu0 0.0
        %3623 = vmatpush2.msra.mxu0 0.0
        %3624 = vmatprep.subr.mxu0 0.0
        %3625 = vmatpush2.msra.mxu0 0.0
        %3626 = vmatprep.subr.mxu0 0.0
        %3627 = vmatpush2.msra.mxu0 0.0
        %3628 = vmatprep.mubr.f32.mxu0 0.0
        %3629 = vmatmul.mubr.f32.gmra.mxu0 %v3562
        %v3630 = vpop.f32.mrf.mxu0
        %v3631 = vadd.f32 %v3557, %v3630
        %v3632 = vpop.f32.mrf.mxu0
        %v3633 = vadd.f32 %v3559, %v3632
        %3634 = vdwg.mxu0
        %3635 = vrot.lane.b32.xlu0 %v3453, 15
        %v3636 = vpop.permute.xlu0 %3635
        %3638 = vrot.lane.b32.xlu0 %v3452, 15
        %v3639 = vpop.permute.xlu0 %3638
        %v3640 = vsel %vm981, %v3639, %v3636
        %v3643 = vsel %vm981, %v3636, %v3639
        %v3644 = vmul.f32 %v3643, %v989
        %v3645 = vmul.f32 %v3640, %v993
        %v3647 = vsel %vm478, %v3456, 0
        %3649 = vmatprep.subr.mxu0 0.0
        %3650 = vmatpush1.msra.mxu0 0.0
        %3651 = vmatprep.subr.mxu0 0.0
        %3652 = vmatpush1.msra.mxu0 0.0
        %3653 = vmatprep.subr.mxu0 0.0
        %3654 = vmatpush1.msra.mxu0 0.0
        %3655 = vmatprep.subr.mxu0 0.0
        %3656 = vmatpush1.msra.mxu0 0.0
        %3657 = vmatprep.subr.mxu0 0.0
        %3658 = vmatpush1.msra.mxu0 0.0
        %3659 = vmatprep.subr.mxu0 0.0
        %3660 = vmatpush1.msra.mxu0 0.0
        %3661 = vmatprep.subr.mxu0 0.0
        %3662 = vmatpush1.msra.mxu0 0.0
        %3663 = vmatprep.subr.mxu0 0.0
        %3664 = vmatpush1.msra.mxu0 0.0
        %3665 = vmatprep.subr.mxu0 0.0
        %3666 = vmatpush1.msra.mxu0 0.0
        %3667 = vmatprep.subr.mxu0 0.0
        %3668 = vmatpush1.msra.mxu0 0.0
        %3669 = vmatprep.subr.mxu0 0.0
        %3670 = vmatpush1.msra.mxu0 0.0
        %3671 = vmatprep.subr.mxu0 0.0
        %3672 = vmatpush1.msra.mxu0 0.0
        %3673 = vmatprep.subr.mxu0 0.0
        %3674 = vmatpush1.msra.mxu0 0.0
        %3675 = vmatprep.subr.mxu0 0.0
        %3676 = vmatpush1.msra.mxu0 0.0
        %3677 = vmatprep.subr.mxu0 0.0
        %3678 = vmatpush1.msra.mxu0 0.0
        %3679 = vmatprep.subr.mxu0 %v3645
        %3680 = vmatpush1.msra.mxu0 %v3644
        %3681 = vmatprep.subr.mxu0 0.0
        %3682 = vmatpush2.msra.mxu0 0.0
        %3683 = vmatprep.subr.mxu0 0.0
        %3684 = vmatpush2.msra.mxu0 0.0
        %3685 = vmatprep.subr.mxu0 0.0
        %3686 = vmatpush2.msra.mxu0 0.0
        %3687 = vmatprep.subr.mxu0 0.0
        %3688 = vmatpush2.msra.mxu0 0.0
        %3689 = vmatprep.subr.mxu0 0.0
        %3690 = vmatpush2.msra.mxu0 0.0
        %3691 = vmatprep.subr.mxu0 0.0
        %3692 = vmatpush2.msra.mxu0 0.0
        %3693 = vmatprep.subr.mxu0 0.0
        %3694 = vmatpush2.msra.mxu0 0.0
        %3695 = vmatprep.subr.mxu0 0.0
        %3696 = vmatpush2.msra.mxu0 0.0
        %3697 = vmatprep.subr.mxu0 0.0
        %3698 = vmatpush2.msra.mxu0 0.0
        %3699 = vmatprep.subr.mxu0 0.0
        %3700 = vmatpush2.msra.mxu0 0.0
        %3701 = vmatprep.subr.mxu0 0.0
        %3702 = vmatpush2.msra.mxu0 0.0
        %3703 = vmatprep.subr.mxu0 0.0
        %3704 = vmatpush2.msra.mxu0 0.0
        %3705 = vmatprep.subr.mxu0 0.0
        %3706 = vmatpush2.msra.mxu0 0.0
        %3707 = vmatprep.subr.mxu0 0.0
        %3708 = vmatpush2.msra.mxu0 0.0
        %3709 = vmatprep.subr.mxu0 0.0
        %3710 = vmatpush2.msra.mxu0 0.0
        %3711 = vmatprep.subr.mxu0 0.0
        %3712 = vmatpush2.msra.mxu0 0.0
        %3713 = vmatprep.mubr.f32.mxu0 0.0
        %3714 = vmatmul.mubr.f32.gmra.mxu0 %v3647
        %v3715 = vpop.f32.mrf.mxu0
        %v3716 = vadd.f32 0.0, %v3715
        %v3717 = vpop.f32.mrf.mxu0
        %v3718 = vadd.f32 0.0, %v3717
        %3719 = vdwg.mxu0
        %v3720 = vadd.f32 %v3631, %v3716
        %v3721 = vadd.f32 %v3633, %v3718
        %3722 = vrot.lane.b32.xlu0 %v3453, 1
        %v3723 = vpop.permute.xlu0 %3722
        %3725 = vrot.lane.b32.xlu0 %v3452, 1
        %v3726 = vpop.permute.xlu0 %3725
        %v3727 = vsel %vm1077, %v3726, %v3723
        %v3730 = vsel %vm1077, %v3723, %v3726
        %v3731 = vmul.f32 %v3730, %v1085
        %v3732 = vmul.f32 %v3727, %v1089
        %v3734 = vsel %vm478, %v3457, 0
        %3736 = vmatprep.subr.mxu0 0.0
        %3737 = vmatpush1.msra.mxu0 0.0
        %3738 = vmatprep.subr.mxu0 0.0
        %3739 = vmatpush1.msra.mxu0 0.0
        %3740 = vmatprep.subr.mxu0 0.0
        %3741 = vmatpush1.msra.mxu0 0.0
        %3742 = vmatprep.subr.mxu0 0.0
        %3743 = vmatpush1.msra.mxu0 0.0
        %3744 = vmatprep.subr.mxu0 0.0
        %3745 = vmatpush1.msra.mxu0 0.0
        %3746 = vmatprep.subr.mxu0 0.0
        %3747 = vmatpush1.msra.mxu0 0.0
        %3748 = vmatprep.subr.mxu0 0.0
        %3749 = vmatpush1.msra.mxu0 0.0
        %3750 = vmatprep.subr.mxu0 0.0
        %3751 = vmatpush1.msra.mxu0 0.0
        %3752 = vmatprep.subr.mxu0 0.0
        %3753 = vmatpush1.msra.mxu0 0.0
        %3754 = vmatprep.subr.mxu0 0.0
        %3755 = vmatpush1.msra.mxu0 0.0
        %3756 = vmatprep.subr.mxu0 0.0
        %3757 = vmatpush1.msra.mxu0 0.0
        %3758 = vmatprep.subr.mxu0 0.0
        %3759 = vmatpush1.msra.mxu0 0.0
        %3760 = vmatprep.subr.mxu0 0.0
        %3761 = vmatpush1.msra.mxu0 0.0
        %3762 = vmatprep.subr.mxu0 0.0
        %3763 = vmatpush1.msra.mxu0 0.0
        %3764 = vmatprep.subr.mxu0 0.0
        %3765 = vmatpush1.msra.mxu0 0.0
        %3766 = vmatprep.subr.mxu0 %v3732
        %3767 = vmatpush1.msra.mxu0 %v3731
        %3768 = vmatprep.subr.mxu0 0.0
        %3769 = vmatpush2.msra.mxu0 0.0
        %3770 = vmatprep.subr.mxu0 0.0
        %3771 = vmatpush2.msra.mxu0 0.0
        %3772 = vmatprep.subr.mxu0 0.0
        %3773 = vmatpush2.msra.mxu0 0.0
        %3774 = vmatprep.subr.mxu0 0.0
        %3775 = vmatpush2.msra.mxu0 0.0
        %3776 = vmatprep.subr.mxu0 0.0
        %3777 = vmatpush2.msra.mxu0 0.0
        %3778 = vmatprep.subr.mxu0 0.0
        %3779 = vmatpush2.msra.mxu0 0.0
        %3780 = vmatprep.subr.mxu0 0.0
        %3781 = vmatpush2.msra.mxu0 0.0
        %3782 = vmatprep.subr.mxu0 0.0
        %3783 = vmatpush2.msra.mxu0 0.0
        %3784 = vmatprep.subr.mxu0 0.0
        %3785 = vmatpush2.msra.mxu0 0.0
        %3786 = vmatprep.subr.mxu0 0.0
        %3787 = vmatpush2.msra.mxu0 0.0
        %3788 = vmatprep.subr.mxu0 0.0
        %3789 = vmatpush2.msra.mxu0 0.0
        %3790 = vmatprep.subr.mxu0 0.0
        %3791 = vmatpush2.msra.mxu0 0.0
        %3792 = vmatprep.subr.mxu0 0.0
        %3793 = vmatpush2.msra.mxu0 0.0
        %3794 = vmatprep.subr.mxu0 0.0
        %3795 = vmatpush2.msra.mxu0 0.0
        %3796 = vmatprep.subr.mxu0 0.0
        %3797 = vmatpush2.msra.mxu0 0.0
        %3798 = vmatprep.subr.mxu0 0.0
        %3799 = vmatpush2.msra.mxu0 0.0
        %3800 = vmatprep.mubr.f32.mxu0 0.0
        %3801 = vmatmul.mubr.f32.gmra.mxu0 %v3734
        %v3802 = vpop.f32.mrf.mxu0
        %v3803 = vadd.f32 0.0, %v3802
        %v3804 = vpop.f32.mrf.mxu0
        %v3805 = vadd.f32 0.0, %v3804
        %3806 = vdwg.mxu0
        %v3807 = vadd.f32 %v3720, %v3803
        %v3808 = vadd.f32 %v3721, %v3805
        %v3810 = vsel %vm478, %v3458, 0
        %3812 = vmatprep.subr.mxu0 0.0
        %3813 = vmatpush1.msra.mxu0 0.0
        %3814 = vmatprep.subr.mxu0 0.0
        %3815 = vmatpush1.msra.mxu0 0.0
        %3816 = vmatprep.subr.mxu0 0.0
        %3817 = vmatpush1.msra.mxu0 0.0
        %3818 = vmatprep.subr.mxu0 0.0
        %3819 = vmatpush1.msra.mxu0 0.0
        %3820 = vmatprep.subr.mxu0 0.0
        %3821 = vmatpush1.msra.mxu0 0.0
        %3822 = vmatprep.subr.mxu0 0.0
        %3823 = vmatpush1.msra.mxu0 0.0
        %3824 = vmatprep.subr.mxu0 0.0
        %3825 = vmatpush1.msra.mxu0 0.0
        %3826 = vmatprep.subr.mxu0 0.0
        %3827 = vmatpush1.msra.mxu0 0.0
        %3828 = vmatprep.subr.mxu0 0.0
        %3829 = vmatpush1.msra.mxu0 0.0
        %3830 = vmatprep.subr.mxu0 0.0
        %3831 = vmatpush1.msra.mxu0 0.0
        %3832 = vmatprep.subr.mxu0 0.0
        %3833 = vmatpush1.msra.mxu0 0.0
        %3834 = vmatprep.subr.mxu0 0.0
        %3835 = vmatpush1.msra.mxu0 0.0
        %3836 = vmatprep.subr.mxu0 0.0
        %3837 = vmatpush1.msra.mxu0 0.0
        %3838 = vmatprep.subr.mxu0 0.0
        %3839 = vmatpush1.msra.mxu0 0.0
        %3840 = vmatprep.subr.mxu0 0.0
        %3841 = vmatpush1.msra.mxu0 0.0
        %3842 = vmatprep.subr.mxu0 %v3453
        %3843 = vmatpush1.msra.mxu0 %v3452
        %3844 = vmatprep.subr.mxu0 0.0
        %3845 = vmatpush2.msra.mxu0 0.0
        %3846 = vmatprep.subr.mxu0 0.0
        %3847 = vmatpush2.msra.mxu0 0.0
        %3848 = vmatprep.subr.mxu0 0.0
        %3849 = vmatpush2.msra.mxu0 0.0
        %3850 = vmatprep.subr.mxu0 0.0
        %3851 = vmatpush2.msra.mxu0 0.0
        %3852 = vmatprep.subr.mxu0 0.0
        %3853 = vmatpush2.msra.mxu0 0.0
        %3854 = vmatprep.subr.mxu0 0.0
        %3855 = vmatpush2.msra.mxu0 0.0
        %3856 = vmatprep.subr.mxu0 0.0
        %3857 = vmatpush2.msra.mxu0 0.0
        %3858 = vmatprep.subr.mxu0 0.0
        %3859 = vmatpush2.msra.mxu0 0.0
        %3860 = vmatprep.subr.mxu0 0.0
        %3861 = vmatpush2.msra.mxu0 0.0
        %3862 = vmatprep.subr.mxu0 0.0
        %3863 = vmatpush2.msra.mxu0 0.0
        %3864 = vmatprep.subr.mxu0 0.0
        %3865 = vmatpush2.msra.mxu0 0.0
        %3866 = vmatprep.subr.mxu0 0.0
        %3867 = vmatpush2.msra.mxu0 0.0
        %3868 = vmatprep.subr.mxu0 0.0
        %3869 = vmatpush2.msra.mxu0 0.0
        %3870 = vmatprep.subr.mxu0 0.0
        %3871 = vmatpush2.msra.mxu0 0.0
        %3872 = vmatprep.subr.mxu0 0.0
        %3873 = vmatpush2.msra.mxu0 0.0
        %3874 = vmatprep.subr.mxu0 0.0
        %3875 = vmatpush2.msra.mxu0 0.0
        %3876 = vmatprep.mubr.f32.mxu0 0.0
        %3877 = vmatmul.mubr.f32.gmra.mxu0 %v3810
        %v3878 = vpop.f32.mrf.mxu0
        %v3879 = vadd.f32 0.0, %v3878
        %v3880 = vpop.f32.mrf.mxu0
        %v3881 = vadd.f32 0.0, %v3880
        %3882 = vdwg.mxu0
        %v3883 = vadd.f32 %v3807, %v3879
        %v3884 = vadd.f32 %v3808, %v3881
        %3885 = vrot.lane.b32.xlu0 %v3452, 127
        %v3886 = vpop.permute.xlu0 %3885
        %3887 = vrot.lane.b32.xlu0 %v3453, 127
        %v3888 = vpop.permute.xlu0 %3887
        %v3889 = vsel %vm1248, %v3886, %v3888
        %v3893 = vsel %vm1248, %v3888, %v3886
        %v3894 = vmul.f32 %v3889, %v1257
        %v3895 = vmul.f32 %v3893, %v1261
        %v3897 = vsel %vm478, %v3459, 0
        %3899 = vmatprep.subr.mxu0 0.0
        %3900 = vmatpush1.msra.mxu0 0.0
        %3901 = vmatprep.subr.mxu0 0.0
        %3902 = vmatpush1.msra.mxu0 0.0
        %3903 = vmatprep.subr.mxu0 0.0
        %3904 = vmatpush1.msra.mxu0 0.0
        %3905 = vmatprep.subr.mxu0 0.0
        %3906 = vmatpush1.msra.mxu0 0.0
        %3907 = vmatprep.subr.mxu0 0.0
        %3908 = vmatpush1.msra.mxu0 0.0
        %3909 = vmatprep.subr.mxu0 0.0
        %3910 = vmatpush1.msra.mxu0 0.0
        %3911 = vmatprep.subr.mxu0 0.0
        %3912 = vmatpush1.msra.mxu0 0.0
        %3913 = vmatprep.subr.mxu0 0.0
        %3914 = vmatpush1.msra.mxu0 0.0
        %3915 = vmatprep.subr.mxu0 0.0
        %3916 = vmatpush1.msra.mxu0 0.0
        %3917 = vmatprep.subr.mxu0 0.0
        %3918 = vmatpush1.msra.mxu0 0.0
        %3919 = vmatprep.subr.mxu0 0.0
        %3920 = vmatpush1.msra.mxu0 0.0
        %3921 = vmatprep.subr.mxu0 0.0
        %3922 = vmatpush1.msra.mxu0 0.0
        %3923 = vmatprep.subr.mxu0 0.0
        %3924 = vmatpush1.msra.mxu0 0.0
        %3925 = vmatprep.subr.mxu0 0.0
        %3926 = vmatpush1.msra.mxu0 0.0
        %3927 = vmatprep.subr.mxu0 0.0
        %3928 = vmatpush1.msra.mxu0 0.0
        %3929 = vmatprep.subr.mxu0 %v3895
        %3930 = vmatpush1.msra.mxu0 %v3894
        %3931 = vmatprep.subr.mxu0 0.0
        %3932 = vmatpush2.msra.mxu0 0.0
        %3933 = vmatprep.subr.mxu0 0.0
        %3934 = vmatpush2.msra.mxu0 0.0
        %3935 = vmatprep.subr.mxu0 0.0
        %3936 = vmatpush2.msra.mxu0 0.0
        %3937 = vmatprep.subr.mxu0 0.0
        %3938 = vmatpush2.msra.mxu0 0.0
        %3939 = vmatprep.subr.mxu0 0.0
        %3940 = vmatpush2.msra.mxu0 0.0
        %3941 = vmatprep.subr.mxu0 0.0
        %3942 = vmatpush2.msra.mxu0 0.0
        %3943 = vmatprep.subr.mxu0 0.0
        %3944 = vmatpush2.msra.mxu0 0.0
        %3945 = vmatprep.subr.mxu0 0.0
        %3946 = vmatpush2.msra.mxu0 0.0
        %3947 = vmatprep.subr.mxu0 0.0
        %3948 = vmatpush2.msra.mxu0 0.0
        %3949 = vmatprep.subr.mxu0 0.0
        %3950 = vmatpush2.msra.mxu0 0.0
        %3951 = vmatprep.subr.mxu0 0.0
        %3952 = vmatpush2.msra.mxu0 0.0
        %3953 = vmatprep.subr.mxu0 0.0
        %3954 = vmatpush2.msra.mxu0 0.0
        %3955 = vmatprep.subr.mxu0 0.0
        %3956 = vmatpush2.msra.mxu0 0.0
        %3957 = vmatprep.subr.mxu0 0.0
        %3958 = vmatpush2.msra.mxu0 0.0
        %3959 = vmatprep.subr.mxu0 0.0
        %3960 = vmatpush2.msra.mxu0 0.0
        %3961 = vmatprep.subr.mxu0 0.0
        %3962 = vmatpush2.msra.mxu0 0.0
        %3963 = vmatprep.mubr.f32.mxu0 0.0
        %3964 = vmatmul.mubr.f32.gmra.mxu0 %v3897
        %v3965 = vpop.f32.mrf.mxu0
        %v3966 = vadd.f32 0.0, %v3965
        %v3967 = vpop.f32.mrf.mxu0
        %v3968 = vadd.f32 0.0, %v3967
        %3969 = vdwg.mxu0
        %v3970 = vadd.f32 %v3883, %v3966
        %v3971 = vadd.f32 %v3884, %v3968
        %3972 = vrot.lane.b32.xlu0 %v3452, 113
        %v3973 = vpop.permute.xlu0 %3972
        %3974 = vrot.lane.b32.xlu0 %v3453, 113
        %v3975 = vpop.permute.xlu0 %3974
        %v3976 = vsel %vm1344, %v3973, %v3975
        %v3980 = vsel %vm1344, %v3975, %v3973
        %v3981 = vmul.f32 %v3976, %v1353
        %v3982 = vmul.f32 %v3980, %v1357
        %v3984 = vsel %vm478, %v3460, 0
        %3986 = vmatprep.subr.mxu0 0.0
        %3987 = vmatpush1.msra.mxu0 0.0
        %3988 = vmatprep.subr.mxu0 0.0
        %3989 = vmatpush1.msra.mxu0 0.0
        %3990 = vmatprep.subr.mxu0 0.0
        %3991 = vmatpush1.msra.mxu0 0.0
        %3992 = vmatprep.subr.mxu0 0.0
        %3993 = vmatpush1.msra.mxu0 0.0
        %3994 = vmatprep.subr.mxu0 0.0
        %3995 = vmatpush1.msra.mxu0 0.0
        %3996 = vmatprep.subr.mxu0 0.0
        %3997 = vmatpush1.msra.mxu0 0.0
        %3998 = vmatprep.subr.mxu0 0.0
        %3999 = vmatpush1.msra.mxu0 0.0
        %4000 = vmatprep.subr.mxu0 0.0
        %4001 = vmatpush1.msra.mxu0 0.0
        %4002 = vmatprep.subr.mxu0 0.0
        %4003 = vmatpush1.msra.mxu0 0.0
        %4004 = vmatprep.subr.mxu0 0.0
        %4005 = vmatpush1.msra.mxu0 0.0
        %4006 = vmatprep.subr.mxu0 0.0
        %4007 = vmatpush1.msra.mxu0 0.0
        %4008 = vmatprep.subr.mxu0 0.0
        %4009 = vmatpush1.msra.mxu0 0.0
        %4010 = vmatprep.subr.mxu0 0.0
        %4011 = vmatpush1.msra.mxu0 0.0
        %4012 = vmatprep.subr.mxu0 0.0
        %4013 = vmatpush1.msra.mxu0 0.0
        %4014 = vmatprep.subr.mxu0 0.0
        %4015 = vmatpush1.msra.mxu0 0.0
        %4016 = vmatprep.subr.mxu0 %v3982
        %4017 = vmatpush1.msra.mxu0 %v3981
        %4018 = vmatprep.subr.mxu0 0.0
        %4019 = vmatpush2.msra.mxu0 0.0
        %4020 = vmatprep.subr.mxu0 0.0
        %4021 = vmatpush2.msra.mxu0 0.0
        %4022 = vmatprep.subr.mxu0 0.0
        %4023 = vmatpush2.msra.mxu0 0.0
        %4024 = vmatprep.subr.mxu0 0.0
        %4025 = vmatpush2.msra.mxu0 0.0
        %4026 = vmatprep.subr.mxu0 0.0
        %4027 = vmatpush2.msra.mxu0 0.0
        %4028 = vmatprep.subr.mxu0 0.0
        %4029 = vmatpush2.msra.mxu0 0.0
        %4030 = vmatprep.subr.mxu0 0.0
        %4031 = vmatpush2.msra.mxu0 0.0
        %4032 = vmatprep.subr.mxu0 0.0
        %4033 = vmatpush2.msra.mxu0 0.0
        %4034 = vmatprep.subr.mxu0 0.0
        %4035 = vmatpush2.msra.mxu0 0.0
        %4036 = vmatprep.subr.mxu0 0.0
        %4037 = vmatpush2.msra.mxu0 0.0
        %4038 = vmatprep.subr.mxu0 0.0
        %4039 = vmatpush2.msra.mxu0 0.0
        %4040 = vmatprep.subr.mxu0 0.0
        %4041 = vmatpush2.msra.mxu0 0.0
        %4042 = vmatprep.subr.mxu0 0.0
        %4043 = vmatpush2.msra.mxu0 0.0
        %4044 = vmatprep.subr.mxu0 0.0
        %4045 = vmatpush2.msra.mxu0 0.0
        %4046 = vmatprep.subr.mxu0 0.0
        %4047 = vmatpush2.msra.mxu0 0.0
        %4048 = vmatprep.subr.mxu0 0.0
        %4049 = vmatpush2.msra.mxu0 0.0
        %4050 = vmatprep.mubr.f32.mxu0 0.0
        %4051 = vmatmul.mubr.f32.gmra.mxu0 %v3984
        %v4052 = vpop.f32.mrf.mxu0
        %v4053 = vadd.f32 0.0, %v4052
        %v4054 = vpop.f32.mrf.mxu0
        %v4055 = vadd.f32 0.0, %v4054
        %4056 = vdwg.mxu0
        %v4057 = vadd.f32 %v3970, %v4053
        %v4058 = vadd.f32 %v3971, %v4055
        %4059 = vrot.lane.b32.xlu0 %v3452, 112
        %v4060 = vpop.permute.xlu0 %4059
        %4061 = vrot.lane.b32.xlu0 %v3453, 112
        %v4062 = vpop.permute.xlu0 %4061
        %v4063 = vsel %vm1440, %v4060, %v4062
        %v4067 = vsel %vm1440, %v4062, %v4060
        %v4068 = vmul.f32 %v4063, %v1449
        %v4069 = vmul.f32 %v4067, %v1453
        %v4071 = vsel %vm478, %v3461, 0
        %4073 = vmatprep.subr.mxu0 0.0
        %4074 = vmatpush1.msra.mxu0 0.0
        %4075 = vmatprep.subr.mxu0 0.0
        %4076 = vmatpush1.msra.mxu0 0.0
        %4077 = vmatprep.subr.mxu0 0.0
        %4078 = vmatpush1.msra.mxu0 0.0
        %4079 = vmatprep.subr.mxu0 0.0
        %4080 = vmatpush1.msra.mxu0 0.0
        %4081 = vmatprep.subr.mxu0 0.0
        %4082 = vmatpush1.msra.mxu0 0.0
        %4083 = vmatprep.subr.mxu0 0.0
        %4084 = vmatpush1.msra.mxu0 0.0
        %4085 = vmatprep.subr.mxu0 0.0
        %4086 = vmatpush1.msra.mxu0 0.0
        %4087 = vmatprep.subr.mxu0 0.0
        %4088 = vmatpush1.msra.mxu0 0.0
        %4089 = vmatprep.subr.mxu0 0.0
        %4090 = vmatpush1.msra.mxu0 0.0
        %4091 = vmatprep.subr.mxu0 0.0
        %4092 = vmatpush1.msra.mxu0 0.0
        %4093 = vmatprep.subr.mxu0 0.0
        %4094 = vmatpush1.msra.mxu0 0.0
        %4095 = vmatprep.subr.mxu0 0.0
        %4096 = vmatpush1.msra.mxu0 0.0
        %4097 = vmatprep.subr.mxu0 0.0
        %4098 = vmatpush1.msra.mxu0 0.0
        %4099 = vmatprep.subr.mxu0 0.0
        %4100 = vmatpush1.msra.mxu0 0.0
        %4101 = vmatprep.subr.mxu0 0.0
        %4102 = vmatpush1.msra.mxu0 0.0
        %4103 = vmatprep.subr.mxu0 %v4069
        %4104 = vmatpush1.msra.mxu0 %v4068
        %4105 = vmatprep.subr.mxu0 0.0
        %4106 = vmatpush2.msra.mxu0 0.0
        %4107 = vmatprep.subr.mxu0 0.0
        %4108 = vmatpush2.msra.mxu0 0.0
        %4109 = vmatprep.subr.mxu0 0.0
        %4110 = vmatpush2.msra.mxu0 0.0
        %4111 = vmatprep.subr.mxu0 0.0
        %4112 = vmatpush2.msra.mxu0 0.0
        %4113 = vmatprep.subr.mxu0 0.0
        %4114 = vmatpush2.msra.mxu0 0.0
        %4115 = vmatprep.subr.mxu0 0.0
        %4116 = vmatpush2.msra.mxu0 0.0
        %4117 = vmatprep.subr.mxu0 0.0
        %4118 = vmatpush2.msra.mxu0 0.0
        %4119 = vmatprep.subr.mxu0 0.0
        %4120 = vmatpush2.msra.mxu0 0.0
        %4121 = vmatprep.subr.mxu0 0.0
        %4122 = vmatpush2.msra.mxu0 0.0
        %4123 = vmatprep.subr.mxu0 0.0
        %4124 = vmatpush2.msra.mxu0 0.0
        %4125 = vmatprep.subr.mxu0 0.0
        %4126 = vmatpush2.msra.mxu0 0.0
        %4127 = vmatprep.subr.mxu0 0.0
        %4128 = vmatpush2.msra.mxu0 0.0
        %4129 = vmatprep.subr.mxu0 0.0
        %4130 = vmatpush2.msra.mxu0 0.0
        %4131 = vmatprep.subr.mxu0 0.0
        %4132 = vmatpush2.msra.mxu0 0.0
        %4133 = vmatprep.subr.mxu0 0.0
        %4134 = vmatpush2.msra.mxu0 0.0
        %4135 = vmatprep.subr.mxu0 0.0
        %4136 = vmatpush2.msra.mxu0 0.0
        %4137 = vmatprep.mubr.f32.mxu0 0.0
        %4138 = vmatmul.mubr.f32.gmra.mxu0 %v4071
        %v4139 = vpop.f32.mrf.mxu0
        %v4140 = vadd.f32 0.0, %v4139
        %v4141 = vpop.f32.mrf.mxu0
        %v4142 = vadd.f32 0.0, %v4141
        %4143 = vdwg.mxu0
        %v4144 = vadd.f32 %v4057, %v4140
        %v4145 = vadd.f32 %v4058, %v4142
        %4146 = vrot.lane.b32.xlu0 %v3452, 111
        %v4147 = vpop.permute.xlu0 %4146
        %4148 = vrot.lane.b32.xlu0 %v3453, 111
        %v4149 = vpop.permute.xlu0 %4148
        %v4150 = vsel %vm1536, %v4147, %v4149
        %v4154 = vsel %vm1536, %v4149, %v4147
        %v4155 = vmul.f32 %v4150, %v1545
        %v4156 = vmul.f32 %v4154, %v1549
        %v4158 = vsel %vm478, %v3462, 0
        %4160 = vmatprep.subr.mxu0 0.0
        %4161 = vmatpush1.msra.mxu0 0.0
        %4162 = vmatprep.subr.mxu0 0.0
        %4163 = vmatpush1.msra.mxu0 0.0
        %4164 = vmatprep.subr.mxu0 0.0
        %4165 = vmatpush1.msra.mxu0 0.0
        %4166 = vmatprep.subr.mxu0 0.0
        %4167 = vmatpush1.msra.mxu0 0.0
        %4168 = vmatprep.subr.mxu0 0.0
        %4169 = vmatpush1.msra.mxu0 0.0
        %4170 = vmatprep.subr.mxu0 0.0
        %4171 = vmatpush1.msra.mxu0 0.0
        %4172 = vmatprep.subr.mxu0 0.0
        %4173 = vmatpush1.msra.mxu0 0.0
        %4174 = vmatprep.subr.mxu0 0.0
        %4175 = vmatpush1.msra.mxu0 0.0
        %4176 = vmatprep.subr.mxu0 0.0
        %4177 = vmatpush1.msra.mxu0 0.0
        %4178 = vmatprep.subr.mxu0 0.0
        %4179 = vmatpush1.msra.mxu0 0.0
        %4180 = vmatprep.subr.mxu0 0.0
        %4181 = vmatpush1.msra.mxu0 0.0
        %4182 = vmatprep.subr.mxu0 0.0
        %4183 = vmatpush1.msra.mxu0 0.0
        %4184 = vmatprep.subr.mxu0 0.0
        %4185 = vmatpush1.msra.mxu0 0.0
        %4186 = vmatprep.subr.mxu0 0.0
        %4187 = vmatpush1.msra.mxu0 0.0
        %4188 = vmatprep.subr.mxu0 0.0
        %4189 = vmatpush1.msra.mxu0 0.0
        %4190 = vmatprep.subr.mxu0 %v4156
        %4191 = vmatpush1.msra.mxu0 %v4155
        %4192 = vmatprep.subr.mxu0 0.0
        %4193 = vmatpush2.msra.mxu0 0.0
        %4194 = vmatprep.subr.mxu0 0.0
        %4195 = vmatpush2.msra.mxu0 0.0
        %4196 = vmatprep.subr.mxu0 0.0
        %4197 = vmatpush2.msra.mxu0 0.0
        %4198 = vmatprep.subr.mxu0 0.0
        %4199 = vmatpush2.msra.mxu0 0.0
        %4200 = vmatprep.subr.mxu0 0.0
        %4201 = vmatpush2.msra.mxu0 0.0
        %4202 = vmatprep.subr.mxu0 0.0
        %4203 = vmatpush2.msra.mxu0 0.0
        %4204 = vmatprep.subr.mxu0 0.0
        %4205 = vmatpush2.msra.mxu0 0.0
        %4206 = vmatprep.subr.mxu0 0.0
        %4207 = vmatpush2.msra.mxu0 0.0
        %4208 = vmatprep.subr.mxu0 0.0
        %4209 = vmatpush2.msra.mxu0 0.0
        %4210 = vmatprep.subr.mxu0 0.0
        %4211 = vmatpush2.msra.mxu0 0.0
        %4212 = vmatprep.subr.mxu0 0.0
        %4213 = vmatpush2.msra.mxu0 0.0
        %4214 = vmatprep.subr.mxu0 0.0
        %4215 = vmatpush2.msra.mxu0 0.0
        %4216 = vmatprep.subr.mxu0 0.0
        %4217 = vmatpush2.msra.mxu0 0.0
        %4218 = vmatprep.subr.mxu0 0.0
        %4219 = vmatpush2.msra.mxu0 0.0
        %4220 = vmatprep.subr.mxu0 0.0
        %4221 = vmatpush2.msra.mxu0 0.0
        %4222 = vmatprep.subr.mxu0 0.0
        %4223 = vmatpush2.msra.mxu0 0.0
        %4224 = vmatprep.mubr.f32.mxu0 0.0
        %4225 = vmatmul.mubr.f32.gmra.mxu0 %v4158
        %v4226 = vpop.f32.mrf.mxu0
        %v4227 = vadd.f32 0.0, %v4226
        %v4228 = vpop.f32.mrf.mxu0
        %v4229 = vadd.f32 0.0, %v4228
        %4230 = vdwg.mxu0
        %v4231 = vadd.f32 %v4144, %v4227
        %v4232 = vadd.f32 %v4145, %v4229
        %s4233 = scalar_lea.vmem %s12, 24
        %v4234 = vld [vmem:[%s4233] sm:$0xff]
        %4236 = vset.pattern.permute.xlu0 0
        %4237 = vperm.xlu0 %4236, %v4234
        %v4238 = vpop.permute.xlu0 %4237
        %v4240 = vmul.f32 %v4231, %v4238
        %v4241 = vmul.f32 %v4232, %v4238
        %s4242 = scalar_lea.vmem %s13, 24
        %v4243 = vld [vmem:[%s4242] sm:$0xff]
        %4245 = vset.pattern.permute.xlu0 0
        %4246 = vperm.xlu0 %4245, %v4243
        %v4247 = vpop.permute.xlu0 %4246
        %v4249 = vadd.f32 %v4240, %v4247
        %v4250 = vadd.f32 %v4241, %v4247
        %v4251 = vmax.f32 %v4249, 0.0
        %v4252 = vmax.f32 %v4250, 0.0
        %v4253 = vadd.f32 %v2743, %v4251
        %v4254 = vadd.f32 %v2744, %v4252
        %4255 = vst [vmem:[%s460] sm:$0xff] %v4253
        %4256 = vst [vmem:[%s460 + $0x8] sm:$0xff] %v4254
        %s4257 = sand.u32 %s335, 1
        %s4258 = scalar_lea.sflag [#allocation3], %s4257
        %s4259 = sand.u32 %s335, 1
        %s4260 = smul.addr %s4259, 16
        %s4261 = scalar_lea.vmem [#allocation2], %s4260
        // Predicated region
        $region77: #{tpu_custom_call.1} parent=75 // pred_check
          %p4262 = pneg %p345
        $region78: #{tpu_custom_call.1} parent=75 // pred_check_branch
          %4264 = sbr.rel (%p4262) target = $region80
        $region79: #{tpu_custom_call.1} parent=75 // pred_region
          %s4266 = ssub.s32 256, 256
          %4267 = vsyncadd %s4258, %s4266
          %s4268 = smul.addr %s28, 2
          %s4269 = smul.addr %s4268, 128
          %s4270 = scalar_lea.hbm %s14, %s4269
          %s4272 = sshll.u32 %s4261, 4
          %s4273 = int_to_ptr.vmem [resolvable:$true] %s4272
          %4275 = dma.vmem_to_hbm [thread:$0]  %s4273, 256, %s4270, %s4258
        $region80: #{tpu_custom_call.1} parent=75 // pred_fallthru
          _
      $region76: #{tpu_custom_call.1} parent=5 // pred_fallthru
        _
      %p4276 = scmp.le.s32.totalorder 2, %s23
      // Predicated region
      $region81: #{tpu_custom_call.1} parent=5 // pred_check
        %p4277 = pneg %p4276
      $region82: #{tpu_custom_call.1} parent=5 // pred_check_branch
        %4279 = sbr.rel (%p4277) target = $region84
      $region83: #{tpu_custom_call.1} parent=5 // pred_region
        %s4280 = ssub.s32 %s23, 2
        // Predicated region
        $region85: #{tpu_custom_call.1} parent=83 // pred_check
          %p4281 = pneg %p351
        $region86: #{tpu_custom_call.1} parent=83 // pred_check_branch
          %4283 = sbr.rel (%p4281) target = $region88
        $region87: #{tpu_custom_call.1} parent=83 // pred_region
          %s4284 = sand.u32 %s336, 1
          %s4285 = scalar_lea.sflag [#allocation3], %s4284
          %s4286 = sand.u32 %s336, 1
          %s4287 = smul.addr %s4286, 16
          %s4288 = scalar_lea.vmem [#allocation2], %s4287
          %4289 = dma.done %s4285, 256
        $region88: #{tpu_custom_call.1} parent=83 // pred_fallthru
          _
      $region84: #{tpu_custom_call.1} parent=5 // pred_fallthru
        _
    $region6: #{tpu_custom_call.1} parent=1 // loop_footer
      %s27 = sadd.s32 1, %s23
    $region7: #{tpu_custom_call.1} parent=1 // loop_footer_branch
      %22 = sbr.rel target = $region3
    $region8: #{tpu_custom_call.1} parent=1 // loop_exit
      _
    %4290 = vsyncpa [#allocation3], 1
    %s4291 = scalar_lea.sflag [#allocation3], 1
    %4292 = vsyncpa %s4291, 1

</llo_original>
